<compile_context>
chip_gen: v5e
topology: v5e:2x2
jax: 0.10.0
libtpu: 0.0.40
codegen_flags: <defaults>
</compile_context>

<pallas_src>
import jax
import jax.numpy as jnp
from jax import lax
from jax.experimental import pallas as pl
from jax.experimental.pallas import tpu as pltpu

START_TOKEN = 101   # [CLS] in the reference module
END_TOKEN = 102     # unused in forward (kept for parity)


def _decoder_kernel(tf_ref, ans_ref,           # SMEM scalar prefetch: (T,), (T, Bp) int32
                    h0_ref,                    # (Bp, Hp)    f32 pooled encoder output
                    emb_ref,                   # (Vp, D)     f32 word-embedding table
                    wih_ref,                   # (D, 4Hp)    f32 input proj   (gate order i,f,o,g)
                    whh_ref,                   # (Hp, 4Hp)   f32 hidden proj  (gate order i,f,o,g)
                    b_ref,                     # (1, 4Hp)    f32 b_ih + b_hh
                    wout_ref, bout_ref,        # (Hp, Vp), (1, Vp) f32
                    out_ref,                   # (T*Bp, Vp)  f32 output block
                    xall_ref,                  # scratch (T*Bp, D)    gathered input embeddings
                    xproj_ref,                 # scratch (T*Bp, 4Hp)  precomputed input projections
                    hall_ref):                 # scratch (T*Bp, Hp)   stashed hidden states
    TB, Vp = out_ref.shape
    Bp, Hp = h0_ref.shape
    T = TB // Bp

    # ---- Phase 1: gather start / teacher-forced token embeddings (ids known from
    # SMEM ahead of time) straight into per-row slots of the scratch.
    @pl.loop(0, T)
    def _(t):
        tm1 = jnp.maximum(t - 1, 0)
        base = pl.multiple_of(t * Bp, Bp)
        for b in range(Bp):
            tok = jnp.where(t == 0, START_TOKEN, ans_ref[tm1, b])
            xall_ref[pl.ds(base + b, 1), :] = emb_ref[pl.ds(tok, 1), :]

    # ---- Phase 2: one batched input projection for every step's (tentative) input.
    xproj_ref[...] = jnp.dot(xall_ref[...], wih_ref[...],
                             preferred_element_type=jnp.float32)

    # ---- Phase 3: serial LSTM recurrence (only h@W_hh on the per-step MXU path).
    def step(t, carry):
        h, c = carry
        base = pl.multiple_of(t * Bp, Bp)
        gates = (xproj_ref[pl.ds(base, Bp), :]
                 + jnp.dot(h, whh_ref[...], preferred_element_type=jnp.float32)
                 + b_ref[...])                                   # (1,4Hp) sublane-broadcast add
        ifo = jax.nn.sigmoid(gates[:, :3 * Hp])                  # EUP only on the i/f/o block
        g_t = jnp.tanh(gates[:, 3 * Hp:])
        c_new = ifo[:, Hp:2 * Hp] * c + ifo[:, :Hp] * g_t
        h_new = ifo[:, 2 * Hp:3 * Hp] * jnp.tanh(c_new)
        hall_ref[pl.ds(base, Bp), :] = h_new

        # Only when the NEXT step decodes greedily do we need this step's logits now.
        @pl.when(jnp.logical_and(t + 1 < T, tf_ref[t] == 0))
        def _greedy_feedback():
            # TODO(synk): at real vocab sizes route argmax ids through SMEM and
            # scalar-gather embedding rows instead of the one-hot (Bp,Vp)@(Vp,D) matmul.
            logits = (jnp.dot(h_new, wout_ref[...], preferred_element_type=jnp.float32)
                      + bout_ref[...])
            best = jnp.argmax(logits, axis=1, keepdims=True).astype(jnp.int32)   # (Bp,1)
            iota_v = lax.broadcasted_iota(jnp.int32, (Bp, Vp), 1)                # greedy steps only
            onehot = (iota_v == best).astype(jnp.float32)
            x_g = jnp.dot(onehot, emb_ref[...], preferred_element_type=jnp.float32)
            nbase = pl.multiple_of((t + 1) * Bp, Bp)
            xproj_ref[pl.ds(nbase, Bp), :] = jnp.dot(
                x_g, wih_ref[...], preferred_element_type=jnp.float32)

        return h_new, c_new

    # h = pooled_output (num_layers = 1, unidirectional), c = 0 — carried in vregs.
    lax.fori_loop(0, T, step,
                  (h0_ref[...], jnp.zeros((Bp, Hp), jnp.float32)),
                  unroll=True)

    # ---- Phase 4: one batched vocab projection for the whole output block.
    # TODO(synk): RNNModel's dropout (p=0.5) is omitted (inference semantics).
    out_ref[...] = (jnp.dot(hall_ref[...], wout_ref[...],
                            preferred_element_type=jnp.float32)
                    + bout_ref[...])


def _pad_gate_cols(w, H, Hp):
    """(K, 4H) in PyTorch (i,f,g,o) gate order -> (K, 4Hp) in (i,f,o,g) order,
    each gate block zero-padded from H to Hp lanes (padded h/c columns stay 0)."""
    i_blk, f_blk, g_blk, o_blk = (w[:, k * H:(k + 1) * H] for k in range(4))
    out = jnp.zeros((w.shape[0], 4 * Hp), w.dtype)
    for idx, blk in enumerate((i_blk, f_blk, o_blk, g_blk)):
        out = out.at[:, idx * Hp:idx * Hp + H].set(blk)
    return out


def run_decoder(tf_flags, h0, answer_tokenized, params):
    """tf_flags: (T,) int32 ; h0: (B, H) f32 ; answer_tokenized: (T, B) int32."""
    T, B = answer_tokenized.shape
    H = h0.shape[1]
    V, D = params["emb"].shape
    assert V > START_TOKEN, "vocab must contain the [CLS] start token id"

    f32 = jnp.float32
    Bp = max(8, ((B + 7) // 8) * 8)          # full f32 sublane tiles
    Hp = ((H + 127) // 128) * 128            # lane-aligned gate slices
    Vp = ((V + 127) // 128) * 128            # lane-dense vocab stores / clean MXU N tiles

    h0_p = jnp.zeros((Bp, Hp), f32).at[:B, :H].set(h0.astype(f32))
    ans_p = jnp.zeros((T, Bp), jnp.int32).at[:, :B].set(answer_tokenized.astype(jnp.int32))

    emb_p = jnp.zeros((Vp, D), f32).at[:V].set(params["emb"].astype(f32))
    w_ih_p = _pad_gate_cols(params["w_ih"].astype(f32), H, Hp)                 # (D, 4Hp)
    w_hh_p = jnp.zeros((Hp, 4 * Hp), f32).at[:H].set(
        _pad_gate_cols(params["w_hh"].astype(f32), H, Hp))                     # (Hp, 4Hp)
    b_p = _pad_gate_cols(params["b"].astype(f32), H, Hp)                       # (1, 4Hp)
    w_out_p = jnp.zeros((Hp, Vp), f32).at[:H, :V].set(params["w_out"].astype(f32))
    # padded vocab columns get a huge negative bias so they can never win argmax
    b_out_p = jnp.full((1, Vp), -1e30, f32).at[:, :V].set(params["b_out"].astype(f32))

    grid_spec = pltpu.PrefetchScalarGridSpec(
        num_scalar_prefetch=2,               # teacher-forcing flags + answer tokens live in SMEM
        grid=(1,),                           # whole decode = one grid step (recurrence in-kernel)
        in_specs=[
            pl.BlockSpec((Bp, Hp), lambda i, tf, ans: (0, 0)),          # pooled encoder output
            pl.BlockSpec((Vp, D), lambda i, tf, ans: (0, 0)),           # embedding table
            pl.BlockSpec((D, 4 * Hp), lambda i, tf, ans: (0, 0)),       # W_ih (reordered/padded)
            pl.BlockSpec((Hp, 4 * Hp), lambda i, tf, ans: (0, 0)),      # W_hh (reordered/padded)
            pl.BlockSpec((1, 4 * Hp), lambda i, tf, ans: (0, 0)),       # b_ih + b_hh
            pl.BlockSpec((Hp, Vp), lambda i, tf, ans: (0, 0)),          # W_out^T
            pl.BlockSpec((1, Vp), lambda i, tf, ans: (0, 0)),           # b_out
        ],
        out_specs=pl.BlockSpec((T * Bp, Vp), lambda i, tf, ans: (0, 0)),
        scratch_shapes=[
            pltpu.VMEM((T * Bp, D), f32),          # gathered input embeddings
            pltpu.VMEM((T * Bp, 4 * Hp), f32),     # precomputed input projections
            pltpu.VMEM((T * Bp, Hp), f32),         # stashed hidden states
        ],
    )

    out = pl.pallas_call(
        _decoder_kernel,
        out_shape=jax.ShapeDtypeStruct((T * Bp, Vp), f32),
        grid_spec=grid_spec,
        compiler_params=pltpu.CompilerParams(
            dimension_semantics=("arbitrary",),
            vmem_limit_bytes=32 * 1024 * 1024),
    )(tf_flags.astype(jnp.int32), ans_p, h0_p, emb_p, w_ih_p, w_hh_p, b_p,
      w_out_p, b_out_p)

    return out.reshape(T, Bp, Vp)[:, :B, :V]


def encoder_pool(params, input_ids, visual_feats, attention_mask):
    # TODO(synk): the pretrained LXMERT encoder has no Pallas equivalent; a
    # deterministic synthetic pooler (masked-mean word embeddings + mean visual
    # feats -> tanh linear) stands in for `output.pooled_output`.
    emb_seq = params["emb"][input_ids]                                 # (B, S, D)
    m = attention_mask[..., None].astype(jnp.float32)
    mean_emb = (emb_seq * m).sum(axis=1) / jnp.maximum(m.sum(axis=1), 1.0)
    vis_mean = visual_feats.mean(axis=1)                               # (B, Dvis)
    return jnp.tanh(mean_emb @ params["w_pool"]
                    + vis_mean @ params["w_vis"] + params["b_pool"])   # (B, H)


def encoder_rnn_forward(params, input_ids, visual_feats, visual_pos,
                        attention_mask, answer_tokenized, tf_flags):
    """Mirrors Encoder_RNN.forward (encoder_type='lxmert', rnn_type='lstm',
    num_layers=1, bidirectional=False). visual_pos is accepted but unused by
    the synthetic pooler."""
    pooled = encoder_pool(params, input_ids, visual_feats, attention_mask)
    return run_decoder(tf_flags, pooled, answer_tokenized, params)


def _reference_decode(tf_flags, h0, answer_tokenized, params):
    """Pure-JAX mirror of the PyTorch decoding loop (numerical check)."""
    T, B = answer_tokenized.shape
    H = h0.shape[1]
    h = h0.astype(jnp.float32)
    c = jnp.zeros_like(h)
    x = jnp.full((B,), START_TOKEN, jnp.int32)
    outs = []
    for t in range(T):
        e = params["emb"][x]                                           # (B, D)
        gates = e @ params["w_ih"] + h @ params["w_hh"] + params["b"]
        i_g = jax.nn.sigmoid(gates[:, 0 * H:1 * H])
        f_g = jax.nn.sigmoid(gates[:, 1 * H:2 * H])
        g_g = jnp.tanh(gates[:, 2 * H:3 * H])
        o_g = jax.nn.sigmoid(gates[:, 3 * H:4 * H])
        c = f_g * c + i_g * g_g
        h = o_g * jnp.tanh(c)
        logits = h @ params["w_out"] + params["b_out"]
        outs.append(logits)
        best = jnp.argmax(logits, axis=1).astype(jnp.int32)
        x = jnp.where(tf_flags[t] > 0, answer_tokenized[t], best)
    return jnp.stack(outs, axis=0)


if __name__ == "__main__":
    key = jax.random.PRNGKey(0)
    # Small, self-consistent shapes (B=4 exercises the batch-padding path).
    B, S, Nv, Dvis = 4, 8, 4, 16      # batch, text seq, visual regions, visual feat dim
    H = D = 32                        # hidden size == word-embedding dim (as in LXMERT)
    V = 256                           # synthetic vocab size
    T = 8                             # target (answer) length

    ks = list(jax.random.split(key, 12))
    params = {
        "emb":    jax.random.normal(ks[0], (V, D), jnp.float32) * 0.02,
        "w_ih":   jax.random.normal(ks[1], (D, 4 * H), jnp.float32) * 0.1,
        "w_hh":   jax.random.normal(ks[2], (H, 4 * H), jnp.float32) * 0.1,
        "b":      jax.random.normal(ks[3], (1, 4 * H), jnp.float32) * 0.01,
        "w_out":  jax.random.normal(ks[4], (H, V), jnp.float32) * 0.1,
        "b_out":  jnp.zeros((1, V), jnp.float32),
        "w_pool": jax.random.normal(ks[5], (D, H), jnp.float32) * 0.1,
        "w_vis":  jax.random.normal(ks[6], (Dvis, H), jnp.float32) * 0.1,
        "b_pool": jnp.zeros((H,), jnp.float32),
    }

    input_ids = jax.random.randint(ks[7], (B, S), 0, V, dtype=jnp.int32)
    attention_mask = jnp.ones((B, S), jnp.int32)
    visual_feats = jax.random.normal(ks[8], (B, Nv, Dvis), jnp.float32)
    visual_pos = jax.random.uniform(ks[9], (B, Nv, 4), jnp.float32)
    answer_tokenized = jax.random.randint(ks[10], (T, B), 0, V, dtype=jnp.int32)
    # Teacher-forcing coin flips (PyTorch uses random.random() per step).
    tf_flags = (jax.random.uniform(ks[11], (T,)) < 0.5).astype(jnp.int32)

    outputs = encoder_rnn_forward(params, input_ids, visual_feats, visual_pos,
                                  attention_mask, answer_tokenized, tf_flags)
    outputs = jax.block_until_ready(outputs)
    assert outputs.shape == (T, B, V) and outputs.dtype == jnp.float32

    pooled = encoder_pool(params, input_ids, visual_feats, attention_mask)
    ref = _reference_decode(tf_flags, pooled, answer_tokenized, params)
    max_diff = float(jnp.max(jnp.abs(outputs - ref)))
    assert max_diff < 5e-3, f"kernel vs reference mismatch: {max_diff}"
    print("KERNEL_OK")
</pallas_src>

<mosaic_0001>
module attributes {stable_mosaic.version = 11 : i64} {
  func.func @_decoder_kernel(%arg0: i32, %arg1: memref<8xi32, #tpu.memory_space<smem>>, %arg2: memref<8x8xi32, #tpu.memory_space<smem>>, %arg3: memref<8x128xf32, #tpu.memory_space<vmem>>, %arg4: memref<256x32xf32, #tpu.memory_space<vmem>>, %arg5: memref<32x512xf32, #tpu.memory_space<vmem>>, %arg6: memref<128x512xf32, #tpu.memory_space<vmem>>, %arg7: memref<1x512xf32, #tpu.memory_space<vmem>>, %arg8: memref<128x256xf32, #tpu.memory_space<vmem>>, %arg9: memref<1x256xf32, #tpu.memory_space<vmem>>, %arg10: memref<64x256xf32, #tpu.memory_space<vmem>>, %arg11: memref<64x32xf32, #tpu.memory_space<vmem>>, %arg12: memref<64x512xf32, #tpu.memory_space<vmem>>, %arg13: memref<64x128xf32, #tpu.memory_space<vmem>>) attributes {dimension_semantics = [#tpu.dimension_semantics<arbitrary>], iteration_bounds = array<i64: 1>, scalar_prefetch = 2 : i64, scratch_operands = 3 : i64, tpu.core_type = #tpu.core_type<tc>, window_params = [{pipeline_mode = #tpu.pipeline_mode<synchronous>, transform_indices = @transform_0, window_bounds = array<i64: 8, 128>}, {pipeline_mode = #tpu.pipeline_mode<synchronous>, transform_indices = @transform_1, window_bounds = array<i64: 256, 32>}, {pipeline_mode = #tpu.pipeline_mode<synchronous>, transform_indices = @transform_2, window_bounds = array<i64: 32, 512>}, {pipeline_mode = #tpu.pipeline_mode<synchronous>, transform_indices = @transform_3, window_bounds = array<i64: 128, 512>}, {pipeline_mode = #tpu.pipeline_mode<synchronous>, transform_indices = @transform_4, window_bounds = array<i64: 1, 512>}, {pipeline_mode = #tpu.pipeline_mode<synchronous>, transform_indices = @transform_5, window_bounds = array<i64: 128, 256>}, {pipeline_mode = #tpu.pipeline_mode<synchronous>, transform_indices = @transform_6, window_bounds = array<i64: 1, 256>}, {pipeline_mode = #tpu.pipeline_mode<synchronous>, transform_indices = @transform_7, window_bounds = array<i64: 64, 256>}]} {
    %c0_i32 = arith.constant 0 : i32
    %c8_i32 = arith.constant 8 : i32
    %0 = arith.addi %c0_i32, %c8_i32 : i32
    %c1_i32 = arith.constant 1 : i32
    scf.for %arg14 = %c0_i32 to %0 step %c1_i32  : i32 {
      %c1_i32_125 = arith.constant 1 : i32
      %302 = arith.muli %arg14, %c1_i32_125 : i32
      %c0_i32_126 = arith.constant 0 : i32
      %303 = arith.addi %c0_i32_126, %302 : i32
      %c1_i32_127 = arith.constant 1 : i32
      %304 = arith.subi %303, %c1_i32_127 : i32
      %c0_i32_128 = arith.constant 0 : i32
      %305 = arith.maxsi %304, %c0_i32_128 : i32
      %c8_i32_129 = arith.constant 8 : i32
      %306 = arith.muli %303, %c8_i32_129 : i32
      %307 = tpu.assume_multiple %306, 8 : i32
      %c0_i32_130 = arith.constant 0 : i32
      %308 = arith.cmpi eq, %303, %c0_i32_130 : i32
      %309 = arith.index_cast %305 : i32 to index
      %c0_131 = arith.constant 0 : index
      %310 = memref.load %arg2[%309, %c0_131] : memref<8x8xi32, #tpu.memory_space<smem>>
      %c101_i32 = arith.constant 101 : i32
      %311 = arith.select %308, %c101_i32, %310 : i32
      %312 = arith.index_cast %311 : i32 to index
      %c0_132 = arith.constant 0 : index
      %313 = vector.load %arg4[%312, %c0_132] : memref<256x32xf32, #tpu.memory_space<vmem>>, vector<1x32xf32>
      %c0_i32_133 = arith.constant 0 : i32
      %314 = arith.addi %307, %c0_i32_133 : i32
      %315 = arith.index_cast %314 : i32 to index
      %c0_134 = arith.constant 0 : index
      %316 = vector.load %arg11[%315, %c0_134] : memref<64x32xf32, #tpu.memory_space<vmem>>, vector<1x32xf32>
      tpu.vector_store %arg11[%315, %c0_134], %313 {strides = array<i32>} : memref<64x32xf32, #tpu.memory_space<vmem>>, vector<1x32xf32>,
      %c0_i32_135 = arith.constant 0 : i32
      %317 = arith.cmpi eq, %303, %c0_i32_135 : i32
      %318 = arith.index_cast %305 : i32 to index
      %c1 = arith.constant 1 : index
      %319 = memref.load %arg2[%318, %c1] : memref<8x8xi32, #tpu.memory_space<smem>>
      %c101_i32_136 = arith.constant 101 : i32
      %320 = arith.select %317, %c101_i32_136, %319 : i32
      %321 = arith.index_cast %320 : i32 to index
      %c0_137 = arith.constant 0 : index
      %322 = vector.load %arg4[%321, %c0_137] : memref<256x32xf32, #tpu.memory_space<vmem>>, vector<1x32xf32>
      %c1_i32_138 = arith.constant 1 : i32
      %323 = arith.addi %307, %c1_i32_138 : i32
      %324 = arith.index_cast %323 : i32 to index
      %c0_139 = arith.constant 0 : index
      %325 = vector.load %arg11[%324, %c0_139] : memref<64x32xf32, #tpu.memory_space<vmem>>, vector<1x32xf32>
      tpu.vector_store %arg11[%324, %c0_139], %322 {strides = array<i32>} : memref<64x32xf32, #tpu.memory_space<vmem>>, vector<1x32xf32>,
      %c0_i32_140 = arith.constant 0 : i32
      %326 = arith.cmpi eq, %303, %c0_i32_140 : i32
      %327 = arith.index_cast %305 : i32 to index
      %c2 = arith.constant 2 : index
      %328 = memref.load %arg2[%327, %c2] : memref<8x8xi32, #tpu.memory_space<smem>>
      %c101_i32_141 = arith.constant 101 : i32
      %329 = arith.select %326, %c101_i32_141, %328 : i32
      %330 = arith.index_cast %329 : i32 to index
      %c0_142 = arith.constant 0 : index
      %331 = vector.load %arg4[%330, %c0_142] : memref<256x32xf32, #tpu.memory_space<vmem>>, vector<1x32xf32>
      %c2_i32_143 = arith.constant 2 : i32
      %332 = arith.addi %307, %c2_i32_143 : i32
      %333 = arith.index_cast %332 : i32 to index
      %c0_144 = arith.constant 0 : index
      %334 = vector.load %arg11[%333, %c0_144] : memref<64x32xf32, #tpu.memory_space<vmem>>, vector<1x32xf32>
      tpu.vector_store %arg11[%333, %c0_144], %331 {strides = array<i32>} : memref<64x32xf32, #tpu.memory_space<vmem>>, vector<1x32xf32>,
      %c0_i32_145 = arith.constant 0 : i32
      %335 = arith.cmpi eq, %303, %c0_i32_145 : i32
      %336 = arith.index_cast %305 : i32 to index
      %c3 = arith.constant 3 : index
      %337 = memref.load %arg2[%336, %c3] : memref<8x8xi32, #tpu.memory_space<smem>>
      %c101_i32_146 = arith.constant 101 : i32
      %338 = arith.select %335, %c101_i32_146, %337 : i32
      %339 = arith.index_cast %338 : i32 to index
      %c0_147 = arith.constant 0 : index
      %340 = vector.load %arg4[%339, %c0_147] : memref<256x32xf32, #tpu.memory_space<vmem>>, vector<1x32xf32>
      %c3_i32_148 = arith.constant 3 : i32
      %341 = arith.addi %307, %c3_i32_148 : i32
      %342 = arith.index_cast %341 : i32 to index
      %c0_149 = arith.constant 0 : index
      %343 = vector.load %arg11[%342, %c0_149] : memref<64x32xf32, #tpu.memory_space<vmem>>, vector<1x32xf32>
      tpu.vector_store %arg11[%342, %c0_149], %340 {strides = array<i32>} : memref<64x32xf32, #tpu.memory_space<vmem>>, vector<1x32xf32>,
      %c0_i32_150 = arith.constant 0 : i32
      %344 = arith.cmpi eq, %303, %c0_i32_150 : i32
      %345 = arith.index_cast %305 : i32 to index
      %c4 = arith.constant 4 : index
      %346 = memref.load %arg2[%345, %c4] : memref<8x8xi32, #tpu.memory_space<smem>>
      %c101_i32_151 = arith.constant 101 : i32
      %347 = arith.select %344, %c101_i32_151, %346 : i32
      %348 = arith.index_cast %347 : i32 to index
      %c0_152 = arith.constant 0 : index
      %349 = vector.load %arg4[%348, %c0_152] : memref<256x32xf32, #tpu.memory_space<vmem>>, vector<1x32xf32>
      %c4_i32_153 = arith.constant 4 : i32
      %350 = arith.addi %307, %c4_i32_153 : i32
      %351 = arith.index_cast %350 : i32 to index
      %c0_154 = arith.constant 0 : index
      %352 = vector.load %arg11[%351, %c0_154] : memref<64x32xf32, #tpu.memory_space<vmem>>, vector<1x32xf32>
      tpu.vector_store %arg11[%351, %c0_154], %349 {strides = array<i32>} : memref<64x32xf32, #tpu.memory_space<vmem>>, vector<1x32xf32>,
      %c0_i32_155 = arith.constant 0 : i32
      %353 = arith.cmpi eq, %303, %c0_i32_155 : i32
      %354 = arith.index_cast %305 : i32 to index
      %c5 = arith.constant 5 : index
      %355 = memref.load %arg2[%354, %c5] : memref<8x8xi32, #tpu.memory_space<smem>>
      %c101_i32_156 = arith.constant 101 : i32
      %356 = arith.select %353, %c101_i32_156, %355 : i32
      %357 = arith.index_cast %356 : i32 to index
      %c0_157 = arith.constant 0 : index
      %358 = vector.load %arg4[%357, %c0_157] : memref<256x32xf32, #tpu.memory_space<vmem>>, vector<1x32xf32>
      %c5_i32_158 = arith.constant 5 : i32
      %359 = arith.addi %307, %c5_i32_158 : i32
      %360 = arith.index_cast %359 : i32 to index
      %c0_159 = arith.constant 0 : index
      %361 = vector.load %arg11[%360, %c0_159] : memref<64x32xf32, #tpu.memory_space<vmem>>, vector<1x32xf32>
      tpu.vector_store %arg11[%360, %c0_159], %358 {strides = array<i32>} : memref<64x32xf32, #tpu.memory_space<vmem>>, vector<1x32xf32>,
      %c0_i32_160 = arith.constant 0 : i32
      %362 = arith.cmpi eq, %303, %c0_i32_160 : i32
      %363 = arith.index_cast %305 : i32 to index
      %c6 = arith.constant 6 : index
      %364 = memref.load %arg2[%363, %c6] : memref<8x8xi32, #tpu.memory_space<smem>>
      %c101_i32_161 = arith.constant 101 : i32
      %365 = arith.select %362, %c101_i32_161, %364 : i32
      %366 = arith.index_cast %365 : i32 to index
      %c0_162 = arith.constant 0 : index
      %367 = vector.load %arg4[%366, %c0_162] : memref<256x32xf32, #tpu.memory_space<vmem>>, vector<1x32xf32>
      %c6_i32_163 = arith.constant 6 : i32
      %368 = arith.addi %307, %c6_i32_163 : i32
      %369 = arith.index_cast %368 : i32 to index
      %c0_164 = arith.constant 0 : index
      %370 = vector.load %arg11[%369, %c0_164] : memref<64x32xf32, #tpu.memory_space<vmem>>, vector<1x32xf32>
      tpu.vector_store %arg11[%369, %c0_164], %367 {strides = array<i32>} : memref<64x32xf32, #tpu.memory_space<vmem>>, vector<1x32xf32>,
      %c0_i32_165 = arith.constant 0 : i32
      %371 = arith.cmpi eq, %303, %c0_i32_165 : i32
      %372 = arith.index_cast %305 : i32 to index
      %c7 = arith.constant 7 : index
      %373 = memref.load %arg2[%372, %c7] : memref<8x8xi32, #tpu.memory_space<smem>>
      %c101_i32_166 = arith.constant 101 : i32
      %374 = arith.select %371, %c101_i32_166, %373 : i32
      %375 = arith.index_cast %374 : i32 to index
      %c0_167 = arith.constant 0 : index
      %376 = vector.load %arg4[%375, %c0_167] : memref<256x32xf32, #tpu.memory_space<vmem>>, vector<1x32xf32>
      %c7_i32_168 = arith.constant 7 : i32
      %377 = arith.addi %307, %c7_i32_168 : i32
      %378 = arith.index_cast %377 : i32 to index
      %c0_169 = arith.constant 0 : index
      %379 = vector.load %arg11[%378, %c0_169] : memref<64x32xf32, #tpu.memory_space<vmem>>, vector<1x32xf32>
      tpu.vector_store %arg11[%378, %c0_169], %376 {strides = array<i32>} : memref<64x32xf32, #tpu.memory_space<vmem>>, vector<1x32xf32>,
    }
    %c8_i32_0 = arith.constant 8 : i32
    %c0 = arith.constant 0 : index
    %c0_1 = arith.constant 0 : index
    %1 = vector.load %arg11[%c0, %c0_1] : memref<64x32xf32, #tpu.memory_space<vmem>>, vector<64x32xf32>
    %c0_2 = arith.constant 0 : index
    %c0_3 = arith.constant 0 : index
    %2 = vector.load %arg5[%c0_2, %c0_3] : memref<32x512xf32, #tpu.memory_space<vmem>>, vector<32x512xf32>
    %cst = arith.constant dense<0.000000e+00> : vector<64x512xf32>
    %3 = tpu.matmul %1, %2, %cst {dimension_numbers = #tpu.dot_dimension_numbers<[1], [0], [0], [1], [0, 0, 1, 1], [], []>} : vector<64x32xf32>, vector<32x512xf32>, vector<64x512xf32> -> vector<64x512xf32>
    %c0_4 = arith.constant 0 : index
    %c0_5 = arith.constant 0 : index
    %4 = vector.load %arg12[%c0_4, %c0_5] : memref<64x512xf32, #tpu.memory_space<vmem>>, vector<64x512xf32>
    tpu.vector_store %arg12[%c0_4, %c0_5], %3 {strides = array<i32>} : memref<64x512xf32, #tpu.memory_space<vmem>>, vector<64x512xf32>,
    %c0_6 = arith.constant 0 : index
    %c0_7 = arith.constant 0 : index
    %5 = vector.load %arg3[%c0_6, %c0_7] : memref<8x128xf32, #tpu.memory_space<vmem>>, vector<8x128xf32>
    %cst_8 = arith.constant 0.000000e+00 : f32
    %6 = vector.broadcast %cst_8 : f32 to vector<8x128xf32>
    %c0_i32_9 = arith.constant 0 : i32
    %c8_i32_10 = arith.constant 8 : i32
    %7 = arith.muli %c0_i32_9, %c8_i32_10 : i32
    %8 = tpu.assume_multiple %7, 8 : i32
    %9 = arith.index_cast %8 : i32 to index
    %c0_11 = arith.constant 0 : index
    %10 = vector.load %arg12[%9, %c0_11] : memref<64x512xf32, #tpu.memory_space<vmem>>, vector<8x512xf32>
    %c0_12 = arith.constant 0 : index
    %c0_13 = arith.constant 0 : index
    %11 = vector.load %arg6[%c0_12, %c0_13] : memref<128x512xf32, #tpu.memory_space<vmem>>, vector<128x512xf32>
    %cst_14 = arith.constant dense<0.000000e+00> : vector<8x512xf32>
    %12 = tpu.matmul %5, %11, %cst_14 {dimension_numbers = #tpu.dot_dimension_numbers<[1], [0], [0], [1], [0, 0, 1, 1], [], []>} : vector<8x128xf32>, vector<128x512xf32>, vector<8x512xf32> -> vector<8x512xf32>
    %13 = arith.addf %10, %12 : vector<8x512xf32>
    %c0_15 = arith.constant 0 : index
    %c0_16 = arith.constant 0 : index
    %14 = vector.load %arg7[%c0_15, %c0_16] : memref<1x512xf32, #tpu.memory_space<vmem>>, vector<1x512xf32>
    %15 = vector.broadcast %14 : vector<1x512xf32> to vector<8x512xf32>
    %16 = arith.addf %13, %15 : vector<8x512xf32>
    %17 = vector.extract_strided_slice %16 {offsets = [0, 0], sizes = [8, 384], strides = [1, 1]} : vector<8x512xf32> to vector<8x384xf32>
    %18 = arith.negf %17 : vector<8x384xf32>
    %19 = math.exp %18 : vector<8x384xf32>
    %cst_17 = arith.constant 1.000000e+00 : f32
    %20 = vector.broadcast %cst_17 : f32 to vector<8x384xf32>
    %21 = arith.addf %20, %19 : vector<8x384xf32>
    %22 = arith.divf %20, %21 : vector<8x384xf32>
    %23 = vector.extract_strided_slice %16 {offsets = [0, 384], sizes = [8, 128], strides = [1, 1]} : vector<8x512xf32> to vector<8x128xf32>
    %24 = math.tanh %23 : vector<8x128xf32>
    %25 = vector.extract_strided_slice %22 {offsets = [0, 128], sizes = [8, 128], strides = [1, 1]} : vector<8x384xf32> to vector<8x128xf32>
    %26 = arith.mulf %25, %6 : vector<8x128xf32>
    %27 = vector.extract_strided_slice %22 {offsets = [0, 0], sizes = [8, 128], strides = [1, 1]} : vector<8x384xf32> to vector<8x128xf32>
    %28 = arith.mulf %27, %24 : vector<8x128xf32>
    %29 = arith.addf %26, %28 : vector<8x128xf32>
    %30 = vector.extract_strided_slice %22 {offsets = [0, 256], sizes = [8, 128], strides = [1, 1]} : vector<8x384xf32> to vector<8x128xf32>
    %31 = math.tanh %29 : vector<8x128xf32>
    %32 = arith.mulf %30, %31 : vector<8x128xf32>
    %33 = arith.index_cast %8 : i32 to index
    %c0_18 = arith.constant 0 : index
    %34 = vector.load %arg13[%33, %c0_18] : memref<64x128xf32, #tpu.memory_space<vmem>>, vector<8x128xf32>
    tpu.vector_store %arg13[%33, %c0_18], %32 {strides = array<i32>} : memref<64x128xf32, #tpu.memory_space<vmem>>, vector<8x128xf32>,
    %c1_i32_19 = arith.constant 1 : i32
    %35 = arith.addi %c0_i32_9, %c1_i32_19 : i32
    %c8_i32_20 = arith.constant 8 : i32
    %36 = arith.cmpi slt, %35, %c8_i32_20 : i32
    %37 = arith.index_cast %c0_i32_9 : i32 to index
    %38 = memref.load %arg1[%37] : memref<8xi32, #tpu.memory_space<smem>>
    %c0_i32_21 = arith.constant 0 : i32
    %39 = arith.cmpi eq, %38, %c0_i32_21 : i32
    %40 = arith.andi %36, %39 : i1
    %41 = arith.extui %40 : i1 to i32
    %c0_i32_22 = arith.constant 0 : i32
    %42 = arith.cmpi ne, %41, %c0_i32_22 : i32
    scf.if %42 {
      %c0_125 = arith.constant 0 : index
      %c0_126 = arith.constant 0 : index
      %302 = vector.load %arg8[%c0_125, %c0_126] : memref<128x256xf32, #tpu.memory_space<vmem>>, vector<128x256xf32>
      %cst_127 = arith.constant dense<0.000000e+00> : vector<8x256xf32>
      %303 = tpu.matmul %32, %302, %cst_127 {dimension_numbers = #tpu.dot_dimension_numbers<[1], [0], [0], [1], [0, 0, 1, 1], [], []>} : vector<8x128xf32>, vector<128x256xf32>, vector<8x256xf32> -> vector<8x256xf32>
      %c0_128 = arith.constant 0 : index
      %c0_129 = arith.constant 0 : index
      %304 = vector.load %arg9[%c0_128, %c0_129] : memref<1x256xf32, #tpu.memory_space<vmem>>, vector<1x256xf32>
      %305 = vector.broadcast %304 : vector<1x256xf32> to vector<8x256xf32>
      %306 = arith.addf %303, %305 : vector<8x256xf32>
      %307 = tpu.reduce_index %306 {axis = 1 : i32, kind = #tpu.reduction_kind<arg_max>} : vector<8x256xf32> -> vector<8xi32>
      %308 = vector.shape_cast %307 : vector<8xi32> to vector<8x1xi32>
      %309 = tpu.iota {dimensions = array<i32: 1>} : vector<8x256xi32>
      %310 = vector.broadcast %308 : vector<8x1xi32> to vector<8x256xi32>
      %311 = arith.cmpi eq, %309, %310 : vector<8x256xi32>
      %312 = arith.extui %311 : vector<8x256xi1> to vector<8x256xi32>
      %313 = arith.sitofp %312 : vector<8x256xi32> to vector<8x256xf32>
      %c0_130 = arith.constant 0 : index
      %c0_131 = arith.constant 0 : index
      %314 = vector.load %arg4[%c0_130, %c0_131] : memref<256x32xf32, #tpu.memory_space<vmem>>, vector<256x32xf32>
      %cst_132 = arith.constant dense<0.000000e+00> : vector<8x32xf32>
      %315 = tpu.matmul %313, %314, %cst_132 {dimension_numbers = #tpu.dot_dimension_numbers<[1], [0], [0], [1], [0, 0, 1, 1], [], []>} : vector<8x256xf32>, vector<256x32xf32>, vector<8x32xf32> -> vector<8x32xf32>
      %c1_i32_133 = arith.constant 1 : i32
      %316 = arith.addi %c0_i32_9, %c1_i32_133 : i32
      %c8_i32_134 = arith.constant 8 : i32
      %317 = arith.muli %316, %c8_i32_134 : i32
      %318 = tpu.assume_multiple %317, 8 : i32
      %c0_135 = arith.constant 0 : index
      %c0_136 = arith.constant 0 : index
      %319 = vector.load %arg5[%c0_135, %c0_136] : memref<32x512xf32, #tpu.memory_space<vmem>>, vector<32x512xf32>
      %cst_137 = arith.constant dense<0.000000e+00> : vector<8x512xf32>
      %320 = tpu.matmul %315, %319, %cst_137 {dimension_numbers = #tpu.dot_dimension_numbers<[1], [0], [0], [1], [0, 0, 1, 1], [], []>} : vector<8x32xf32>, vector<32x512xf32>, vector<8x512xf32> -> vector<8x512xf32>
      %321 = arith.index_cast %318 : i32 to index
      %c0_138 = arith.constant 0 : index
      %322 = vector.load %arg12[%321, %c0_138] : memref<64x512xf32, #tpu.memory_space<vmem>>, vector<8x512xf32>
      tpu.vector_store %arg12[%321, %c0_138], %320 {strides = array<i32>} : memref<64x512xf32, #tpu.memory_space<vmem>>, vector<8x512xf32>,
    } else {
    }
    %c1_i32_23 = arith.constant 1 : i32
    %c8_i32_24 = arith.constant 8 : i32
    %43 = arith.muli %c1_i32_23, %c8_i32_24 : i32
    %44 = tpu.assume_multiple %43, 8 : i32
    %45 = arith.index_cast %44 : i32 to index
    %c0_25 = arith.constant 0 : index
    %46 = vector.load %arg12[%45, %c0_25] : memref<64x512xf32, #tpu.memory_space<vmem>>, vector<8x512xf32>
    %c0_26 = arith.constant 0 : index
    %c0_27 = arith.constant 0 : index
    %47 = vector.load %arg6[%c0_26, %c0_27] : memref<128x512xf32, #tpu.memory_space<vmem>>, vector<128x512xf32>
    %cst_28 = arith.constant dense<0.000000e+00> : vector<8x512xf32>
    %48 = tpu.matmul %32, %47, %cst_28 {dimension_numbers = #tpu.dot_dimension_numbers<[1], [0], [0], [1], [0, 0, 1, 1], [], []>} : vector<8x128xf32>, vector<128x512xf32>, vector<8x512xf32> -> vector<8x512xf32>
    %49 = arith.addf %46, %48 : vector<8x512xf32>
    %c0_29 = arith.constant 0 : index
    %c0_30 = arith.constant 0 : index
    %50 = vector.load %arg7[%c0_29, %c0_30] : memref<1x512xf32, #tpu.memory_space<vmem>>, vector<1x512xf32>
    %51 = vector.broadcast %50 : vector<1x512xf32> to vector<8x512xf32>
    %52 = arith.addf %49, %51 : vector<8x512xf32>
    %53 = vector.extract_strided_slice %52 {offsets = [0, 0], sizes = [8, 384], strides = [1, 1]} : vector<8x512xf32> to vector<8x384xf32>
    %54 = arith.negf %53 : vector<8x384xf32>
    %55 = math.exp %54 : vector<8x384xf32>
    %cst_31 = arith.constant 1.000000e+00 : f32
    %56 = vector.broadcast %cst_31 : f32 to vector<8x384xf32>
    %57 = arith.addf %56, %55 : vector<8x384xf32>
    %58 = arith.divf %56, %57 : vector<8x384xf32>
    %59 = vector.extract_strided_slice %52 {offsets = [0, 384], sizes = [8, 128], strides = [1, 1]} : vector<8x512xf32> to vector<8x128xf32>
    %60 = math.tanh %59 : vector<8x128xf32>
    %61 = vector.extract_strided_slice %58 {offsets = [0, 128], sizes = [8, 128], strides = [1, 1]} : vector<8x384xf32> to vector<8x128xf32>
    %62 = arith.mulf %61, %29 : vector<8x128xf32>
    %63 = vector.extract_strided_slice %58 {offsets = [0, 0], sizes = [8, 128], strides = [1, 1]} : vector<8x384xf32> to vector<8x128xf32>
    %64 = arith.mulf %63, %60 : vector<8x128xf32>
    %65 = arith.addf %62, %64 : vector<8x128xf32>
    %66 = vector.extract_strided_slice %58 {offsets = [0, 256], sizes = [8, 128], strides = [1, 1]} : vector<8x384xf32> to vector<8x128xf32>
    %67 = math.tanh %65 : vector<8x128xf32>
    %68 = arith.mulf %66, %67 : vector<8x128xf32>
    %69 = arith.index_cast %44 : i32 to index
    %c0_32 = arith.constant 0 : index
    %70 = vector.load %arg13[%69, %c0_32] : memref<64x128xf32, #tpu.memory_space<vmem>>, vector<8x128xf32>
    tpu.vector_store %arg13[%69, %c0_32], %68 {strides = array<i32>} : memref<64x128xf32, #tpu.memory_space<vmem>>, vector<8x128xf32>,
    %c1_i32_33 = arith.constant 1 : i32
    %71 = arith.addi %c1_i32_23, %c1_i32_33 : i32
    %c8_i32_34 = arith.constant 8 : i32
    %72 = arith.cmpi slt, %71, %c8_i32_34 : i32
    %73 = arith.index_cast %c1_i32_23 : i32 to index
    %74 = memref.load %arg1[%73] : memref<8xi32, #tpu.memory_space<smem>>
    %c0_i32_35 = arith.constant 0 : i32
    %75 = arith.cmpi eq, %74, %c0_i32_35 : i32
    %76 = arith.andi %72, %75 : i1
    %77 = arith.extui %76 : i1 to i32
    %c0_i32_36 = arith.constant 0 : i32
    %78 = arith.cmpi ne, %77, %c0_i32_36 : i32
    scf.if %78 {
      %c0_125 = arith.constant 0 : index
      %c0_126 = arith.constant 0 : index
      %302 = vector.load %arg8[%c0_125, %c0_126] : memref<128x256xf32, #tpu.memory_space<vmem>>, vector<128x256xf32>
      %cst_127 = arith.constant dense<0.000000e+00> : vector<8x256xf32>
      %303 = tpu.matmul %68, %302, %cst_127 {dimension_numbers = #tpu.dot_dimension_numbers<[1], [0], [0], [1], [0, 0, 1, 1], [], []>} : vector<8x128xf32>, vector<128x256xf32>, vector<8x256xf32> -> vector<8x256xf32>
      %c0_128 = arith.constant 0 : index
      %c0_129 = arith.constant 0 : index
      %304 = vector.load %arg9[%c0_128, %c0_129] : memref<1x256xf32, #tpu.memory_space<vmem>>, vector<1x256xf32>
      %305 = vector.broadcast %304 : vector<1x256xf32> to vector<8x256xf32>
      %306 = arith.addf %303, %305 : vector<8x256xf32>
      %307 = tpu.reduce_index %306 {axis = 1 : i32, kind = #tpu.reduction_kind<arg_max>} : vector<8x256xf32> -> vector<8xi32>
      %308 = vector.shape_cast %307 : vector<8xi32> to vector<8x1xi32>
      %309 = tpu.iota {dimensions = array<i32: 1>} : vector<8x256xi32>
      %310 = vector.broadcast %308 : vector<8x1xi32> to vector<8x256xi32>
      %311 = arith.cmpi eq, %309, %310 : vector<8x256xi32>
      %312 = arith.extui %311 : vector<8x256xi1> to vector<8x256xi32>
      %313 = arith.sitofp %312 : vector<8x256xi32> to vector<8x256xf32>
      %c0_130 = arith.constant 0 : index
      %c0_131 = arith.constant 0 : index
      %314 = vector.load %arg4[%c0_130, %c0_131] : memref<256x32xf32, #tpu.memory_space<vmem>>, vector<256x32xf32>
      %cst_132 = arith.constant dense<0.000000e+00> : vector<8x32xf32>
      %315 = tpu.matmul %313, %314, %cst_132 {dimension_numbers = #tpu.dot_dimension_numbers<[1], [0], [0], [1], [0, 0, 1, 1], [], []>} : vector<8x256xf32>, vector<256x32xf32>, vector<8x32xf32> -> vector<8x32xf32>
      %c1_i32_133 = arith.constant 1 : i32
      %316 = arith.addi %c1_i32_23, %c1_i32_133 : i32
      %c8_i32_134 = arith.constant 8 : i32
      %317 = arith.muli %316, %c8_i32_134 : i32
      %318 = tpu.assume_multiple %317, 8 : i32
      %c0_135 = arith.constant 0 : index
      %c0_136 = arith.constant 0 : index
      %319 = vector.load %arg5[%c0_135, %c0_136] : memref<32x512xf32, #tpu.memory_space<vmem>>, vector<32x512xf32>
      %cst_137 = arith.constant dense<0.000000e+00> : vector<8x512xf32>
      %320 = tpu.matmul %315, %319, %cst_137 {dimension_numbers = #tpu.dot_dimension_numbers<[1], [0], [0], [1], [0, 0, 1, 1], [], []>} : vector<8x32xf32>, vector<32x512xf32>, vector<8x512xf32> -> vector<8x512xf32>
      %321 = arith.index_cast %318 : i32 to index
      %c0_138 = arith.constant 0 : index
      %322 = vector.load %arg12[%321, %c0_138] : memref<64x512xf32, #tpu.memory_space<vmem>>, vector<8x512xf32>
      tpu.vector_store %arg12[%321, %c0_138], %320 {strides = array<i32>} : memref<64x512xf32, #tpu.memory_space<vmem>>, vector<8x512xf32>,
    } else {
    }
    %c2_i32 = arith.constant 2 : i32
    %c8_i32_37 = arith.constant 8 : i32
    %79 = arith.muli %c2_i32, %c8_i32_37 : i32
    %80 = tpu.assume_multiple %79, 8 : i32
    %81 = arith.index_cast %80 : i32 to index
    %c0_38 = arith.constant 0 : index
    %82 = vector.load %arg12[%81, %c0_38] : memref<64x512xf32, #tpu.memory_space<vmem>>, vector<8x512xf32>
    %c0_39 = arith.constant 0 : index
    %c0_40 = arith.constant 0 : index
    %83 = vector.load %arg6[%c0_39, %c0_40] : memref<128x512xf32, #tpu.memory_space<vmem>>, vector<128x512xf32>
    %cst_41 = arith.constant dense<0.000000e+00> : vector<8x512xf32>
    %84 = tpu.matmul %68, %83, %cst_41 {dimension_numbers = #tpu.dot_dimension_numbers<[1], [0], [0], [1], [0, 0, 1, 1], [], []>} : vector<8x128xf32>, vector<128x512xf32>, vector<8x512xf32> -> vector<8x512xf32>
    %85 = arith.addf %82, %84 : vector<8x512xf32>
    %c0_42 = arith.constant 0 : index
    %c0_43 = arith.constant 0 : index
    %86 = vector.load %arg7[%c0_42, %c0_43] : memref<1x512xf32, #tpu.memory_space<vmem>>, vector<1x512xf32>
    %87 = vector.broadcast %86 : vector<1x512xf32> to vector<8x512xf32>
    %88 = arith.addf %85, %87 : vector<8x512xf32>
    %89 = vector.extract_strided_slice %88 {offsets = [0, 0], sizes = [8, 384], strides = [1, 1]} : vector<8x512xf32> to vector<8x384xf32>
    %90 = arith.negf %89 : vector<8x384xf32>
    %91 = math.exp %90 : vector<8x384xf32>
    %cst_44 = arith.constant 1.000000e+00 : f32
    %92 = vector.broadcast %cst_44 : f32 to vector<8x384xf32>
    %93 = arith.addf %92, %91 : vector<8x384xf32>
    %94 = arith.divf %92, %93 : vector<8x384xf32>
    %95 = vector.extract_strided_slice %88 {offsets = [0, 384], sizes = [8, 128], strides = [1, 1]} : vector<8x512xf32> to vector<8x128xf32>
    %96 = math.tanh %95 : vector<8x128xf32>
    %97 = vector.extract_strided_slice %94 {offsets = [0, 128], sizes = [8, 128], strides = [1, 1]} : vector<8x384xf32> to vector<8x128xf32>
    %98 = arith.mulf %97, %65 : vector<8x128xf32>
    %99 = vector.extract_strided_slice %94 {offsets = [0, 0], sizes = [8, 128], strides = [1, 1]} : vector<8x384xf32> to vector<8x128xf32>
    %100 = arith.mulf %99, %96 : vector<8x128xf32>
    %101 = arith.addf %98, %100 : vector<8x128xf32>
    %102 = vector.extract_strided_slice %94 {offsets = [0, 256], sizes = [8, 128], strides = [1, 1]} : vector<8x384xf32> to vector<8x128xf32>
    %103 = math.tanh %101 : vector<8x128xf32>
    %104 = arith.mulf %102, %103 : vector<8x128xf32>
    %105 = arith.index_cast %80 : i32 to index
    %c0_45 = arith.constant 0 : index
    %106 = vector.load %arg13[%105, %c0_45] : memref<64x128xf32, #tpu.memory_space<vmem>>, vector<8x128xf32>
    tpu.vector_store %arg13[%105, %c0_45], %104 {strides = array<i32>} : memref<64x128xf32, #tpu.memory_space<vmem>>, vector<8x128xf32>,
    %c1_i32_46 = arith.constant 1 : i32
    %107 = arith.addi %c2_i32, %c1_i32_46 : i32
    %c8_i32_47 = arith.constant 8 : i32
    %108 = arith.cmpi slt, %107, %c8_i32_47 : i32
    %109 = arith.index_cast %c2_i32 : i32 to index
    %110 = memref.load %arg1[%109] : memref<8xi32, #tpu.memory_space<smem>>
    %c0_i32_48 = arith.constant 0 : i32
    %111 = arith.cmpi eq, %110, %c0_i32_48 : i32
    %112 = arith.andi %108, %111 : i1
    %113 = arith.extui %112 : i1 to i32
    %c0_i32_49 = arith.constant 0 : i32
    %114 = arith.cmpi ne, %113, %c0_i32_49 : i32
    scf.if %114 {
      %c0_125 = arith.constant 0 : index
      %c0_126 = arith.constant 0 : index
      %302 = vector.load %arg8[%c0_125, %c0_126] : memref<128x256xf32, #tpu.memory_space<vmem>>, vector<128x256xf32>
      %cst_127 = arith.constant dense<0.000000e+00> : vector<8x256xf32>
      %303 = tpu.matmul %104, %302, %cst_127 {dimension_numbers = #tpu.dot_dimension_numbers<[1], [0], [0], [1], [0, 0, 1, 1], [], []>} : vector<8x128xf32>, vector<128x256xf32>, vector<8x256xf32> -> vector<8x256xf32>
      %c0_128 = arith.constant 0 : index
      %c0_129 = arith.constant 0 : index
      %304 = vector.load %arg9[%c0_128, %c0_129] : memref<1x256xf32, #tpu.memory_space<vmem>>, vector<1x256xf32>
      %305 = vector.broadcast %304 : vector<1x256xf32> to vector<8x256xf32>
      %306 = arith.addf %303, %305 : vector<8x256xf32>
      %307 = tpu.reduce_index %306 {axis = 1 : i32, kind = #tpu.reduction_kind<arg_max>} : vector<8x256xf32> -> vector<8xi32>
      %308 = vector.shape_cast %307 : vector<8xi32> to vector<8x1xi32>
      %309 = tpu.iota {dimensions = array<i32: 1>} : vector<8x256xi32>
      %310 = vector.broadcast %308 : vector<8x1xi32> to vector<8x256xi32>
      %311 = arith.cmpi eq, %309, %310 : vector<8x256xi32>
      %312 = arith.extui %311 : vector<8x256xi1> to vector<8x256xi32>
      %313 = arith.sitofp %312 : vector<8x256xi32> to vector<8x256xf32>
      %c0_130 = arith.constant 0 : index
      %c0_131 = arith.constant 0 : index
      %314 = vector.load %arg4[%c0_130, %c0_131] : memref<256x32xf32, #tpu.memory_space<vmem>>, vector<256x32xf32>
      %cst_132 = arith.constant dense<0.000000e+00> : vector<8x32xf32>
      %315 = tpu.matmul %313, %314, %cst_132 {dimension_numbers = #tpu.dot_dimension_numbers<[1], [0], [0], [1], [0, 0, 1, 1], [], []>} : vector<8x256xf32>, vector<256x32xf32>, vector<8x32xf32> -> vector<8x32xf32>
      %c1_i32_133 = arith.constant 1 : i32
      %316 = arith.addi %c2_i32, %c1_i32_133 : i32
      %c8_i32_134 = arith.constant 8 : i32
      %317 = arith.muli %316, %c8_i32_134 : i32
      %318 = tpu.assume_multiple %317, 8 : i32
      %c0_135 = arith.constant 0 : index
      %c0_136 = arith.constant 0 : index
      %319 = vector.load %arg5[%c0_135, %c0_136] : memref<32x512xf32, #tpu.memory_space<vmem>>, vector<32x512xf32>
      %cst_137 = arith.constant dense<0.000000e+00> : vector<8x512xf32>
      %320 = tpu.matmul %315, %319, %cst_137 {dimension_numbers = #tpu.dot_dimension_numbers<[1], [0], [0], [1], [0, 0, 1, 1], [], []>} : vector<8x32xf32>, vector<32x512xf32>, vector<8x512xf32> -> vector<8x512xf32>
      %321 = arith.index_cast %318 : i32 to index
      %c0_138 = arith.constant 0 : index
      %322 = vector.load %arg12[%321, %c0_138] : memref<64x512xf32, #tpu.memory_space<vmem>>, vector<8x512xf32>
      tpu.vector_store %arg12[%321, %c0_138], %320 {strides = array<i32>} : memref<64x512xf32, #tpu.memory_space<vmem>>, vector<8x512xf32>,
    } else {
    }
    %c3_i32 = arith.constant 3 : i32
    %c8_i32_50 = arith.constant 8 : i32
    %115 = arith.muli %c3_i32, %c8_i32_50 : i32
    %116 = tpu.assume_multiple %115, 8 : i32
    %117 = arith.index_cast %116 : i32 to index
    %c0_51 = arith.constant 0 : index
    %118 = vector.load %arg12[%117, %c0_51] : memref<64x512xf32, #tpu.memory_space<vmem>>, vector<8x512xf32>
    %c0_52 = arith.constant 0 : index
    %c0_53 = arith.constant 0 : index
    %119 = vector.load %arg6[%c0_52, %c0_53] : memref<128x512xf32, #tpu.memory_space<vmem>>, vector<128x512xf32>
    %cst_54 = arith.constant dense<0.000000e+00> : vector<8x512xf32>
    %120 = tpu.matmul %104, %119, %cst_54 {dimension_numbers = #tpu.dot_dimension_numbers<[1], [0], [0], [1], [0, 0, 1, 1], [], []>} : vector<8x128xf32>, vector<128x512xf32>, vector<8x512xf32> -> vector<8x512xf32>
    %121 = arith.addf %118, %120 : vector<8x512xf32>
    %c0_55 = arith.constant 0 : index
    %c0_56 = arith.constant 0 : index
    %122 = vector.load %arg7[%c0_55, %c0_56] : memref<1x512xf32, #tpu.memory_space<vmem>>, vector<1x512xf32>
    %123 = vector.broadcast %122 : vector<1x512xf32> to vector<8x512xf32>
    %124 = arith.addf %121, %123 : vector<8x512xf32>
    %125 = vector.extract_strided_slice %124 {offsets = [0, 0], sizes = [8, 384], strides = [1, 1]} : vector<8x512xf32> to vector<8x384xf32>
    %126 = arith.negf %125 : vector<8x384xf32>
    %127 = math.exp %126 : vector<8x384xf32>
    %cst_57 = arith.constant 1.000000e+00 : f32
    %128 = vector.broadcast %cst_57 : f32 to vector<8x384xf32>
    %129 = arith.addf %128, %127 : vector<8x384xf32>
    %130 = arith.divf %128, %129 : vector<8x384xf32>
    %131 = vector.extract_strided_slice %124 {offsets = [0, 384], sizes = [8, 128], strides = [1, 1]} : vector<8x512xf32> to vector<8x128xf32>
    %132 = math.tanh %131 : vector<8x128xf32>
    %133 = vector.extract_strided_slice %130 {offsets = [0, 128], sizes = [8, 128], strides = [1, 1]} : vector<8x384xf32> to vector<8x128xf32>
    %134 = arith.mulf %133, %101 : vector<8x128xf32>
    %135 = vector.extract_strided_slice %130 {offsets = [0, 0], sizes = [8, 128], strides = [1, 1]} : vector<8x384xf32> to vector<8x128xf32>
    %136 = arith.mulf %135, %132 : vector<8x128xf32>
    %137 = arith.addf %134, %136 : vector<8x128xf32>
    %138 = vector.extract_strided_slice %130 {offsets = [0, 256], sizes = [8, 128], strides = [1, 1]} : vector<8x384xf32> to vector<8x128xf32>
    %139 = math.tanh %137 : vector<8x128xf32>
    %140 = arith.mulf %138, %139 : vector<8x128xf32>
    %141 = arith.index_cast %116 : i32 to index
    %c0_58 = arith.constant 0 : index
    %142 = vector.load %arg13[%141, %c0_58] : memref<64x128xf32, #tpu.memory_space<vmem>>, vector<8x128xf32>
    tpu.vector_store %arg13[%141, %c0_58], %140 {strides = array<i32>} : memref<64x128xf32, #tpu.memory_space<vmem>>, vector<8x128xf32>,
    %c1_i32_59 = arith.constant 1 : i32
    %143 = arith.addi %c3_i32, %c1_i32_59 : i32
    %c8_i32_60 = arith.constant 8 : i32
    %144 = arith.cmpi slt, %143, %c8_i32_60 : i32
    %145 = arith.index_cast %c3_i32 : i32 to index
    %146 = memref.load %arg1[%145] : memref<8xi32, #tpu.memory_space<smem>>
    %c0_i32_61 = arith.constant 0 : i32
    %147 = arith.cmpi eq, %146, %c0_i32_61 : i32
    %148 = arith.andi %144, %147 : i1
    %149 = arith.extui %148 : i1 to i32
    %c0_i32_62 = arith.constant 0 : i32
    %150 = arith.cmpi ne, %149, %c0_i32_62 : i32
    scf.if %150 {
      %c0_125 = arith.constant 0 : index
      %c0_126 = arith.constant 0 : index
      %302 = vector.load %arg8[%c0_125, %c0_126] : memref<128x256xf32, #tpu.memory_space<vmem>>, vector<128x256xf32>
      %cst_127 = arith.constant dense<0.000000e+00> : vector<8x256xf32>
      %303 = tpu.matmul %140, %302, %cst_127 {dimension_numbers = #tpu.dot_dimension_numbers<[1], [0], [0], [1], [0, 0, 1, 1], [], []>} : vector<8x128xf32>, vector<128x256xf32>, vector<8x256xf32> -> vector<8x256xf32>
      %c0_128 = arith.constant 0 : index
      %c0_129 = arith.constant 0 : index
      %304 = vector.load %arg9[%c0_128, %c0_129] : memref<1x256xf32, #tpu.memory_space<vmem>>, vector<1x256xf32>
      %305 = vector.broadcast %304 : vector<1x256xf32> to vector<8x256xf32>
      %306 = arith.addf %303, %305 : vector<8x256xf32>
      %307 = tpu.reduce_index %306 {axis = 1 : i32, kind = #tpu.reduction_kind<arg_max>} : vector<8x256xf32> -> vector<8xi32>
      %308 = vector.shape_cast %307 : vector<8xi32> to vector<8x1xi32>
      %309 = tpu.iota {dimensions = array<i32: 1>} : vector<8x256xi32>
      %310 = vector.broadcast %308 : vector<8x1xi32> to vector<8x256xi32>
      %311 = arith.cmpi eq, %309, %310 : vector<8x256xi32>
      %312 = arith.extui %311 : vector<8x256xi1> to vector<8x256xi32>
      %313 = arith.sitofp %312 : vector<8x256xi32> to vector<8x256xf32>
      %c0_130 = arith.constant 0 : index
      %c0_131 = arith.constant 0 : index
      %314 = vector.load %arg4[%c0_130, %c0_131] : memref<256x32xf32, #tpu.memory_space<vmem>>, vector<256x32xf32>
      %cst_132 = arith.constant dense<0.000000e+00> : vector<8x32xf32>
      %315 = tpu.matmul %313, %314, %cst_132 {dimension_numbers = #tpu.dot_dimension_numbers<[1], [0], [0], [1], [0, 0, 1, 1], [], []>} : vector<8x256xf32>, vector<256x32xf32>, vector<8x32xf32> -> vector<8x32xf32>
      %c1_i32_133 = arith.constant 1 : i32
      %316 = arith.addi %c3_i32, %c1_i32_133 : i32
      %c8_i32_134 = arith.constant 8 : i32
      %317 = arith.muli %316, %c8_i32_134 : i32
      %318 = tpu.assume_multiple %317, 8 : i32
      %c0_135 = arith.constant 0 : index
      %c0_136 = arith.constant 0 : index
      %319 = vector.load %arg5[%c0_135, %c0_136] : memref<32x512xf32, #tpu.memory_space<vmem>>, vector<32x512xf32>
      %cst_137 = arith.constant dense<0.000000e+00> : vector<8x512xf32>
      %320 = tpu.matmul %315, %319, %cst_137 {dimension_numbers = #tpu.dot_dimension_numbers<[1], [0], [0], [1], [0, 0, 1, 1], [], []>} : vector<8x32xf32>, vector<32x512xf32>, vector<8x512xf32> -> vector<8x512xf32>
      %321 = arith.index_cast %318 : i32 to index
      %c0_138 = arith.constant 0 : index
      %322 = vector.load %arg12[%321, %c0_138] : memref<64x512xf32, #tpu.memory_space<vmem>>, vector<8x512xf32>
      tpu.vector_store %arg12[%321, %c0_138], %320 {strides = array<i32>} : memref<64x512xf32, #tpu.memory_space<vmem>>, vector<8x512xf32>,
    } else {
    }
    %c4_i32 = arith.constant 4 : i32
    %c8_i32_63 = arith.constant 8 : i32
    %151 = arith.muli %c4_i32, %c8_i32_63 : i32
    %152 = tpu.assume_multiple %151, 8 : i32
    %153 = arith.index_cast %152 : i32 to index
    %c0_64 = arith.constant 0 : index
    %154 = vector.load %arg12[%153, %c0_64] : memref<64x512xf32, #tpu.memory_space<vmem>>, vector<8x512xf32>
    %c0_65 = arith.constant 0 : index
    %c0_66 = arith.constant 0 : index
    %155 = vector.load %arg6[%c0_65, %c0_66] : memref<128x512xf32, #tpu.memory_space<vmem>>, vector<128x512xf32>
    %cst_67 = arith.constant dense<0.000000e+00> : vector<8x512xf32>
    %156 = tpu.matmul %140, %155, %cst_67 {dimension_numbers = #tpu.dot_dimension_numbers<[1], [0], [0], [1], [0, 0, 1, 1], [], []>} : vector<8x128xf32>, vector<128x512xf32>, vector<8x512xf32> -> vector<8x512xf32>
    %157 = arith.addf %154, %156 : vector<8x512xf32>
    %c0_68 = arith.constant 0 : index
    %c0_69 = arith.constant 0 : index
    %158 = vector.load %arg7[%c0_68, %c0_69] : memref<1x512xf32, #tpu.memory_space<vmem>>, vector<1x512xf32>
    %159 = vector.broadcast %158 : vector<1x512xf32> to vector<8x512xf32>
    %160 = arith.addf %157, %159 : vector<8x512xf32>
    %161 = vector.extract_strided_slice %160 {offsets = [0, 0], sizes = [8, 384], strides = [1, 1]} : vector<8x512xf32> to vector<8x384xf32>
    %162 = arith.negf %161 : vector<8x384xf32>
    %163 = math.exp %162 : vector<8x384xf32>
    %cst_70 = arith.constant 1.000000e+00 : f32
    %164 = vector.broadcast %cst_70 : f32 to vector<8x384xf32>
    %165 = arith.addf %164, %163 : vector<8x384xf32>
    %166 = arith.divf %164, %165 : vector<8x384xf32>
    %167 = vector.extract_strided_slice %160 {offsets = [0, 384], sizes = [8, 128], strides = [1, 1]} : vector<8x512xf32> to vector<8x128xf32>
    %168 = math.tanh %167 : vector<8x128xf32>
    %169 = vector.extract_strided_slice %166 {offsets = [0, 128], sizes = [8, 128], strides = [1, 1]} : vector<8x384xf32> to vector<8x128xf32>
    %170 = arith.mulf %169, %137 : vector<8x128xf32>
    %171 = vector.extract_strided_slice %166 {offsets = [0, 0], sizes = [8, 128], strides = [1, 1]} : vector<8x384xf32> to vector<8x128xf32>
    %172 = arith.mulf %171, %168 : vector<8x128xf32>
    %173 = arith.addf %170, %172 : vector<8x128xf32>
    %174 = vector.extract_strided_slice %166 {offsets = [0, 256], sizes = [8, 128], strides = [1, 1]} : vector<8x384xf32> to vector<8x128xf32>
    %175 = math.tanh %173 : vector<8x128xf32>
    %176 = arith.mulf %174, %175 : vector<8x128xf32>
    %177 = arith.index_cast %152 : i32 to index
    %c0_71 = arith.constant 0 : index
    %178 = vector.load %arg13[%177, %c0_71] : memref<64x128xf32, #tpu.memory_space<vmem>>, vector<8x128xf32>
    tpu.vector_store %arg13[%177, %c0_71], %176 {strides = array<i32>} : memref<64x128xf32, #tpu.memory_space<vmem>>, vector<8x128xf32>,
    %c1_i32_72 = arith.constant 1 : i32
    %179 = arith.addi %c4_i32, %c1_i32_72 : i32
    %c8_i32_73 = arith.constant 8 : i32
    %180 = arith.cmpi slt, %179, %c8_i32_73 : i32
    %181 = arith.index_cast %c4_i32 : i32 to index
    %182 = memref.load %arg1[%181] : memref<8xi32, #tpu.memory_space<smem>>
    %c0_i32_74 = arith.constant 0 : i32
    %183 = arith.cmpi eq, %182, %c0_i32_74 : i32
    %184 = arith.andi %180, %183 : i1
    %185 = arith.extui %184 : i1 to i32
    %c0_i32_75 = arith.constant 0 : i32
    %186 = arith.cmpi ne, %185, %c0_i32_75 : i32
    scf.if %186 {
      %c0_125 = arith.constant 0 : index
      %c0_126 = arith.constant 0 : index
      %302 = vector.load %arg8[%c0_125, %c0_126] : memref<128x256xf32, #tpu.memory_space<vmem>>, vector<128x256xf32>
      %cst_127 = arith.constant dense<0.000000e+00> : vector<8x256xf32>
      %303 = tpu.matmul %176, %302, %cst_127 {dimension_numbers = #tpu.dot_dimension_numbers<[1], [0], [0], [1], [0, 0, 1, 1], [], []>} : vector<8x128xf32>, vector<128x256xf32>, vector<8x256xf32> -> vector<8x256xf32>
      %c0_128 = arith.constant 0 : index
      %c0_129 = arith.constant 0 : index
      %304 = vector.load %arg9[%c0_128, %c0_129] : memref<1x256xf32, #tpu.memory_space<vmem>>, vector<1x256xf32>
      %305 = vector.broadcast %304 : vector<1x256xf32> to vector<8x256xf32>
      %306 = arith.addf %303, %305 : vector<8x256xf32>
      %307 = tpu.reduce_index %306 {axis = 1 : i32, kind = #tpu.reduction_kind<arg_max>} : vector<8x256xf32> -> vector<8xi32>
      %308 = vector.shape_cast %307 : vector<8xi32> to vector<8x1xi32>
      %309 = tpu.iota {dimensions = array<i32: 1>} : vector<8x256xi32>
      %310 = vector.broadcast %308 : vector<8x1xi32> to vector<8x256xi32>
      %311 = arith.cmpi eq, %309, %310 : vector<8x256xi32>
      %312 = arith.extui %311 : vector<8x256xi1> to vector<8x256xi32>
      %313 = arith.sitofp %312 : vector<8x256xi32> to vector<8x256xf32>
      %c0_130 = arith.constant 0 : index
      %c0_131 = arith.constant 0 : index
      %314 = vector.load %arg4[%c0_130, %c0_131] : memref<256x32xf32, #tpu.memory_space<vmem>>, vector<256x32xf32>
      %cst_132 = arith.constant dense<0.000000e+00> : vector<8x32xf32>
      %315 = tpu.matmul %313, %314, %cst_132 {dimension_numbers = #tpu.dot_dimension_numbers<[1], [0], [0], [1], [0, 0, 1, 1], [], []>} : vector<8x256xf32>, vector<256x32xf32>, vector<8x32xf32> -> vector<8x32xf32>
      %c1_i32_133 = arith.constant 1 : i32
      %316 = arith.addi %c4_i32, %c1_i32_133 : i32
      %c8_i32_134 = arith.constant 8 : i32
      %317 = arith.muli %316, %c8_i32_134 : i32
      %318 = tpu.assume_multiple %317, 8 : i32
      %c0_135 = arith.constant 0 : index
      %c0_136 = arith.constant 0 : index
      %319 = vector.load %arg5[%c0_135, %c0_136] : memref<32x512xf32, #tpu.memory_space<vmem>>, vector<32x512xf32>
      %cst_137 = arith.constant dense<0.000000e+00> : vector<8x512xf32>
      %320 = tpu.matmul %315, %319, %cst_137 {dimension_numbers = #tpu.dot_dimension_numbers<[1], [0], [0], [1], [0, 0, 1, 1], [], []>} : vector<8x32xf32>, vector<32x512xf32>, vector<8x512xf32> -> vector<8x512xf32>
      %321 = arith.index_cast %318 : i32 to index
      %c0_138 = arith.constant 0 : index
      %322 = vector.load %arg12[%321, %c0_138] : memref<64x512xf32, #tpu.memory_space<vmem>>, vector<8x512xf32>
      tpu.vector_store %arg12[%321, %c0_138], %320 {strides = array<i32>} : memref<64x512xf32, #tpu.memory_space<vmem>>, vector<8x512xf32>,
    } else {
    }
    %c5_i32 = arith.constant 5 : i32
    %c8_i32_76 = arith.constant 8 : i32
    %187 = arith.muli %c5_i32, %c8_i32_76 : i32
    %188 = tpu.assume_multiple %187, 8 : i32
    %189 = arith.index_cast %188 : i32 to index
    %c0_77 = arith.constant 0 : index
    %190 = vector.load %arg12[%189, %c0_77] : memref<64x512xf32, #tpu.memory_space<vmem>>, vector<8x512xf32>
    %c0_78 = arith.constant 0 : index
    %c0_79 = arith.constant 0 : index
    %191 = vector.load %arg6[%c0_78, %c0_79] : memref<128x512xf32, #tpu.memory_space<vmem>>, vector<128x512xf32>
    %cst_80 = arith.constant dense<0.000000e+00> : vector<8x512xf32>
    %192 = tpu.matmul %176, %191, %cst_80 {dimension_numbers = #tpu.dot_dimension_numbers<[1], [0], [0], [1], [0, 0, 1, 1], [], []>} : vector<8x128xf32>, vector<128x512xf32>, vector<8x512xf32> -> vector<8x512xf32>
    %193 = arith.addf %190, %192 : vector<8x512xf32>
    %c0_81 = arith.constant 0 : index
    %c0_82 = arith.constant 0 : index
    %194 = vector.load %arg7[%c0_81, %c0_82] : memref<1x512xf32, #tpu.memory_space<vmem>>, vector<1x512xf32>
    %195 = vector.broadcast %194 : vector<1x512xf32> to vector<8x512xf32>
    %196 = arith.addf %193, %195 : vector<8x512xf32>
    %197 = vector.extract_strided_slice %196 {offsets = [0, 0], sizes = [8, 384], strides = [1, 1]} : vector<8x512xf32> to vector<8x384xf32>
    %198 = arith.negf %197 : vector<8x384xf32>
    %199 = math.exp %198 : vector<8x384xf32>
    %cst_83 = arith.constant 1.000000e+00 : f32
    %200 = vector.broadcast %cst_83 : f32 to vector<8x384xf32>
    %201 = arith.addf %200, %199 : vector<8x384xf32>
    %202 = arith.divf %200, %201 : vector<8x384xf32>
    %203 = vector.extract_strided_slice %196 {offsets = [0, 384], sizes = [8, 128], strides = [1, 1]} : vector<8x512xf32> to vector<8x128xf32>
    %204 = math.tanh %203 : vector<8x128xf32>
    %205 = vector.extract_strided_slice %202 {offsets = [0, 128], sizes = [8, 128], strides = [1, 1]} : vector<8x384xf32> to vector<8x128xf32>
    %206 = arith.mulf %205, %173 : vector<8x128xf32>
    %207 = vector.extract_strided_slice %202 {offsets = [0, 0], sizes = [8, 128], strides = [1, 1]} : vector<8x384xf32> to vector<8x128xf32>
    %208 = arith.mulf %207, %204 : vector<8x128xf32>
    %209 = arith.addf %206, %208 : vector<8x128xf32>
    %210 = vector.extract_strided_slice %202 {offsets = [0, 256], sizes = [8, 128], strides = [1, 1]} : vector<8x384xf32> to vector<8x128xf32>
    %211 = math.tanh %209 : vector<8x128xf32>
    %212 = arith.mulf %210, %211 : vector<8x128xf32>
    %213 = arith.index_cast %188 : i32 to index
    %c0_84 = arith.constant 0 : index
    %214 = vector.load %arg13[%213, %c0_84] : memref<64x128xf32, #tpu.memory_space<vmem>>, vector<8x128xf32>
    tpu.vector_store %arg13[%213, %c0_84], %212 {strides = array<i32>} : memref<64x128xf32, #tpu.memory_space<vmem>>, vector<8x128xf32>,
    %c1_i32_85 = arith.constant 1 : i32
    %215 = arith.addi %c5_i32, %c1_i32_85 : i32
    %c8_i32_86 = arith.constant 8 : i32
    %216 = arith.cmpi slt, %215, %c8_i32_86 : i32
    %217 = arith.index_cast %c5_i32 : i32 to index
    %218 = memref.load %arg1[%217] : memref<8xi32, #tpu.memory_space<smem>>
    %c0_i32_87 = arith.constant 0 : i32
    %219 = arith.cmpi eq, %218, %c0_i32_87 : i32
    %220 = arith.andi %216, %219 : i1
    %221 = arith.extui %220 : i1 to i32
    %c0_i32_88 = arith.constant 0 : i32
    %222 = arith.cmpi ne, %221, %c0_i32_88 : i32
    scf.if %222 {
      %c0_125 = arith.constant 0 : index
      %c0_126 = arith.constant 0 : index
      %302 = vector.load %arg8[%c0_125, %c0_126] : memref<128x256xf32, #tpu.memory_space<vmem>>, vector<128x256xf32>
      %cst_127 = arith.constant dense<0.000000e+00> : vector<8x256xf32>
      %303 = tpu.matmul %212, %302, %cst_127 {dimension_numbers = #tpu.dot_dimension_numbers<[1], [0], [0], [1], [0, 0, 1, 1], [], []>} : vector<8x128xf32>, vector<128x256xf32>, vector<8x256xf32> -> vector<8x256xf32>
      %c0_128 = arith.constant 0 : index
      %c0_129 = arith.constant 0 : index
      %304 = vector.load %arg9[%c0_128, %c0_129] : memref<1x256xf32, #tpu.memory_space<vmem>>, vector<1x256xf32>
      %305 = vector.broadcast %304 : vector<1x256xf32> to vector<8x256xf32>
      %306 = arith.addf %303, %305 : vector<8x256xf32>
      %307 = tpu.reduce_index %306 {axis = 1 : i32, kind = #tpu.reduction_kind<arg_max>} : vector<8x256xf32> -> vector<8xi32>
      %308 = vector.shape_cast %307 : vector<8xi32> to vector<8x1xi32>
      %309 = tpu.iota {dimensions = array<i32: 1>} : vector<8x256xi32>
      %310 = vector.broadcast %308 : vector<8x1xi32> to vector<8x256xi32>
      %311 = arith.cmpi eq, %309, %310 : vector<8x256xi32>
      %312 = arith.extui %311 : vector<8x256xi1> to vector<8x256xi32>
      %313 = arith.sitofp %312 : vector<8x256xi32> to vector<8x256xf32>
      %c0_130 = arith.constant 0 : index
      %c0_131 = arith.constant 0 : index
      %314 = vector.load %arg4[%c0_130, %c0_131] : memref<256x32xf32, #tpu.memory_space<vmem>>, vector<256x32xf32>
      %cst_132 = arith.constant dense<0.000000e+00> : vector<8x32xf32>
      %315 = tpu.matmul %313, %314, %cst_132 {dimension_numbers = #tpu.dot_dimension_numbers<[1], [0], [0], [1], [0, 0, 1, 1], [], []>} : vector<8x256xf32>, vector<256x32xf32>, vector<8x32xf32> -> vector<8x32xf32>
      %c1_i32_133 = arith.constant 1 : i32
      %316 = arith.addi %c5_i32, %c1_i32_133 : i32
      %c8_i32_134 = arith.constant 8 : i32
      %317 = arith.muli %316, %c8_i32_134 : i32
      %318 = tpu.assume_multiple %317, 8 : i32
      %c0_135 = arith.constant 0 : index
      %c0_136 = arith.constant 0 : index
      %319 = vector.load %arg5[%c0_135, %c0_136] : memref<32x512xf32, #tpu.memory_space<vmem>>, vector<32x512xf32>
      %cst_137 = arith.constant dense<0.000000e+00> : vector<8x512xf32>
      %320 = tpu.matmul %315, %319, %cst_137 {dimension_numbers = #tpu.dot_dimension_numbers<[1], [0], [0], [1], [0, 0, 1, 1], [], []>} : vector<8x32xf32>, vector<32x512xf32>, vector<8x512xf32> -> vector<8x512xf32>
      %321 = arith.index_cast %318 : i32 to index
      %c0_138 = arith.constant 0 : index
      %322 = vector.load %arg12[%321, %c0_138] : memref<64x512xf32, #tpu.memory_space<vmem>>, vector<8x512xf32>
      tpu.vector_store %arg12[%321, %c0_138], %320 {strides = array<i32>} : memref<64x512xf32, #tpu.memory_space<vmem>>, vector<8x512xf32>,
    } else {
    }
    %c6_i32 = arith.constant 6 : i32
    %c8_i32_89 = arith.constant 8 : i32
    %223 = arith.muli %c6_i32, %c8_i32_89 : i32
    %224 = tpu.assume_multiple %223, 8 : i32
    %225 = arith.index_cast %224 : i32 to index
    %c0_90 = arith.constant 0 : index
    %226 = vector.load %arg12[%225, %c0_90] : memref<64x512xf32, #tpu.memory_space<vmem>>, vector<8x512xf32>
    %c0_91 = arith.constant 0 : index
    %c0_92 = arith.constant 0 : index
    %227 = vector.load %arg6[%c0_91, %c0_92] : memref<128x512xf32, #tpu.memory_space<vmem>>, vector<128x512xf32>
    %cst_93 = arith.constant dense<0.000000e+00> : vector<8x512xf32>
    %228 = tpu.matmul %212, %227, %cst_93 {dimension_numbers = #tpu.dot_dimension_numbers<[1], [0], [0], [1], [0, 0, 1, 1], [], []>} : vector<8x128xf32>, vector<128x512xf32>, vector<8x512xf32> -> vector<8x512xf32>
    %229 = arith.addf %226, %228 : vector<8x512xf32>
    %c0_94 = arith.constant 0 : index
    %c0_95 = arith.constant 0 : index
    %230 = vector.load %arg7[%c0_94, %c0_95] : memref<1x512xf32, #tpu.memory_space<vmem>>, vector<1x512xf32>
    %231 = vector.broadcast %230 : vector<1x512xf32> to vector<8x512xf32>
    %232 = arith.addf %229, %231 : vector<8x512xf32>
    %233 = vector.extract_strided_slice %232 {offsets = [0, 0], sizes = [8, 384], strides = [1, 1]} : vector<8x512xf32> to vector<8x384xf32>
    %234 = arith.negf %233 : vector<8x384xf32>
    %235 = math.exp %234 : vector<8x384xf32>
    %cst_96 = arith.constant 1.000000e+00 : f32
    %236 = vector.broadcast %cst_96 : f32 to vector<8x384xf32>
    %237 = arith.addf %236, %235 : vector<8x384xf32>
    %238 = arith.divf %236, %237 : vector<8x384xf32>
    %239 = vector.extract_strided_slice %232 {offsets = [0, 384], sizes = [8, 128], strides = [1, 1]} : vector<8x512xf32> to vector<8x128xf32>
    %240 = math.tanh %239 : vector<8x128xf32>
    %241 = vector.extract_strided_slice %238 {offsets = [0, 128], sizes = [8, 128], strides = [1, 1]} : vector<8x384xf32> to vector<8x128xf32>
    %242 = arith.mulf %241, %209 : vector<8x128xf32>
    %243 = vector.extract_strided_slice %238 {offsets = [0, 0], sizes = [8, 128], strides = [1, 1]} : vector<8x384xf32> to vector<8x128xf32>
    %244 = arith.mulf %243, %240 : vector<8x128xf32>
    %245 = arith.addf %242, %244 : vector<8x128xf32>
    %246 = vector.extract_strided_slice %238 {offsets = [0, 256], sizes = [8, 128], strides = [1, 1]} : vector<8x384xf32> to vector<8x128xf32>
    %247 = math.tanh %245 : vector<8x128xf32>
    %248 = arith.mulf %246, %247 : vector<8x128xf32>
    %249 = arith.index_cast %224 : i32 to index
    %c0_97 = arith.constant 0 : index
    %250 = vector.load %arg13[%249, %c0_97] : memref<64x128xf32, #tpu.memory_space<vmem>>, vector<8x128xf32>
    tpu.vector_store %arg13[%249, %c0_97], %248 {strides = array<i32>} : memref<64x128xf32, #tpu.memory_space<vmem>>, vector<8x128xf32>,
    %c1_i32_98 = arith.constant 1 : i32
    %251 = arith.addi %c6_i32, %c1_i32_98 : i32
    %c8_i32_99 = arith.constant 8 : i32
    %252 = arith.cmpi slt, %251, %c8_i32_99 : i32
    %253 = arith.index_cast %c6_i32 : i32 to index
    %254 = memref.load %arg1[%253] : memref<8xi32, #tpu.memory_space<smem>>
    %c0_i32_100 = arith.constant 0 : i32
    %255 = arith.cmpi eq, %254, %c0_i32_100 : i32
    %256 = arith.andi %252, %255 : i1
    %257 = arith.extui %256 : i1 to i32
    %c0_i32_101 = arith.constant 0 : i32
    %258 = arith.cmpi ne, %257, %c0_i32_101 : i32
    scf.if %258 {
      %c0_125 = arith.constant 0 : index
      %c0_126 = arith.constant 0 : index
      %302 = vector.load %arg8[%c0_125, %c0_126] : memref<128x256xf32, #tpu.memory_space<vmem>>, vector<128x256xf32>
      %cst_127 = arith.constant dense<0.000000e+00> : vector<8x256xf32>
      %303 = tpu.matmul %248, %302, %cst_127 {dimension_numbers = #tpu.dot_dimension_numbers<[1], [0], [0], [1], [0, 0, 1, 1], [], []>} : vector<8x128xf32>, vector<128x256xf32>, vector<8x256xf32> -> vector<8x256xf32>
      %c0_128 = arith.constant 0 : index
      %c0_129 = arith.constant 0 : index
      %304 = vector.load %arg9[%c0_128, %c0_129] : memref<1x256xf32, #tpu.memory_space<vmem>>, vector<1x256xf32>
      %305 = vector.broadcast %304 : vector<1x256xf32> to vector<8x256xf32>
      %306 = arith.addf %303, %305 : vector<8x256xf32>
      %307 = tpu.reduce_index %306 {axis = 1 : i32, kind = #tpu.reduction_kind<arg_max>} : vector<8x256xf32> -> vector<8xi32>
      %308 = vector.shape_cast %307 : vector<8xi32> to vector<8x1xi32>
      %309 = tpu.iota {dimensions = array<i32: 1>} : vector<8x256xi32>
      %310 = vector.broadcast %308 : vector<8x1xi32> to vector<8x256xi32>
      %311 = arith.cmpi eq, %309, %310 : vector<8x256xi32>
      %312 = arith.extui %311 : vector<8x256xi1> to vector<8x256xi32>
      %313 = arith.sitofp %312 : vector<8x256xi32> to vector<8x256xf32>
      %c0_130 = arith.constant 0 : index
      %c0_131 = arith.constant 0 : index
      %314 = vector.load %arg4[%c0_130, %c0_131] : memref<256x32xf32, #tpu.memory_space<vmem>>, vector<256x32xf32>
      %cst_132 = arith.constant dense<0.000000e+00> : vector<8x32xf32>
      %315 = tpu.matmul %313, %314, %cst_132 {dimension_numbers = #tpu.dot_dimension_numbers<[1], [0], [0], [1], [0, 0, 1, 1], [], []>} : vector<8x256xf32>, vector<256x32xf32>, vector<8x32xf32> -> vector<8x32xf32>
      %c1_i32_133 = arith.constant 1 : i32
      %316 = arith.addi %c6_i32, %c1_i32_133 : i32
      %c8_i32_134 = arith.constant 8 : i32
      %317 = arith.muli %316, %c8_i32_134 : i32
      %318 = tpu.assume_multiple %317, 8 : i32
      %c0_135 = arith.constant 0 : index
      %c0_136 = arith.constant 0 : index
      %319 = vector.load %arg5[%c0_135, %c0_136] : memref<32x512xf32, #tpu.memory_space<vmem>>, vector<32x512xf32>
      %cst_137 = arith.constant dense<0.000000e+00> : vector<8x512xf32>
      %320 = tpu.matmul %315, %319, %cst_137 {dimension_numbers = #tpu.dot_dimension_numbers<[1], [0], [0], [1], [0, 0, 1, 1], [], []>} : vector<8x32xf32>, vector<32x512xf32>, vector<8x512xf32> -> vector<8x512xf32>
      %321 = arith.index_cast %318 : i32 to index
      %c0_138 = arith.constant 0 : index
      %322 = vector.load %arg12[%321, %c0_138] : memref<64x512xf32, #tpu.memory_space<vmem>>, vector<8x512xf32>
      tpu.vector_store %arg12[%321, %c0_138], %320 {strides = array<i32>} : memref<64x512xf32, #tpu.memory_space<vmem>>, vector<8x512xf32>,
    } else {
    }
    %c7_i32 = arith.constant 7 : i32
    %c8_i32_102 = arith.constant 8 : i32
    %259 = arith.muli %c7_i32, %c8_i32_102 : i32
    %260 = tpu.assume_multiple %259, 8 : i32
    %261 = arith.index_cast %260 : i32 to index
    %c0_103 = arith.constant 0 : index
    %262 = vector.load %arg12[%261, %c0_103] : memref<64x512xf32, #tpu.memory_space<vmem>>, vector<8x512xf32>
    %c0_104 = arith.constant 0 : index
    %c0_105 = arith.constant 0 : index
    %263 = vector.load %arg6[%c0_104, %c0_105] : memref<128x512xf32, #tpu.memory_space<vmem>>, vector<128x512xf32>
    %cst_106 = arith.constant dense<0.000000e+00> : vector<8x512xf32>
    %264 = tpu.matmul %248, %263, %cst_106 {dimension_numbers = #tpu.dot_dimension_numbers<[1], [0], [0], [1], [0, 0, 1, 1], [], []>} : vector<8x128xf32>, vector<128x512xf32>, vector<8x512xf32> -> vector<8x512xf32>
    %265 = arith.addf %262, %264 : vector<8x512xf32>
    %c0_107 = arith.constant 0 : index
    %c0_108 = arith.constant 0 : index
    %266 = vector.load %arg7[%c0_107, %c0_108] : memref<1x512xf32, #tpu.memory_space<vmem>>, vector<1x512xf32>
    %267 = vector.broadcast %266 : vector<1x512xf32> to vector<8x512xf32>
    %268 = arith.addf %265, %267 : vector<8x512xf32>
    %269 = vector.extract_strided_slice %268 {offsets = [0, 0], sizes = [8, 384], strides = [1, 1]} : vector<8x512xf32> to vector<8x384xf32>
    %270 = arith.negf %269 : vector<8x384xf32>
    %271 = math.exp %270 : vector<8x384xf32>
    %cst_109 = arith.constant 1.000000e+00 : f32
    %272 = vector.broadcast %cst_109 : f32 to vector<8x384xf32>
    %273 = arith.addf %272, %271 : vector<8x384xf32>
    %274 = arith.divf %272, %273 : vector<8x384xf32>
    %275 = vector.extract_strided_slice %268 {offsets = [0, 384], sizes = [8, 128], strides = [1, 1]} : vector<8x512xf32> to vector<8x128xf32>
    %276 = math.tanh %275 : vector<8x128xf32>
    %277 = vector.extract_strided_slice %274 {offsets = [0, 128], sizes = [8, 128], strides = [1, 1]} : vector<8x384xf32> to vector<8x128xf32>
    %278 = arith.mulf %277, %245 : vector<8x128xf32>
    %279 = vector.extract_strided_slice %274 {offsets = [0, 0], sizes = [8, 128], strides = [1, 1]} : vector<8x384xf32> to vector<8x128xf32>
    %280 = arith.mulf %279, %276 : vector<8x128xf32>
    %281 = arith.addf %278, %280 : vector<8x128xf32>
    %282 = vector.extract_strided_slice %274 {offsets = [0, 256], sizes = [8, 128], strides = [1, 1]} : vector<8x384xf32> to vector<8x128xf32>
    %283 = math.tanh %281 : vector<8x128xf32>
    %284 = arith.mulf %282, %283 : vector<8x128xf32>
    %285 = arith.index_cast %260 : i32 to index
    %c0_110 = arith.constant 0 : index
    %286 = vector.load %arg13[%285, %c0_110] : memref<64x128xf32, #tpu.memory_space<vmem>>, vector<8x128xf32>
    tpu.vector_store %arg13[%285, %c0_110], %284 {strides = array<i32>} : memref<64x128xf32, #tpu.memory_space<vmem>>, vector<8x128xf32>,
    %c1_i32_111 = arith.constant 1 : i32
    %287 = arith.addi %c7_i32, %c1_i32_111 : i32
    %c8_i32_112 = arith.constant 8 : i32
    %288 = arith.cmpi slt, %287, %c8_i32_112 : i32
    %289 = arith.index_cast %c7_i32 : i32 to index
    %290 = memref.load %arg1[%289] : memref<8xi32, #tpu.memory_space<smem>>
    %c0_i32_113 = arith.constant 0 : i32
    %291 = arith.cmpi eq, %290, %c0_i32_113 : i32
    %292 = arith.andi %288, %291 : i1
    %293 = arith.extui %292 : i1 to i32
    %c0_i32_114 = arith.constant 0 : i32
    %294 = arith.cmpi ne, %293, %c0_i32_114 : i32
    scf.if %294 {
      %c0_125 = arith.constant 0 : index
      %c0_126 = arith.constant 0 : index
      %302 = vector.load %arg8[%c0_125, %c0_126] : memref<128x256xf32, #tpu.memory_space<vmem>>, vector<128x256xf32>
      %cst_127 = arith.constant dense<0.000000e+00> : vector<8x256xf32>
      %303 = tpu.matmul %284, %302, %cst_127 {dimension_numbers = #tpu.dot_dimension_numbers<[1], [0], [0], [1], [0, 0, 1, 1], [], []>} : vector<8x128xf32>, vector<128x256xf32>, vector<8x256xf32> -> vector<8x256xf32>
      %c0_128 = arith.constant 0 : index
      %c0_129 = arith.constant 0 : index
      %304 = vector.load %arg9[%c0_128, %c0_129] : memref<1x256xf32, #tpu.memory_space<vmem>>, vector<1x256xf32>
      %305 = vector.broadcast %304 : vector<1x256xf32> to vector<8x256xf32>
      %306 = arith.addf %303, %305 : vector<8x256xf32>
      %307 = tpu.reduce_index %306 {axis = 1 : i32, kind = #tpu.reduction_kind<arg_max>} : vector<8x256xf32> -> vector<8xi32>
      %308 = vector.shape_cast %307 : vector<8xi32> to vector<8x1xi32>
      %309 = tpu.iota {dimensions = array<i32: 1>} : vector<8x256xi32>
      %310 = vector.broadcast %308 : vector<8x1xi32> to vector<8x256xi32>
      %311 = arith.cmpi eq, %309, %310 : vector<8x256xi32>
      %312 = arith.extui %311 : vector<8x256xi1> to vector<8x256xi32>
      %313 = arith.sitofp %312 : vector<8x256xi32> to vector<8x256xf32>
      %c0_130 = arith.constant 0 : index
      %c0_131 = arith.constant 0 : index
      %314 = vector.load %arg4[%c0_130, %c0_131] : memref<256x32xf32, #tpu.memory_space<vmem>>, vector<256x32xf32>
      %cst_132 = arith.constant dense<0.000000e+00> : vector<8x32xf32>
      %315 = tpu.matmul %313, %314, %cst_132 {dimension_numbers = #tpu.dot_dimension_numbers<[1], [0], [0], [1], [0, 0, 1, 1], [], []>} : vector<8x256xf32>, vector<256x32xf32>, vector<8x32xf32> -> vector<8x32xf32>
      %c1_i32_133 = arith.constant 1 : i32
      %316 = arith.addi %c7_i32, %c1_i32_133 : i32
      %c8_i32_134 = arith.constant 8 : i32
      %317 = arith.muli %316, %c8_i32_134 : i32
      %318 = tpu.assume_multiple %317, 8 : i32
      %c0_135 = arith.constant 0 : index
      %c0_136 = arith.constant 0 : index
      %319 = vector.load %arg5[%c0_135, %c0_136] : memref<32x512xf32, #tpu.memory_space<vmem>>, vector<32x512xf32>
      %cst_137 = arith.constant dense<0.000000e+00> : vector<8x512xf32>
      %320 = tpu.matmul %315, %319, %cst_137 {dimension_numbers = #tpu.dot_dimension_numbers<[1], [0], [0], [1], [0, 0, 1, 1], [], []>} : vector<8x32xf32>, vector<32x512xf32>, vector<8x512xf32> -> vector<8x512xf32>
      %321 = arith.index_cast %318 : i32 to index
      %c0_138 = arith.constant 0 : index
      %322 = vector.load %arg12[%321, %c0_138] : memref<64x512xf32, #tpu.memory_space<vmem>>, vector<8x512xf32>
      tpu.vector_store %arg12[%321, %c0_138], %320 {strides = array<i32>} : memref<64x512xf32, #tpu.memory_space<vmem>>, vector<8x512xf32>,
    } else {
    }
    %c8_i32_115 = arith.constant 8 : i32
    %c0_116 = arith.constant 0 : index
    %c0_117 = arith.constant 0 : index
    %295 = vector.load %arg13[%c0_116, %c0_117] : memref<64x128xf32, #tpu.memory_space<vmem>>, vector<64x128xf32>
    %c0_118 = arith.constant 0 : index
    %c0_119 = arith.constant 0 : index
    %296 = vector.load %arg8[%c0_118, %c0_119] : memref<128x256xf32, #tpu.memory_space<vmem>>, vector<128x256xf32>
    %cst_120 = arith.constant dense<0.000000e+00> : vector<64x256xf32>
    %297 = tpu.matmul %295, %296, %cst_120 {dimension_numbers = #tpu.dot_dimension_numbers<[1], [0], [0], [1], [0, 0, 1, 1], [], []>} : vector<64x128xf32>, vector<128x256xf32>, vector<64x256xf32> -> vector<64x256xf32>
    %c0_121 = arith.constant 0 : index
    %c0_122 = arith.constant 0 : index
    %298 = vector.load %arg9[%c0_121, %c0_122] : memref<1x256xf32, #tpu.memory_space<vmem>>, vector<1x256xf32>
    %299 = vector.broadcast %298 : vector<1x256xf32> to vector<64x256xf32>
    %300 = arith.addf %297, %299 : vector<64x256xf32>
    %c0_123 = arith.constant 0 : index
    %c0_124 = arith.constant 0 : index
    %301 = vector.load %arg10[%c0_123, %c0_124] : memref<64x256xf32, #tpu.memory_space<vmem>>, vector<64x256xf32>
    tpu.vector_store %arg10[%c0_123, %c0_124], %300 {strides = array<i32>} : memref<64x256xf32, #tpu.memory_space<vmem>>, vector<64x256xf32>,
    return
  }
  func.func @transform_0(%arg0: i32, %arg1: memref<8xi32, #tpu.memory_space<smem>>, %arg2: memref<8x8xi32, #tpu.memory_space<smem>>) -> (i32, i32) {
    %c0_i32 = arith.constant 0 : i32
    %c0_i32_0 = arith.constant 0 : i32
    %c0_i32_1 = arith.constant 0 : i32
    return %c0_i32, %c0_i32_0 : i32, i32
  }
  func.func @transform_1(%arg0: i32, %arg1: memref<8xi32, #tpu.memory_space<smem>>, %arg2: memref<8x8xi32, #tpu.memory_space<smem>>) -> (i32, i32) {
    %c0_i32 = arith.constant 0 : i32
    %c0_i32_0 = arith.constant 0 : i32
    %c0_i32_1 = arith.constant 0 : i32
    return %c0_i32, %c0_i32_0 : i32, i32
  }
  func.func @transform_2(%arg0: i32, %arg1: memref<8xi32, #tpu.memory_space<smem>>, %arg2: memref<8x8xi32, #tpu.memory_space<smem>>) -> (i32, i32) {
    %c0_i32 = arith.constant 0 : i32
    %c0_i32_0 = arith.constant 0 : i32
    %c0_i32_1 = arith.constant 0 : i32
    return %c0_i32, %c0_i32_0 : i32, i32
  }
  func.func @transform_3(%arg0: i32, %arg1: memref<8xi32, #tpu.memory_space<smem>>, %arg2: memref<8x8xi32, #tpu.memory_space<smem>>) -> (i32, i32) {
    %c0_i32 = arith.constant 0 : i32
    %c0_i32_0 = arith.constant 0 : i32
    %c0_i32_1 = arith.constant 0 : i32
    return %c0_i32, %c0_i32_0 : i32, i32
  }
  func.func @transform_4(%arg0: i32, %arg1: memref<8xi32, #tpu.memory_space<smem>>, %arg2: memref<8x8xi32, #tpu.memory_space<smem>>) -> (i32, i32) {
    %c0_i32 = arith.constant 0 : i32
    %c0_i32_0 = arith.constant 0 : i32
    %c0_i32_1 = arith.constant 0 : i32
    return %c0_i32, %c0_i32_0 : i32, i32
  }
  func.func @transform_5(%arg0: i32, %arg1: memref<8xi32, #tpu.memory_space<smem>>, %arg2: memref<8x8xi32, #tpu.memory_space<smem>>) -> (i32, i32) {
    %c0_i32 = arith.constant 0 : i32
    %c0_i32_0 = arith.constant 0 : i32
    %c0_i32_1 = arith.constant 0 : i32
    return %c0_i32, %c0_i32_0 : i32, i32
  }
  func.func @transform_6(%arg0: i32, %arg1: memref<8xi32, #tpu.memory_space<smem>>, %arg2: memref<8x8xi32, #tpu.memory_space<smem>>) -> (i32, i32) {
    %c0_i32 = arith.constant 0 : i32
    %c0_i32_0 = arith.constant 0 : i32
    %c0_i32_1 = arith.constant 0 : i32
    return %c0_i32, %c0_i32_0 : i32, i32
  }
  func.func @transform_7(%arg0: i32, %arg1: memref<8xi32, #tpu.memory_space<smem>>, %arg2: memref<8x8xi32, #tpu.memory_space<smem>>) -> (i32, i32) {
    %c0_i32 = arith.constant 0 : i32
    %c0_i32_0 = arith.constant 0 : i32
    %c0_i32_1 = arith.constant 0 : i32
    return %c0_i32, %c0_i32_0 : i32, i32
  }
}

</mosaic_0001>

<llo_original>
// kernel: tpu_custom_call.1
$region0: #{tpu_custom_call.1}
  #allocation0 [shape = 'u32[]', space=smem, size = 0x4, offset = 0x4, fixed_abs, tag = 'smem constant byte address 0x4 - core index']
  #allocation1 [shape = 'u32[72,128]{1,0:T(1,128)}', space=vmem, size = 0x9000, scoped, tag = 'internal scratch']
  #allocation2 [shape = 'f32[64,32]{1,0:T(8,128)}', space=vmem, size = 0x8000, scoped, tag = 'scratch operand']
  #allocation3 [shape = 'f32[64,512]{1,0:T(8,128)}', space=vmem, size = 0x20000, scoped, tag = 'scratch operand']
  #allocation4 [shape = 'f32[64,128]{1,0:T(8,128)}', space=vmem, size = 0x8000, scoped, tag = 'scratch operand']
  #allocation5 [shape = 's32[1]{0}', space=sflag, size = 0x4, scoped, tag = 'scoped memory for tpu_custom_call.1']
  #allocation6 [shape = 'u8[512]{0}', space=smem, size = 0x200, scoped, tag = 'prefetched SMEM operand 0']
  #allocation7 [shape = 'u8[4096]{0}', space=smem, size = 0x1000, scoped, tag = 'prefetched SMEM operand 1']
  %s0 = inlined_call_operand.vmem [shape: s32[8], index: 0, kind: input, shape index: {}]
  %s1 = inlined_call_operand.vmem [shape: s32[8,8], index: 1, kind: input, shape index: {}]
  %s2 = inlined_call_operand.vmem [shape: f32[8,128], index: 2, kind: input, shape index: {}]
  %s3 = inlined_call_operand.vmem [shape: f32[256,32], index: 3, kind: input, shape index: {}]
  %s4 = inlined_call_operand.hbm [shape: f32[32,512], index: 4, kind: input, shape index: {}]
  %s5 = inlined_call_operand.hbm [shape: f32[128,512], index: 5, kind: input, shape index: {}]
  %s6 = inlined_call_operand.vmem [shape: f32[1,512], index: 6, kind: input, shape index: {}]
  %s7 = inlined_call_operand.vmem [shape: f32[128,256], index: 7, kind: input, shape index: {}]
  %s8 = inlined_call_operand.vmem [shape: f32[1,256], index: 8, kind: input, shape index: {}]
  %s9 = inlined_call_operand.hbm [shape: f32[64,256], index: 9, kind: output, shape index: {}]
  %s10 = sld [smem:[#allocation0]]
  $region81: #{tpu_custom_call.1} parent=0
    _
  %s12 = ssub.s32 1, %s10
  %s13 = scalar_select 0, %s12, %s10
  %s15 = sshll.u32 %s0, 4
  %s16 = int_to_ptr.vmem [resolvable:$true] %s15
  %18 = dma.vmem_to_smem %s16, 16, [#allocation6], [#allocation5]
  %s20 = sshll.u32 %s1, 4
  %s21 = int_to_ptr.vmem [resolvable:$true] %s20
  %23 = dma.vmem_to_smem %s21, 128, [#allocation7], [#allocation5]
  %25 = dma.done [#allocation5], 144
  %26 = sfence
  $region1: #{tpu_custom_call.1} parent=0
    #allocation8 [shape = 'u8[65536]{0}', space=vmem, size = 0x10000, scoped, tag = 'input window, operand 4, single buffered']
    #allocation9 [shape = 's32[1]{0}', space=sflag, size = 0x4, scoped, tag = 'scoped memory for tpu_custom_call.1']
    #allocation10 [shape = 's32[1]{0}', space=sflag, size = 0x4, scoped, tag = 'scoped memory for tpu_custom_call.1']
    #allocation11 [shape = 'u8[262144]{0}', space=vmem, size = 0x40000, scoped, tag = 'input window, operand 5, single buffered']
    #allocation12 [shape = 's32[1]{0}', space=sflag, size = 0x4, scoped, tag = 'scoped memory for tpu_custom_call.1']
    #allocation13 [shape = 'u8[65536]{0}', space=vmem, size = 0x10000, scoped, tag = 'output window, operand 0, single buffered']
    %27 = vsyncpa [#allocation9], 0
    %28 = vsyncpa [#allocation12], 0
    %29 = vsyncpa [#allocation10], 0
    // Predicated region
    $region2: #{tpu_custom_call.1} parent=1 // pred_check
      _
    $region3: #{tpu_custom_call.1} parent=1 // pred_check_branch
      %31 = sbr.rel (0) target = $region5
    $region4: #{tpu_custom_call.1} parent=1 // pred_region
      _
    $region5: #{tpu_custom_call.1} parent=1 // pred_fallthru
      _
    // Predicated region
    $region6: #{tpu_custom_call.1} parent=1 // pred_check
      _
    $region7: #{tpu_custom_call.1} parent=1 // pred_check_branch
      %33 = sbr.rel (0) target = $region9
    $region8: #{tpu_custom_call.1} parent=1 // pred_region
      _
    $region9: #{tpu_custom_call.1} parent=1 // pred_fallthru
      _
    // Predicated region
    $region10: #{tpu_custom_call.1} parent=1 // pred_check
      _
    $region11: #{tpu_custom_call.1} parent=1 // pred_check_branch
      %35 = sbr.rel (0) target = $region13
    $region12: #{tpu_custom_call.1} parent=1 // pred_region
      %37 = vsyncadd [#allocation9], 0
      %s38 = sshll.u32 %s4, 4
      %s39 = int_to_ptr.hbm [resolvable:$true] %s38
      %s40 = sshll.u32 [#allocation8], 4
      %s41 = int_to_ptr.vmem [resolvable:$true] %s40
      %46 = dma.hbm_to_vmem [thread:$0]  %s39, 2048, %s41, [#allocation9], 512, 512, 32
    $region13: #{tpu_custom_call.1} parent=1 // pred_fallthru
      _
    // Predicated region
    $region14: #{tpu_custom_call.1} parent=1 // pred_check
      _
    $region15: #{tpu_custom_call.1} parent=1 // pred_check_branch
      %48 = sbr.rel (0) target = $region17
    $region16: #{tpu_custom_call.1} parent=1 // pred_region
      %50 = vsyncadd [#allocation12], 0
      %s51 = sshll.u32 %s5, 4
      %s52 = int_to_ptr.hbm [resolvable:$true] %s51
      %s53 = sshll.u32 [#allocation11], 4
      %s54 = int_to_ptr.vmem [resolvable:$true] %s53
      %59 = dma.hbm_to_vmem [thread:$0]  %s52, 8192, %s54, [#allocation12], 512, 512, 32
    $region17: #{tpu_custom_call.1} parent=1 // pred_fallthru
      _
    // Predicated region
    $region18: #{tpu_custom_call.1} parent=1 // pred_check
      _
    $region19: #{tpu_custom_call.1} parent=1 // pred_check_branch
      %61 = sbr.rel (0) target = $region21
    $region20: #{tpu_custom_call.1} parent=1 // pred_region
      _
    $region21: #{tpu_custom_call.1} parent=1 // pred_fallthru
      _
    // Predicated region
    $region22: #{tpu_custom_call.1} parent=1 // pred_check
      _
    $region23: #{tpu_custom_call.1} parent=1 // pred_check_branch
      %63 = sbr.rel (0) target = $region25
    $region24: #{tpu_custom_call.1} parent=1 // pred_region
      _
    $region25: #{tpu_custom_call.1} parent=1 // pred_fallthru
      _
    // Predicated region
    $region26: #{tpu_custom_call.1} parent=1 // pred_check
      _
    $region27: #{tpu_custom_call.1} parent=1 // pred_check_branch
      %65 = sbr.rel (0) target = $region29
    $region28: #{tpu_custom_call.1} parent=1 // pred_region
      _
    $region29: #{tpu_custom_call.1} parent=1 // pred_fallthru
      _
    // Predicated region
    $region30: #{tpu_custom_call.1} parent=1 // pred_check
      _
    $region31: #{tpu_custom_call.1} parent=1 // pred_check_branch
      %67 = sbr.rel (0) target = $region33
    $region32: #{tpu_custom_call.1} parent=1 // pred_region
      %69 = dma.done [#allocation9], 2048
    $region33: #{tpu_custom_call.1} parent=1 // pred_fallthru
      _
    // Predicated region
    $region34: #{tpu_custom_call.1} parent=1 // pred_check
      _
    $region35: #{tpu_custom_call.1} parent=1 // pred_check_branch
      %71 = sbr.rel (0) target = $region37
    $region36: #{tpu_custom_call.1} parent=1 // pred_region
      %73 = dma.done [#allocation12], 8192
    $region37: #{tpu_custom_call.1} parent=1 // pred_fallthru
      _
    loop: start=0, step=1, limit=8
    $region38: #{tpu_custom_call.1} parent=1 // loop_pre_header
      _
    $region39: #{tpu_custom_call.1} parent=1 // loop_header
      %s75 = sphi 0, %s79
      %p76 = scmp.ge.s32.totalorder %s75, 8
    $region40: #{tpu_custom_call.1} parent=1 // loop_header_branch
      %78 = sbr.rel (%p76) target = $region44
    $region41: #{tpu_custom_call.1} parent=1 // loop_body
      %s80 = ssub.s32 %s75, 1
      %p81 = scmp.gt.s32.totalorder %s80, 0
      %s82 = scalar_select %p81, %s80, 0
      %s83 = smul.u32 %s75, 8
      %p84 = scmp.eq.s32.totalorder %s75, 0
      %s85 = smul.u32 %s82, 128
      %s86 = sld [smem:[#allocation7 + %s85]]
      %s87 = scalar_select %p84, 101, %s86
      %s88 = scalar_lea.vmem %s3, %s87
      %v89 = vld [vmem:[%s88] sm:$0x1]
      %s90 = scalar_lea.vmem [#allocation2], %s83
      %vm91 = vcmask 253952
      %92 = vst.msk [vmem:[%s90] sm:$0x1] %vm91, %v89
      %s93 = sadd.s32 %s85, 1
      %s94 = sld [smem:[#allocation7 + %s93]]
      %s95 = scalar_select %p84, 101, %s94
      %s96 = scalar_lea.vmem %s3, %s95
      %v97 = vld [vmem:[%s96] sm:$0x1]
      %s98 = sadd.s32 %s83, 1
      %s99 = scalar_lea.vmem [#allocation2], %s98
      %100 = vst.msk [vmem:[%s99] sm:$0x1] %vm91, %v97
      %s101 = sadd.s32 %s85, 2
      %s102 = sld [smem:[#allocation7 + %s101]]
      %s103 = scalar_select %p84, 101, %s102
      %s104 = scalar_lea.vmem %s3, %s103
      %v105 = vld [vmem:[%s104] sm:$0x1]
      %s106 = sadd.s32 %s83, 2
      %s107 = scalar_lea.vmem [#allocation2], %s106
      %108 = vst.msk [vmem:[%s107] sm:$0x1] %vm91, %v105
      %s109 = sadd.s32 %s85, 3
      %s110 = sld [smem:[#allocation7 + %s109]]
      %s111 = scalar_select %p84, 101, %s110
      %s112 = scalar_lea.vmem %s3, %s111
      %v113 = vld [vmem:[%s112] sm:$0x1]
      %s114 = sadd.s32 %s83, 3
      %s115 = scalar_lea.vmem [#allocation2], %s114
      %116 = vst.msk [vmem:[%s115] sm:$0x1] %vm91, %v113
      %s117 = sadd.s32 %s85, 4
      %s118 = sld [smem:[#allocation7 + %s117]]
      %s119 = scalar_select %p84, 101, %s118
      %s120 = scalar_lea.vmem %s3, %s119
      %v121 = vld [vmem:[%s120] sm:$0x1]
      %s122 = sadd.s32 %s83, 4
      %s123 = scalar_lea.vmem [#allocation2], %s122
      %124 = vst.msk [vmem:[%s123] sm:$0x1] %vm91, %v121
      %s125 = sadd.s32 %s85, 5
      %s126 = sld [smem:[#allocation7 + %s125]]
      %s127 = scalar_select %p84, 101, %s126
      %s128 = scalar_lea.vmem %s3, %s127
      %v129 = vld [vmem:[%s128] sm:$0x1]
      %s130 = sadd.s32 %s83, 5
      %s131 = scalar_lea.vmem [#allocation2], %s130
      %132 = vst.msk [vmem:[%s131] sm:$0x1] %vm91, %v129
      %s133 = sadd.s32 %s85, 6
      %s134 = sld [smem:[#allocation7 + %s133]]
      %s135 = scalar_select %p84, 101, %s134
      %s136 = scalar_lea.vmem %s3, %s135
      %v137 = vld [vmem:[%s136] sm:$0x1]
      %s138 = sadd.s32 %s83, 6
      %s139 = scalar_lea.vmem [#allocation2], %s138
      %140 = vst.msk [vmem:[%s139] sm:$0x1] %vm91, %v137
      %s141 = sadd.s32 %s85, 7
      %s142 = sld [smem:[#allocation7 + %s141]]
      %s143 = scalar_select %p84, 101, %s142
      %s144 = scalar_lea.vmem %s3, %s143
      %v145 = vld [vmem:[%s144] sm:$0x1]
      %s146 = sadd.s32 %s83, 7
      %s147 = scalar_lea.vmem [#allocation2], %s146
      %148 = vst.msk [vmem:[%s147] sm:$0x1] %vm91, %v145
    $region42: #{tpu_custom_call.1} parent=1 // loop_footer
      %s79 = sadd.s32 1, %s75
    $region43: #{tpu_custom_call.1} parent=1 // loop_footer_branch
      %74 = sbr.rel target = $region39
    $region44: #{tpu_custom_call.1} parent=1 // loop_exit
      _
    %v149 = vld [vmem:[#allocation2] sm:$0xff]
    %v150 = vld [vmem:[#allocation2 + $0x8] sm:$0xff]
    %v151 = vld [vmem:[#allocation2 + $0x10] sm:$0xff]
    %v152 = vld [vmem:[#allocation2 + $0x18] sm:$0xff]
    %v153 = vld [vmem:[#allocation2 + $0x20] sm:$0xff]
    %v154 = vld [vmem:[#allocation2 + $0x28] sm:$0xff]
    %v155 = vld [vmem:[#allocation2 + $0x30] sm:$0xff]
    %v156 = vld [vmem:[#allocation2 + $0x38] sm:$0xff]
    %v157 = vld [vmem:[#allocation8] sm:$0xff]
    %v158 = vld [vmem:[#allocation8 + $0x8] sm:$0xff]
    %v159 = vld [vmem:[#allocation8 + $0x10] sm:$0xff]
    %v160 = vld [vmem:[#allocation8 + $0x18] sm:$0xff]
    %v161 = vld [vmem:[#allocation8 + $0x20] sm:$0xff]
    %v162 = vld [vmem:[#allocation8 + $0x28] sm:$0xff]
    %v163 = vld [vmem:[#allocation8 + $0x30] sm:$0xff]
    %v164 = vld [vmem:[#allocation8 + $0x38] sm:$0xff]
    %v165 = vld [vmem:[#allocation8 + $0x40] sm:$0xff]
    %v166 = vld [vmem:[#allocation8 + $0x48] sm:$0xff]
    %v167 = vld [vmem:[#allocation8 + $0x50] sm:$0xff]
    %v168 = vld [vmem:[#allocation8 + $0x58] sm:$0xff]
    %v169 = vld [vmem:[#allocation8 + $0x60] sm:$0xff]
    %v170 = vld [vmem:[#allocation8 + $0x68] sm:$0xff]
    %v171 = vld [vmem:[#allocation8 + $0x70] sm:$0xff]
    %v172 = vld [vmem:[#allocation8 + $0x78] sm:$0xff]
    %vm173 = vcmask 261120
    %v175 = vsel %vm173, %v149, 0
    %v178 = vsel %vm173, %v150, 0
    %v181 = vsel %vm173, %v151, 0
    %v184 = vsel %vm173, %v152, 0
    %v187 = vsel %vm173, %v153, 0
    %v190 = vsel %vm173, %v154, 0
    %v193 = vsel %vm173, %v155, 0
    %v196 = vsel %vm173, %v156, 0
    %198 = vmatpush.msra.mxu0 0.0
    %199 = vmatpush.msra.mxu0 0.0
    %200 = vmatpush.msra.mxu0 0.0
    %201 = vmatpush.msra.mxu0 0.0
    %202 = vmatpush.msra.mxu0 0.0
    %203 = vmatpush.msra.mxu0 0.0
    %204 = vmatpush.msra.mxu0 0.0
    %205 = vmatpush.msra.mxu0 0.0
    %206 = vmatpush.msra.mxu0 0.0
    %207 = vmatpush.msra.mxu0 0.0
    %208 = vmatpush.msra.mxu0 0.0
    %209 = vmatpush.msra.mxu0 0.0
    %210 = vmatpush.msra.mxu0 %v169
    %211 = vmatpush.msra.mxu0 %v165
    %212 = vmatpush.msra.mxu0 %v161
    %213 = vmatpush.msra.mxu0 %v157
    %214 = vmatmul.f32.gmra.mxu0 %v175
    %v215 = vpop.f32.mrf.mxu0
    %v216 = vadd.f32 0.0, %v215
    %217 = vmatmul.f32.gmra.mxu0 %v178
    %v218 = vpop.f32.mrf.mxu0
    %v219 = vadd.f32 0.0, %v218
    %220 = vmatmul.f32.gmra.mxu0 %v181
    %v221 = vpop.f32.mrf.mxu0
    %v222 = vadd.f32 0.0, %v221
    %223 = vmatmul.f32.gmra.mxu0 %v184
    %v224 = vpop.f32.mrf.mxu0
    %v225 = vadd.f32 0.0, %v224
    %226 = vmatmul.f32.gmra.mxu0 %v187
    %v227 = vpop.f32.mrf.mxu0
    %v228 = vadd.f32 0.0, %v227
    %229 = vmatmul.f32.gmra.mxu0 %v190
    %v230 = vpop.f32.mrf.mxu0
    %v231 = vadd.f32 0.0, %v230
    %232 = vmatmul.f32.gmra.mxu0 %v193
    %v233 = vpop.f32.mrf.mxu0
    %v234 = vadd.f32 0.0, %v233
    %235 = vmatmul.f32.gmra.mxu0 %v196
    %v236 = vpop.f32.mrf.mxu0
    %v237 = vadd.f32 0.0, %v236
    %238 = vdwg.mxu0
    %239 = vmatpush.msra.mxu0 0.0
    %240 = vmatpush.msra.mxu0 0.0
    %241 = vmatpush.msra.mxu0 0.0
    %242 = vmatpush.msra.mxu0 0.0
    %243 = vmatpush.msra.mxu0 0.0
    %244 = vmatpush.msra.mxu0 0.0
    %245 = vmatpush.msra.mxu0 0.0
    %246 = vmatpush.msra.mxu0 0.0
    %247 = vmatpush.msra.mxu0 0.0
    %248 = vmatpush.msra.mxu0 0.0
    %249 = vmatpush.msra.mxu0 0.0
    %250 = vmatpush.msra.mxu0 0.0
    %251 = vmatpush.msra.mxu0 %v170
    %252 = vmatpush.msra.mxu0 %v166
    %253 = vmatpush.msra.mxu0 %v162
    %254 = vmatpush.msra.mxu0 %v158
    %255 = vmatmul.f32.gmra.mxu0 %v175
    %v256 = vpop.f32.mrf.mxu0
    %v257 = vadd.f32 0.0, %v256
    %258 = vmatmul.f32.gmra.mxu0 %v178
    %v259 = vpop.f32.mrf.mxu0
    %v260 = vadd.f32 0.0, %v259
    %261 = vmatmul.f32.gmra.mxu0 %v181
    %v262 = vpop.f32.mrf.mxu0
    %v263 = vadd.f32 0.0, %v262
    %264 = vmatmul.f32.gmra.mxu0 %v184
    %v265 = vpop.f32.mrf.mxu0
    %v266 = vadd.f32 0.0, %v265
    %267 = vmatmul.f32.gmra.mxu0 %v187
    %v268 = vpop.f32.mrf.mxu0
    %v269 = vadd.f32 0.0, %v268
    %270 = vmatmul.f32.gmra.mxu0 %v190
    %v271 = vpop.f32.mrf.mxu0
    %v272 = vadd.f32 0.0, %v271
    %273 = vmatmul.f32.gmra.mxu0 %v193
    %v274 = vpop.f32.mrf.mxu0
    %v275 = vadd.f32 0.0, %v274
    %276 = vmatmul.f32.gmra.mxu0 %v196
    %v277 = vpop.f32.mrf.mxu0
    %v278 = vadd.f32 0.0, %v277
    %279 = vdwg.mxu0
    %280 = vmatpush.msra.mxu0 0.0
    %281 = vmatpush.msra.mxu0 0.0
    %282 = vmatpush.msra.mxu0 0.0
    %283 = vmatpush.msra.mxu0 0.0
    %284 = vmatpush.msra.mxu0 0.0
    %285 = vmatpush.msra.mxu0 0.0
    %286 = vmatpush.msra.mxu0 0.0
    %287 = vmatpush.msra.mxu0 0.0
    %288 = vmatpush.msra.mxu0 0.0
    %289 = vmatpush.msra.mxu0 0.0
    %290 = vmatpush.msra.mxu0 0.0
    %291 = vmatpush.msra.mxu0 0.0
    %292 = vmatpush.msra.mxu0 %v171
    %293 = vmatpush.msra.mxu0 %v167
    %294 = vmatpush.msra.mxu0 %v163
    %295 = vmatpush.msra.mxu0 %v159
    %296 = vmatmul.f32.gmra.mxu0 %v175
    %v297 = vpop.f32.mrf.mxu0
    %v298 = vadd.f32 0.0, %v297
    %299 = vmatmul.f32.gmra.mxu0 %v178
    %v300 = vpop.f32.mrf.mxu0
    %v301 = vadd.f32 0.0, %v300
    %302 = vmatmul.f32.gmra.mxu0 %v181
    %v303 = vpop.f32.mrf.mxu0
    %v304 = vadd.f32 0.0, %v303
    %305 = vmatmul.f32.gmra.mxu0 %v184
    %v306 = vpop.f32.mrf.mxu0
    %v307 = vadd.f32 0.0, %v306
    %308 = vmatmul.f32.gmra.mxu0 %v187
    %v309 = vpop.f32.mrf.mxu0
    %v310 = vadd.f32 0.0, %v309
    %311 = vmatmul.f32.gmra.mxu0 %v190
    %v312 = vpop.f32.mrf.mxu0
    %v313 = vadd.f32 0.0, %v312
    %314 = vmatmul.f32.gmra.mxu0 %v193
    %v315 = vpop.f32.mrf.mxu0
    %v316 = vadd.f32 0.0, %v315
    %317 = vmatmul.f32.gmra.mxu0 %v196
    %v318 = vpop.f32.mrf.mxu0
    %v319 = vadd.f32 0.0, %v318
    %320 = vdwg.mxu0
    %321 = vmatpush.msra.mxu0 0.0
    %322 = vmatpush.msra.mxu0 0.0
    %323 = vmatpush.msra.mxu0 0.0
    %324 = vmatpush.msra.mxu0 0.0
    %325 = vmatpush.msra.mxu0 0.0
    %326 = vmatpush.msra.mxu0 0.0
    %327 = vmatpush.msra.mxu0 0.0
    %328 = vmatpush.msra.mxu0 0.0
    %329 = vmatpush.msra.mxu0 0.0
    %330 = vmatpush.msra.mxu0 0.0
    %331 = vmatpush.msra.mxu0 0.0
    %332 = vmatpush.msra.mxu0 0.0
    %333 = vmatpush.msra.mxu0 %v172
    %334 = vmatpush.msra.mxu0 %v168
    %335 = vmatpush.msra.mxu0 %v164
    %336 = vmatpush.msra.mxu0 %v160
    %337 = vmatmul.f32.gmra.mxu0 %v175
    %v338 = vpop.f32.mrf.mxu0
    %v339 = vadd.f32 0.0, %v338
    %340 = vmatmul.f32.gmra.mxu0 %v178
    %v341 = vpop.f32.mrf.mxu0
    %v342 = vadd.f32 0.0, %v341
    %343 = vmatmul.f32.gmra.mxu0 %v181
    %v344 = vpop.f32.mrf.mxu0
    %v345 = vadd.f32 0.0, %v344
    %346 = vmatmul.f32.gmra.mxu0 %v184
    %v347 = vpop.f32.mrf.mxu0
    %v348 = vadd.f32 0.0, %v347
    %349 = vmatmul.f32.gmra.mxu0 %v187
    %v350 = vpop.f32.mrf.mxu0
    %v351 = vadd.f32 0.0, %v350
    %352 = vmatmul.f32.gmra.mxu0 %v190
    %v353 = vpop.f32.mrf.mxu0
    %v354 = vadd.f32 0.0, %v353
    %355 = vmatmul.f32.gmra.mxu0 %v193
    %v356 = vpop.f32.mrf.mxu0
    %v357 = vadd.f32 0.0, %v356
    %358 = vmatmul.f32.gmra.mxu0 %v196
    %v359 = vpop.f32.mrf.mxu0
    %v360 = vadd.f32 0.0, %v359
    %361 = vdwg.mxu0
    %362 = vst [vmem:[#allocation3] sm:$0xff] %v216
    %363 = vst [vmem:[#allocation3 + $0x8] sm:$0xff] %v257
    %364 = vst [vmem:[#allocation3 + $0x10] sm:$0xff] %v298
    %365 = vst [vmem:[#allocation3 + $0x18] sm:$0xff] %v339
    %366 = vst [vmem:[#allocation3 + $0x20] sm:$0xff] %v219
    %367 = vst [vmem:[#allocation3 + $0x28] sm:$0xff] %v260
    %368 = vst [vmem:[#allocation3 + $0x30] sm:$0xff] %v301
    %369 = vst [vmem:[#allocation3 + $0x38] sm:$0xff] %v342
    %370 = vst [vmem:[#allocation3 + $0x40] sm:$0xff] %v222
    %371 = vst [vmem:[#allocation3 + $0x48] sm:$0xff] %v263
    %372 = vst [vmem:[#allocation3 + $0x50] sm:$0xff] %v304
    %373 = vst [vmem:[#allocation3 + $0x58] sm:$0xff] %v345
    %374 = vst [vmem:[#allocation3 + $0x60] sm:$0xff] %v225
    %375 = vst [vmem:[#allocation3 + $0x68] sm:$0xff] %v266
    %376 = vst [vmem:[#allocation3 + $0x70] sm:$0xff] %v307
    %377 = vst [vmem:[#allocation3 + $0x78] sm:$0xff] %v348
    %378 = vst [vmem:[#allocation3 + $0x80] sm:$0xff] %v228
    %379 = vst [vmem:[#allocation3 + $0x88] sm:$0xff] %v269
    %380 = vst [vmem:[#allocation3 + $0x90] sm:$0xff] %v310
    %381 = vst [vmem:[#allocation3 + $0x98] sm:$0xff] %v351
    %382 = vst [vmem:[#allocation3 + $0xa0] sm:$0xff] %v231
    %383 = vst [vmem:[#allocation3 + $0xa8] sm:$0xff] %v272
    %384 = vst [vmem:[#allocation3 + $0xb0] sm:$0xff] %v313
    %385 = vst [vmem:[#allocation3 + $0xb8] sm:$0xff] %v354
    %386 = vst [vmem:[#allocation3 + $0xc0] sm:$0xff] %v234
    %387 = vst [vmem:[#allocation3 + $0xc8] sm:$0xff] %v275
    %388 = vst [vmem:[#allocation3 + $0xd0] sm:$0xff] %v316
    %389 = vst [vmem:[#allocation3 + $0xd8] sm:$0xff] %v357
    %390 = vst [vmem:[#allocation3 + $0xe0] sm:$0xff] %v237
    %391 = vst [vmem:[#allocation3 + $0xe8] sm:$0xff] %v278
    %392 = vst [vmem:[#allocation3 + $0xf0] sm:$0xff] %v319
    %393 = vst [vmem:[#allocation3 + $0xf8] sm:$0xff] %v360
    %v394 = vld [vmem:[%s2] sm:$0xff]
    %s395 = smul.u32 0, 4
    %s396 = smul.addr %s395, 8
    %s397 = scalar_lea.vmem [#allocation3], %s396
    %v398 = vld [vmem:[%s397] sm:$0xff]
    %v399 = vld [vmem:[%s397 + $0x8] sm:$0xff]
    %v400 = vld [vmem:[%s397 + $0x10] sm:$0xff]
    %v401 = vld [vmem:[%s397 + $0x18] sm:$0xff]
    %v402 = vld [vmem:[#allocation11] sm:$0xff]
    %v403 = vld [vmem:[#allocation11 + $0x8] sm:$0xff]
    %v404 = vld [vmem:[#allocation11 + $0x10] sm:$0xff]
    %v405 = vld [vmem:[#allocation11 + $0x18] sm:$0xff]
    %v406 = vld [vmem:[#allocation11 + $0x20] sm:$0xff]
    %v407 = vld [vmem:[#allocation11 + $0x28] sm:$0xff]
    %v408 = vld [vmem:[#allocation11 + $0x30] sm:$0xff]
    %v409 = vld [vmem:[#allocation11 + $0x38] sm:$0xff]
    %v410 = vld [vmem:[#allocation11 + $0x40] sm:$0xff]
    %v411 = vld [vmem:[#allocation11 + $0x48] sm:$0xff]
    %v412 = vld [vmem:[#allocation11 + $0x50] sm:$0xff]
    %v413 = vld [vmem:[#allocation11 + $0x58] sm:$0xff]
    %v414 = vld [vmem:[#allocation11 + $0x60] sm:$0xff]
    %v415 = vld [vmem:[#allocation11 + $0x68] sm:$0xff]
    %v416 = vld [vmem:[#allocation11 + $0x70] sm:$0xff]
    %v417 = vld [vmem:[#allocation11 + $0x78] sm:$0xff]
    %v418 = vld [vmem:[#allocation11 + $0x80] sm:$0xff]
    %v419 = vld [vmem:[#allocation11 + $0x88] sm:$0xff]
    %v420 = vld [vmem:[#allocation11 + $0x90] sm:$0xff]
    %v421 = vld [vmem:[#allocation11 + $0x98] sm:$0xff]
    %v422 = vld [vmem:[#allocation11 + $0xa0] sm:$0xff]
    %v423 = vld [vmem:[#allocation11 + $0xa8] sm:$0xff]
    %v424 = vld [vmem:[#allocation11 + $0xb0] sm:$0xff]
    %v425 = vld [vmem:[#allocation11 + $0xb8] sm:$0xff]
    %v426 = vld [vmem:[#allocation11 + $0xc0] sm:$0xff]
    %v427 = vld [vmem:[#allocation11 + $0xc8] sm:$0xff]
    %v428 = vld [vmem:[#allocation11 + $0xd0] sm:$0xff]
    %v429 = vld [vmem:[#allocation11 + $0xd8] sm:$0xff]
    %v430 = vld [vmem:[#allocation11 + $0xe0] sm:$0xff]
    %v431 = vld [vmem:[#allocation11 + $0xe8] sm:$0xff]
    %v432 = vld [vmem:[#allocation11 + $0xf0] sm:$0xff]
    %v433 = vld [vmem:[#allocation11 + $0xf8] sm:$0xff]
    %v434 = vld [vmem:[#allocation11 + $0x100] sm:$0xff]
    %v435 = vld [vmem:[#allocation11 + $0x108] sm:$0xff]
    %v436 = vld [vmem:[#allocation11 + $0x110] sm:$0xff]
    %v437 = vld [vmem:[#allocation11 + $0x118] sm:$0xff]
    %v438 = vld [vmem:[#allocation11 + $0x120] sm:$0xff]
    %v439 = vld [vmem:[#allocation11 + $0x128] sm:$0xff]
    %v440 = vld [vmem:[#allocation11 + $0x130] sm:$0xff]
    %v441 = vld [vmem:[#allocation11 + $0x138] sm:$0xff]
    %v442 = vld [vmem:[#allocation11 + $0x140] sm:$0xff]
    %v443 = vld [vmem:[#allocation11 + $0x148] sm:$0xff]
    %v444 = vld [vmem:[#allocation11 + $0x150] sm:$0xff]
    %v445 = vld [vmem:[#allocation11 + $0x158] sm:$0xff]
    %v446 = vld [vmem:[#allocation11 + $0x160] sm:$0xff]
    %v447 = vld [vmem:[#allocation11 + $0x168] sm:$0xff]
    %v448 = vld [vmem:[#allocation11 + $0x170] sm:$0xff]
    %v449 = vld [vmem:[#allocation11 + $0x178] sm:$0xff]
    %v450 = vld [vmem:[#allocation11 + $0x180] sm:$0xff]
    %v451 = vld [vmem:[#allocation11 + $0x188] sm:$0xff]
    %v452 = vld [vmem:[#allocation11 + $0x190] sm:$0xff]
    %v453 = vld [vmem:[#allocation11 + $0x198] sm:$0xff]
    %v454 = vld [vmem:[#allocation11 + $0x1a0] sm:$0xff]
    %v455 = vld [vmem:[#allocation11 + $0x1a8] sm:$0xff]
    %v456 = vld [vmem:[#allocation11 + $0x1b0] sm:$0xff]
    %v457 = vld [vmem:[#allocation11 + $0x1b8] sm:$0xff]
    %v458 = vld [vmem:[#allocation11 + $0x1c0] sm:$0xff]
    %v459 = vld [vmem:[#allocation11 + $0x1c8] sm:$0xff]
    %v460 = vld [vmem:[#allocation11 + $0x1d0] sm:$0xff]
    %v461 = vld [vmem:[#allocation11 + $0x1d8] sm:$0xff]
    %v462 = vld [vmem:[#allocation11 + $0x1e0] sm:$0xff]
    %v463 = vld [vmem:[#allocation11 + $0x1e8] sm:$0xff]
    %v464 = vld [vmem:[#allocation11 + $0x1f0] sm:$0xff]
    %v465 = vld [vmem:[#allocation11 + $0x1f8] sm:$0xff]
    %466 = vmatpush.msra.mxu0 %v462
    %467 = vmatpush.msra.mxu0 %v458
    %468 = vmatpush.msra.mxu0 %v454
    %469 = vmatpush.msra.mxu0 %v450
    %470 = vmatpush.msra.mxu0 %v446
    %471 = vmatpush.msra.mxu0 %v442
    %472 = vmatpush.msra.mxu0 %v438
    %473 = vmatpush.msra.mxu0 %v434
    %474 = vmatpush.msra.mxu0 %v430
    %475 = vmatpush.msra.mxu0 %v426
    %476 = vmatpush.msra.mxu0 %v422
    %477 = vmatpush.msra.mxu0 %v418
    %478 = vmatpush.msra.mxu0 %v414
    %479 = vmatpush.msra.mxu0 %v410
    %480 = vmatpush.msra.mxu0 %v406
    %481 = vmatpush.msra.mxu0 %v402
    %482 = vmatmul.f32.gmra.mxu0 %v394
    %v483 = vpop.f32.mrf.mxu0
    %v484 = vadd.f32 0.0, %v483
    %485 = vdwg.mxu0
    %486 = vmatpush.msra.mxu0 %v463
    %487 = vmatpush.msra.mxu0 %v459
    %488 = vmatpush.msra.mxu0 %v455
    %489 = vmatpush.msra.mxu0 %v451
    %490 = vmatpush.msra.mxu0 %v447
    %491 = vmatpush.msra.mxu0 %v443
    %492 = vmatpush.msra.mxu0 %v439
    %493 = vmatpush.msra.mxu0 %v435
    %494 = vmatpush.msra.mxu0 %v431
    %495 = vmatpush.msra.mxu0 %v427
    %496 = vmatpush.msra.mxu0 %v423
    %497 = vmatpush.msra.mxu0 %v419
    %498 = vmatpush.msra.mxu0 %v415
    %499 = vmatpush.msra.mxu0 %v411
    %500 = vmatpush.msra.mxu0 %v407
    %501 = vmatpush.msra.mxu0 %v403
    %502 = vmatmul.f32.gmra.mxu0 %v394
    %v503 = vpop.f32.mrf.mxu0
    %v504 = vadd.f32 0.0, %v503
    %505 = vdwg.mxu0
    %506 = vmatpush.msra.mxu0 %v464
    %507 = vmatpush.msra.mxu0 %v460
    %508 = vmatpush.msra.mxu0 %v456
    %509 = vmatpush.msra.mxu0 %v452
    %510 = vmatpush.msra.mxu0 %v448
    %511 = vmatpush.msra.mxu0 %v444
    %512 = vmatpush.msra.mxu0 %v440
    %513 = vmatpush.msra.mxu0 %v436
    %514 = vmatpush.msra.mxu0 %v432
    %515 = vmatpush.msra.mxu0 %v428
    %516 = vmatpush.msra.mxu0 %v424
    %517 = vmatpush.msra.mxu0 %v420
    %518 = vmatpush.msra.mxu0 %v416
    %519 = vmatpush.msra.mxu0 %v412
    %520 = vmatpush.msra.mxu0 %v408
    %521 = vmatpush.msra.mxu0 %v404
    %522 = vmatmul.f32.gmra.mxu0 %v394
    %v523 = vpop.f32.mrf.mxu0
    %v524 = vadd.f32 0.0, %v523
    %525 = vdwg.mxu0
    %526 = vmatpush.msra.mxu0 %v465
    %527 = vmatpush.msra.mxu0 %v461
    %528 = vmatpush.msra.mxu0 %v457
    %529 = vmatpush.msra.mxu0 %v453
    %530 = vmatpush.msra.mxu0 %v449
    %531 = vmatpush.msra.mxu0 %v445
    %532 = vmatpush.msra.mxu0 %v441
    %533 = vmatpush.msra.mxu0 %v437
    %534 = vmatpush.msra.mxu0 %v433
    %535 = vmatpush.msra.mxu0 %v429
    %536 = vmatpush.msra.mxu0 %v425
    %537 = vmatpush.msra.mxu0 %v421
    %538 = vmatpush.msra.mxu0 %v417
    %539 = vmatpush.msra.mxu0 %v413
    %540 = vmatpush.msra.mxu0 %v409
    %541 = vmatpush.msra.mxu0 %v405
    %542 = vmatmul.f32.gmra.mxu0 %v394
    %v543 = vpop.f32.mrf.mxu0
    %v544 = vadd.f32 0.0, %v543
    %545 = vdwg.mxu0
    %v546 = vadd.f32 %v398, %v484
    %v547 = vadd.f32 %v399, %v504
    %v548 = vadd.f32 %v400, %v524
    %v549 = vadd.f32 %v401, %v544
    %v550 = vld [vmem:[%s6] sm:$0xf]
    %v552 = vperm.slane %v550, 0
    %v553 = vperm.slane %v550, 1
    %v554 = vperm.slane %v550, 2
    %v555 = vperm.slane %v550, 3
    %v560 = vadd.f32 %v546, %v552
    %v561 = vadd.f32 %v547, %v553
    %v562 = vadd.f32 %v548, %v554
    %v563 = vadd.f32 %v549, %v555
    %v564 = vxor.u32 %v560, 2147483648
    %v565 = vxor.u32 %v561, 2147483648
    %v566 = vxor.u32 %v562, 2147483648
    %v567 = vmul.f32 %v564, 1.442695
    %v568 = vpow.pop %v567
    %v569 = vmul.f32 %v565, 1.442695
    %v570 = vpow.pop %v569
    %v571 = vmul.f32 %v566, 1.442695
    %v572 = vpow.pop %v571
    %v573 = vadd.f32 %v568, 1.0
    %v574 = vadd.f32 %v570, 1.0
    %v575 = vadd.f32 %v572, 1.0
    %v576 = vrcp.pop %v573
    %v577 = vmul.f32 %v573, %v576
    %v578 = vsub.f32 1.0, %v577
    %v579 = vmul.f32 %v576, %v578
    %v580 = vadd.f32 %v576, %v579
    %vm581 = vweird.f32 %v573
    %vm582 = vweird.f32 %v576
    %vm583 = vmor %vm581, %vm582
    %v584 = vsel %vm583, %v576, %v580
    %v585 = vand.u32 2147483647, %v573
    %vm586 = vcmp.eq.f32.partialorder %v585, 8.507059e+37
    %v587 = vand.u32 %v573, 2147483648
    %v588 = vor.u32 1.1754944e-38, %v587
    %v589 = vsel %vm586, %v588, %v584
    %v590 = vmul.f32 1.0, %v589
    %v591 = vrcp.pop %v574
    %v592 = vmul.f32 %v574, %v591
    %v593 = vsub.f32 1.0, %v592
    %v594 = vmul.f32 %v591, %v593
    %v595 = vadd.f32 %v591, %v594
    %vm596 = vweird.f32 %v574
    %vm597 = vweird.f32 %v591
    %vm598 = vmor %vm596, %vm597
    %v599 = vsel %vm598, %v591, %v595
    %v600 = vand.u32 2147483647, %v574
    %vm601 = vcmp.eq.f32.partialorder %v600, 8.507059e+37
    %v602 = vand.u32 %v574, 2147483648
    %v603 = vor.u32 1.1754944e-38, %v602
    %v604 = vsel %vm601, %v603, %v599
    %v605 = vmul.f32 1.0, %v604
    %v606 = vrcp.pop %v575
    %v607 = vmul.f32 %v575, %v606
    %v608 = vsub.f32 1.0, %v607
    %v609 = vmul.f32 %v606, %v608
    %v610 = vadd.f32 %v606, %v609
    %vm611 = vweird.f32 %v575
    %vm612 = vweird.f32 %v606
    %vm613 = vmor %vm611, %vm612
    %v614 = vsel %vm613, %v606, %v610
    %v615 = vand.u32 2147483647, %v575
    %vm616 = vcmp.eq.f32.partialorder %v615, 8.507059e+37
    %v617 = vand.u32 %v575, 2147483648
    %v618 = vor.u32 1.1754944e-38, %v617
    %v619 = vsel %vm616, %v618, %v614
    %v620 = vmul.f32 1.0, %v619
    %v621 = vtanh.pop %v563
    %v622 = vmul.f32 %v605, 0.0
    %v623 = vmul.f32 %v590, %v621
    %v624 = vadd.f32 %v622, %v623
    %v625 = vtanh.pop %v624
    %v626 = vmul.f32 %v620, %v625
    %627 = vst [vmem:[#allocation4] sm:$0xff] %v626
    %s628 = sld [smem:[#allocation6]]
    %p629 = scmp.eq.s32.totalorder %s628, 0
    // Predicated region
    $region45: #{tpu_custom_call.1} parent=1 // pred_check
      %p630 = pneg %p629
    $region46: #{tpu_custom_call.1} parent=1 // pred_check_branch
      %632 = sbr.rel (%p630) target = $region48
    $region47: #{tpu_custom_call.1} parent=1 // pred_region
      %v633 = vld [vmem:[%s7] sm:$0xff]
      %v634 = vld [vmem:[%s7 + $0x8] sm:$0xff]
      %v635 = vld [vmem:[%s7 + $0x10] sm:$0xff]
      %v636 = vld [vmem:[%s7 + $0x18] sm:$0xff]
      %v637 = vld [vmem:[%s7 + $0x20] sm:$0xff]
      %v638 = vld [vmem:[%s7 + $0x28] sm:$0xff]
      %v639 = vld [vmem:[%s7 + $0x30] sm:$0xff]
      %v640 = vld [vmem:[%s7 + $0x38] sm:$0xff]
      %v641 = vld [vmem:[%s7 + $0x40] sm:$0xff]
      %v642 = vld [vmem:[%s7 + $0x48] sm:$0xff]
      %v643 = vld [vmem:[%s7 + $0x50] sm:$0xff]
      %v644 = vld [vmem:[%s7 + $0x58] sm:$0xff]
      %v645 = vld [vmem:[%s7 + $0x60] sm:$0xff]
      %v646 = vld [vmem:[%s7 + $0x68] sm:$0xff]
      %v647 = vld [vmem:[%s7 + $0x70] sm:$0xff]
      %v648 = vld [vmem:[%s7 + $0x78] sm:$0xff]
      %v649 = vld [vmem:[%s7 + $0x80] sm:$0xff]
      %v650 = vld [vmem:[%s7 + $0x88] sm:$0xff]
      %v651 = vld [vmem:[%s7 + $0x90] sm:$0xff]
      %v652 = vld [vmem:[%s7 + $0x98] sm:$0xff]
      %v653 = vld [vmem:[%s7 + $0xa0] sm:$0xff]
      %v654 = vld [vmem:[%s7 + $0xa8] sm:$0xff]
      %v655 = vld [vmem:[%s7 + $0xb0] sm:$0xff]
      %v656 = vld [vmem:[%s7 + $0xb8] sm:$0xff]
      %v657 = vld [vmem:[%s7 + $0xc0] sm:$0xff]
      %v658 = vld [vmem:[%s7 + $0xc8] sm:$0xff]
      %v659 = vld [vmem:[%s7 + $0xd0] sm:$0xff]
      %v660 = vld [vmem:[%s7 + $0xd8] sm:$0xff]
      %v661 = vld [vmem:[%s7 + $0xe0] sm:$0xff]
      %v662 = vld [vmem:[%s7 + $0xe8] sm:$0xff]
      %v663 = vld [vmem:[%s7 + $0xf0] sm:$0xff]
      %v664 = vld [vmem:[%s7 + $0xf8] sm:$0xff]
      %v665 = vld [vmem:[%s8] sm:$0x3]
      %v667 = vperm.slane %v665, 0
      %v668 = vperm.slane %v665, 1
      %671 = vmatpush.msra.mxu0 %v663
      %672 = vmatpush.msra.mxu0 %v661
      %673 = vmatpush.msra.mxu0 %v659
      %674 = vmatpush.msra.mxu0 %v657
      %675 = vmatpush.msra.mxu0 %v655
      %676 = vmatpush.msra.mxu0 %v653
      %677 = vmatpush.msra.mxu0 %v651
      %678 = vmatpush.msra.mxu0 %v649
      %679 = vmatpush.msra.mxu0 %v647
      %680 = vmatpush.msra.mxu0 %v645
      %681 = vmatpush.msra.mxu0 %v643
      %682 = vmatpush.msra.mxu0 %v641
      %683 = vmatpush.msra.mxu0 %v639
      %684 = vmatpush.msra.mxu0 %v637
      %685 = vmatpush.msra.mxu0 %v635
      %686 = vmatpush.msra.mxu0 %v633
      %687 = vmatmul.f32.gmra.mxu0 %v626
      %v688 = vpop.f32.mrf.mxu0
      %v689 = vadd.f32 %v667, %v688
      %690 = vdwg.mxu0
      %691 = vmatpush.msra.mxu0 %v664
      %692 = vmatpush.msra.mxu0 %v662
      %693 = vmatpush.msra.mxu0 %v660
      %694 = vmatpush.msra.mxu0 %v658
      %695 = vmatpush.msra.mxu0 %v656
      %696 = vmatpush.msra.mxu0 %v654
      %697 = vmatpush.msra.mxu0 %v652
      %698 = vmatpush.msra.mxu0 %v650
      %699 = vmatpush.msra.mxu0 %v648
      %700 = vmatpush.msra.mxu0 %v646
      %701 = vmatpush.msra.mxu0 %v644
      %702 = vmatpush.msra.mxu0 %v642
      %703 = vmatpush.msra.mxu0 %v640
      %704 = vmatpush.msra.mxu0 %v638
      %705 = vmatpush.msra.mxu0 %v636
      %706 = vmatpush.msra.mxu0 %v634
      %707 = vmatmul.f32.gmra.mxu0 %v626
      %v708 = vpop.f32.mrf.mxu0
      %v709 = vadd.f32 %v668, %v708
      %710 = vdwg.mxu0
      %v711 = vlaneseq
      %v712 = vand.u32 %v711, 127
      %v713 = vadd.s32 %v712, 128
      %vm714 = vcmp.ge.f32.partialorder %v689, %v709
      %v715 = vsel %vm714, %v689, %v709
      %v716 = vsel %vm714, %v712, %v713
      %717 = vmax.index.xlane.f32.xlu0 %v715
      %v718 = vpop.xlane.xlu0 %717
      %719 = vset.pattern.permute.xlu0 %v718
      %720 = vperm.xlu0 %719, %v716
      %v721 = vpop.permute.xlu0 %720
      %vm722 = vcmp.eq.s32.totalorder %v712, %v721
      %vm723 = vcmp.eq.s32.totalorder %v713, %v721
      %v724 = vsel %vm722, 1, 0
      %v725 = vsel %vm723, 1, 0
      %v726 = vcvt.s32.f32 %v724
      %v727 = vcvt.s32.f32 %v725
      %v728 = vld [vmem:[%s3] sm:$0xff]
      %v729 = vld [vmem:[%s3 + $0x8] sm:$0xff]
      %v730 = vld [vmem:[%s3 + $0x10] sm:$0xff]
      %v731 = vld [vmem:[%s3 + $0x18] sm:$0xff]
      %v732 = vld [vmem:[%s3 + $0x20] sm:$0xff]
      %v733 = vld [vmem:[%s3 + $0x28] sm:$0xff]
      %v734 = vld [vmem:[%s3 + $0x30] sm:$0xff]
      %v735 = vld [vmem:[%s3 + $0x38] sm:$0xff]
      %v736 = vld [vmem:[%s3 + $0x40] sm:$0xff]
      %v737 = vld [vmem:[%s3 + $0x48] sm:$0xff]
      %v738 = vld [vmem:[%s3 + $0x50] sm:$0xff]
      %v739 = vld [vmem:[%s3 + $0x58] sm:$0xff]
      %v740 = vld [vmem:[%s3 + $0x60] sm:$0xff]
      %v741 = vld [vmem:[%s3 + $0x68] sm:$0xff]
      %v742 = vld [vmem:[%s3 + $0x70] sm:$0xff]
      %v743 = vld [vmem:[%s3 + $0x78] sm:$0xff]
      %v744 = vld [vmem:[%s3 + $0x80] sm:$0xff]
      %v745 = vld [vmem:[%s3 + $0x88] sm:$0xff]
      %v746 = vld [vmem:[%s3 + $0x90] sm:$0xff]
      %v747 = vld [vmem:[%s3 + $0x98] sm:$0xff]
      %v748 = vld [vmem:[%s3 + $0xa0] sm:$0xff]
      %v749 = vld [vmem:[%s3 + $0xa8] sm:$0xff]
      %v750 = vld [vmem:[%s3 + $0xb0] sm:$0xff]
      %v751 = vld [vmem:[%s3 + $0xb8] sm:$0xff]
      %v752 = vld [vmem:[%s3 + $0xc0] sm:$0xff]
      %v753 = vld [vmem:[%s3 + $0xc8] sm:$0xff]
      %v754 = vld [vmem:[%s3 + $0xd0] sm:$0xff]
      %v755 = vld [vmem:[%s3 + $0xd8] sm:$0xff]
      %v756 = vld [vmem:[%s3 + $0xe0] sm:$0xff]
      %v757 = vld [vmem:[%s3 + $0xe8] sm:$0xff]
      %v758 = vld [vmem:[%s3 + $0xf0] sm:$0xff]
      %v759 = vld [vmem:[%s3 + $0xf8] sm:$0xff]
      %760 = vmatpush.msra.mxu0 %v743
      %761 = vmatpush.msra.mxu0 %v742
      %762 = vmatpush.msra.mxu0 %v741
      %763 = vmatpush.msra.mxu0 %v740
      %764 = vmatpush.msra.mxu0 %v739
      %765 = vmatpush.msra.mxu0 %v738
      %766 = vmatpush.msra.mxu0 %v737
      %767 = vmatpush.msra.mxu0 %v736
      %768 = vmatpush.msra.mxu0 %v735
      %769 = vmatpush.msra.mxu0 %v734
      %770 = vmatpush.msra.mxu0 %v733
      %771 = vmatpush.msra.mxu0 %v732
      %772 = vmatpush.msra.mxu0 %v731
      %773 = vmatpush.msra.mxu0 %v730
      %774 = vmatpush.msra.mxu0 %v729
      %775 = vmatpush.msra.mxu0 %v728
      %776 = vmatmul.f32.gmra.mxu0 %v726
      %v777 = vpop.f32.mrf.mxu0
      %v778 = vadd.f32 0.0, %v777
      %779 = vdwg.mxu0
      %780 = vmatpush.msra.mxu0 %v759
      %781 = vmatpush.msra.mxu0 %v758
      %782 = vmatpush.msra.mxu0 %v757
      %783 = vmatpush.msra.mxu0 %v756
      %784 = vmatpush.msra.mxu0 %v755
      %785 = vmatpush.msra.mxu0 %v754
      %786 = vmatpush.msra.mxu0 %v753
      %787 = vmatpush.msra.mxu0 %v752
      %788 = vmatpush.msra.mxu0 %v751
      %789 = vmatpush.msra.mxu0 %v750
      %790 = vmatpush.msra.mxu0 %v749
      %791 = vmatpush.msra.mxu0 %v748
      %792 = vmatpush.msra.mxu0 %v747
      %793 = vmatpush.msra.mxu0 %v746
      %794 = vmatpush.msra.mxu0 %v745
      %795 = vmatpush.msra.mxu0 %v744
      %796 = vmatmul.f32.gmra.mxu0 %v727
      %v797 = vpop.f32.mrf.mxu0
      %v798 = vadd.f32 %v778, %v797
      %799 = vdwg.mxu0
      %v800 = vld [vmem:[#allocation8] sm:$0xff]
      %v801 = vld [vmem:[#allocation8 + $0x8] sm:$0xff]
      %v802 = vld [vmem:[#allocation8 + $0x10] sm:$0xff]
      %v803 = vld [vmem:[#allocation8 + $0x18] sm:$0xff]
      %v804 = vld [vmem:[#allocation8 + $0x20] sm:$0xff]
      %v805 = vld [vmem:[#allocation8 + $0x28] sm:$0xff]
      %v806 = vld [vmem:[#allocation8 + $0x30] sm:$0xff]
      %v807 = vld [vmem:[#allocation8 + $0x38] sm:$0xff]
      %v808 = vld [vmem:[#allocation8 + $0x40] sm:$0xff]
      %v809 = vld [vmem:[#allocation8 + $0x48] sm:$0xff]
      %v810 = vld [vmem:[#allocation8 + $0x50] sm:$0xff]
      %v811 = vld [vmem:[#allocation8 + $0x58] sm:$0xff]
      %v812 = vld [vmem:[#allocation8 + $0x60] sm:$0xff]
      %v813 = vld [vmem:[#allocation8 + $0x68] sm:$0xff]
      %v814 = vld [vmem:[#allocation8 + $0x70] sm:$0xff]
      %v815 = vld [vmem:[#allocation8 + $0x78] sm:$0xff]
      %v817 = vsel %vm173, %v798, 0
      %819 = vmatpush.msra.mxu0 0.0
      %820 = vmatpush.msra.mxu0 0.0
      %821 = vmatpush.msra.mxu0 0.0
      %822 = vmatpush.msra.mxu0 0.0
      %823 = vmatpush.msra.mxu0 0.0
      %824 = vmatpush.msra.mxu0 0.0
      %825 = vmatpush.msra.mxu0 0.0
      %826 = vmatpush.msra.mxu0 0.0
      %827 = vmatpush.msra.mxu0 0.0
      %828 = vmatpush.msra.mxu0 0.0
      %829 = vmatpush.msra.mxu0 0.0
      %830 = vmatpush.msra.mxu0 0.0
      %831 = vmatpush.msra.mxu0 %v812
      %832 = vmatpush.msra.mxu0 %v808
      %833 = vmatpush.msra.mxu0 %v804
      %834 = vmatpush.msra.mxu0 %v800
      %835 = vmatmul.f32.gmra.mxu0 %v817
      %v836 = vpop.f32.mrf.mxu0
      %v837 = vadd.f32 0.0, %v836
      %838 = vdwg.mxu0
      %839 = vmatpush.msra.mxu0 0.0
      %840 = vmatpush.msra.mxu0 0.0
      %841 = vmatpush.msra.mxu0 0.0
      %842 = vmatpush.msra.mxu0 0.0
      %843 = vmatpush.msra.mxu0 0.0
      %844 = vmatpush.msra.mxu0 0.0
      %845 = vmatpush.msra.mxu0 0.0
      %846 = vmatpush.msra.mxu0 0.0
      %847 = vmatpush.msra.mxu0 0.0
      %848 = vmatpush.msra.mxu0 0.0
      %849 = vmatpush.msra.mxu0 0.0
      %850 = vmatpush.msra.mxu0 0.0
      %851 = vmatpush.msra.mxu0 %v813
      %852 = vmatpush.msra.mxu0 %v809
      %853 = vmatpush.msra.mxu0 %v805
      %854 = vmatpush.msra.mxu0 %v801
      %855 = vmatmul.f32.gmra.mxu0 %v817
      %v856 = vpop.f32.mrf.mxu0
      %v857 = vadd.f32 0.0, %v856
      %858 = vdwg.mxu0
      %859 = vmatpush.msra.mxu0 0.0
      %860 = vmatpush.msra.mxu0 0.0
      %861 = vmatpush.msra.mxu0 0.0
      %862 = vmatpush.msra.mxu0 0.0
      %863 = vmatpush.msra.mxu0 0.0
      %864 = vmatpush.msra.mxu0 0.0
      %865 = vmatpush.msra.mxu0 0.0
      %866 = vmatpush.msra.mxu0 0.0
      %867 = vmatpush.msra.mxu0 0.0
      %868 = vmatpush.msra.mxu0 0.0
      %869 = vmatpush.msra.mxu0 0.0
      %870 = vmatpush.msra.mxu0 0.0
      %871 = vmatpush.msra.mxu0 %v814
      %872 = vmatpush.msra.mxu0 %v810
      %873 = vmatpush.msra.mxu0 %v806
      %874 = vmatpush.msra.mxu0 %v802
      %875 = vmatmul.f32.gmra.mxu0 %v817
      %v876 = vpop.f32.mrf.mxu0
      %v877 = vadd.f32 0.0, %v876
      %878 = vdwg.mxu0
      %879 = vmatpush.msra.mxu0 0.0
      %880 = vmatpush.msra.mxu0 0.0
      %881 = vmatpush.msra.mxu0 0.0
      %882 = vmatpush.msra.mxu0 0.0
      %883 = vmatpush.msra.mxu0 0.0
      %884 = vmatpush.msra.mxu0 0.0
      %885 = vmatpush.msra.mxu0 0.0
      %886 = vmatpush.msra.mxu0 0.0
      %887 = vmatpush.msra.mxu0 0.0
      %888 = vmatpush.msra.mxu0 0.0
      %889 = vmatpush.msra.mxu0 0.0
      %890 = vmatpush.msra.mxu0 0.0
      %891 = vmatpush.msra.mxu0 %v815
      %892 = vmatpush.msra.mxu0 %v811
      %893 = vmatpush.msra.mxu0 %v807
      %894 = vmatpush.msra.mxu0 %v803
      %895 = vmatmul.f32.gmra.mxu0 %v817
      %v896 = vpop.f32.mrf.mxu0
      %v897 = vadd.f32 0.0, %v896
      %898 = vdwg.mxu0
      %s899 = smul.u32 1, 4
      %s900 = smul.addr %s899, 8
      %s901 = scalar_lea.vmem [#allocation3], %s900
      %902 = vst [vmem:[%s901] sm:$0xff] %v837
      %903 = vst [vmem:[%s901 + $0x8] sm:$0xff] %v857
      %904 = vst [vmem:[%s901 + $0x10] sm:$0xff] %v877
      %905 = vst [vmem:[%s901 + $0x18] sm:$0xff] %v897
    $region48: #{tpu_custom_call.1} parent=1 // pred_fallthru
      _
    %s906 = smul.u32 1, 4
    %s907 = smul.addr %s906, 8
    %s908 = scalar_lea.vmem [#allocation3], %s907
    %v909 = vld [vmem:[%s908] sm:$0xff]
    %v910 = vld [vmem:[%s908 + $0x8] sm:$0xff]
    %v911 = vld [vmem:[%s908 + $0x10] sm:$0xff]
    %v912 = vld [vmem:[%s908 + $0x18] sm:$0xff]
    %v913 = vld [vmem:[#allocation11] sm:$0xff]
    %v914 = vld [vmem:[#allocation11 + $0x8] sm:$0xff]
    %v915 = vld [vmem:[#allocation11 + $0x10] sm:$0xff]
    %v916 = vld [vmem:[#allocation11 + $0x18] sm:$0xff]
    %v917 = vld [vmem:[#allocation11 + $0x20] sm:$0xff]
    %v918 = vld [vmem:[#allocation11 + $0x28] sm:$0xff]
    %v919 = vld [vmem:[#allocation11 + $0x30] sm:$0xff]
    %v920 = vld [vmem:[#allocation11 + $0x38] sm:$0xff]
    %v921 = vld [vmem:[#allocation11 + $0x40] sm:$0xff]
    %v922 = vld [vmem:[#allocation11 + $0x48] sm:$0xff]
    %v923 = vld [vmem:[#allocation11 + $0x50] sm:$0xff]
    %v924 = vld [vmem:[#allocation11 + $0x58] sm:$0xff]
    %v925 = vld [vmem:[#allocation11 + $0x60] sm:$0xff]
    %v926 = vld [vmem:[#allocation11 + $0x68] sm:$0xff]
    %v927 = vld [vmem:[#allocation11 + $0x70] sm:$0xff]
    %v928 = vld [vmem:[#allocation11 + $0x78] sm:$0xff]
    %v929 = vld [vmem:[#allocation11 + $0x80] sm:$0xff]
    %v930 = vld [vmem:[#allocation11 + $0x88] sm:$0xff]
    %v931 = vld [vmem:[#allocation11 + $0x90] sm:$0xff]
    %v932 = vld [vmem:[#allocation11 + $0x98] sm:$0xff]
    %v933 = vld [vmem:[#allocation11 + $0xa0] sm:$0xff]
    %v934 = vld [vmem:[#allocation11 + $0xa8] sm:$0xff]
    %v935 = vld [vmem:[#allocation11 + $0xb0] sm:$0xff]
    %v936 = vld [vmem:[#allocation11 + $0xb8] sm:$0xff]
    %v937 = vld [vmem:[#allocation11 + $0xc0] sm:$0xff]
    %v938 = vld [vmem:[#allocation11 + $0xc8] sm:$0xff]
    %v939 = vld [vmem:[#allocation11 + $0xd0] sm:$0xff]
    %v940 = vld [vmem:[#allocation11 + $0xd8] sm:$0xff]
    %v941 = vld [vmem:[#allocation11 + $0xe0] sm:$0xff]
    %v942 = vld [vmem:[#allocation11 + $0xe8] sm:$0xff]
    %v943 = vld [vmem:[#allocation11 + $0xf0] sm:$0xff]
    %v944 = vld [vmem:[#allocation11 + $0xf8] sm:$0xff]
    %v945 = vld [vmem:[#allocation11 + $0x100] sm:$0xff]
    %v946 = vld [vmem:[#allocation11 + $0x108] sm:$0xff]
    %v947 = vld [vmem:[#allocation11 + $0x110] sm:$0xff]
    %v948 = vld [vmem:[#allocation11 + $0x118] sm:$0xff]
    %v949 = vld [vmem:[#allocation11 + $0x120] sm:$0xff]
    %v950 = vld [vmem:[#allocation11 + $0x128] sm:$0xff]
    %v951 = vld [vmem:[#allocation11 + $0x130] sm:$0xff]
    %v952 = vld [vmem:[#allocation11 + $0x138] sm:$0xff]
    %v953 = vld [vmem:[#allocation11 + $0x140] sm:$0xff]
    %v954 = vld [vmem:[#allocation11 + $0x148] sm:$0xff]
    %v955 = vld [vmem:[#allocation11 + $0x150] sm:$0xff]
    %v956 = vld [vmem:[#allocation11 + $0x158] sm:$0xff]
    %v957 = vld [vmem:[#allocation11 + $0x160] sm:$0xff]
    %v958 = vld [vmem:[#allocation11 + $0x168] sm:$0xff]
    %v959 = vld [vmem:[#allocation11 + $0x170] sm:$0xff]
    %v960 = vld [vmem:[#allocation11 + $0x178] sm:$0xff]
    %v961 = vld [vmem:[#allocation11 + $0x180] sm:$0xff]
    %v962 = vld [vmem:[#allocation11 + $0x188] sm:$0xff]
    %v963 = vld [vmem:[#allocation11 + $0x190] sm:$0xff]
    %v964 = vld [vmem:[#allocation11 + $0x198] sm:$0xff]
    %v965 = vld [vmem:[#allocation11 + $0x1a0] sm:$0xff]
    %v966 = vld [vmem:[#allocation11 + $0x1a8] sm:$0xff]
    %v967 = vld [vmem:[#allocation11 + $0x1b0] sm:$0xff]
    %v968 = vld [vmem:[#allocation11 + $0x1b8] sm:$0xff]
    %v969 = vld [vmem:[#allocation11 + $0x1c0] sm:$0xff]
    %v970 = vld [vmem:[#allocation11 + $0x1c8] sm:$0xff]
    %v971 = vld [vmem:[#allocation11 + $0x1d0] sm:$0xff]
    %v972 = vld [vmem:[#allocation11 + $0x1d8] sm:$0xff]
    %v973 = vld [vmem:[#allocation11 + $0x1e0] sm:$0xff]
    %v974 = vld [vmem:[#allocation11 + $0x1e8] sm:$0xff]
    %v975 = vld [vmem:[#allocation11 + $0x1f0] sm:$0xff]
    %v976 = vld [vmem:[#allocation11 + $0x1f8] sm:$0xff]
    %977 = vmatpush.msra.mxu0 %v973
    %978 = vmatpush.msra.mxu0 %v969
    %979 = vmatpush.msra.mxu0 %v965
    %980 = vmatpush.msra.mxu0 %v961
    %981 = vmatpush.msra.mxu0 %v957
    %982 = vmatpush.msra.mxu0 %v953
    %983 = vmatpush.msra.mxu0 %v949
    %984 = vmatpush.msra.mxu0 %v945
    %985 = vmatpush.msra.mxu0 %v941
    %986 = vmatpush.msra.mxu0 %v937
    %987 = vmatpush.msra.mxu0 %v933
    %988 = vmatpush.msra.mxu0 %v929
    %989 = vmatpush.msra.mxu0 %v925
    %990 = vmatpush.msra.mxu0 %v921
    %991 = vmatpush.msra.mxu0 %v917
    %992 = vmatpush.msra.mxu0 %v913
    %993 = vmatmul.f32.gmra.mxu0 %v626
    %v994 = vpop.f32.mrf.mxu0
    %v995 = vadd.f32 0.0, %v994
    %996 = vdwg.mxu0
    %997 = vmatpush.msra.mxu0 %v974
    %998 = vmatpush.msra.mxu0 %v970
    %999 = vmatpush.msra.mxu0 %v966
    %1000 = vmatpush.msra.mxu0 %v962
    %1001 = vmatpush.msra.mxu0 %v958
    %1002 = vmatpush.msra.mxu0 %v954
    %1003 = vmatpush.msra.mxu0 %v950
    %1004 = vmatpush.msra.mxu0 %v946
    %1005 = vmatpush.msra.mxu0 %v942
    %1006 = vmatpush.msra.mxu0 %v938
    %1007 = vmatpush.msra.mxu0 %v934
    %1008 = vmatpush.msra.mxu0 %v930
    %1009 = vmatpush.msra.mxu0 %v926
    %1010 = vmatpush.msra.mxu0 %v922
    %1011 = vmatpush.msra.mxu0 %v918
    %1012 = vmatpush.msra.mxu0 %v914
    %1013 = vmatmul.f32.gmra.mxu0 %v626
    %v1014 = vpop.f32.mrf.mxu0
    %v1015 = vadd.f32 0.0, %v1014
    %1016 = vdwg.mxu0
    %1017 = vmatpush.msra.mxu0 %v975
    %1018 = vmatpush.msra.mxu0 %v971
    %1019 = vmatpush.msra.mxu0 %v967
    %1020 = vmatpush.msra.mxu0 %v963
    %1021 = vmatpush.msra.mxu0 %v959
    %1022 = vmatpush.msra.mxu0 %v955
    %1023 = vmatpush.msra.mxu0 %v951
    %1024 = vmatpush.msra.mxu0 %v947
    %1025 = vmatpush.msra.mxu0 %v943
    %1026 = vmatpush.msra.mxu0 %v939
    %1027 = vmatpush.msra.mxu0 %v935
    %1028 = vmatpush.msra.mxu0 %v931
    %1029 = vmatpush.msra.mxu0 %v927
    %1030 = vmatpush.msra.mxu0 %v923
    %1031 = vmatpush.msra.mxu0 %v919
    %1032 = vmatpush.msra.mxu0 %v915
    %1033 = vmatmul.f32.gmra.mxu0 %v626
    %v1034 = vpop.f32.mrf.mxu0
    %v1035 = vadd.f32 0.0, %v1034
    %1036 = vdwg.mxu0
    %1037 = vmatpush.msra.mxu0 %v976
    %1038 = vmatpush.msra.mxu0 %v972
    %1039 = vmatpush.msra.mxu0 %v968
    %1040 = vmatpush.msra.mxu0 %v964
    %1041 = vmatpush.msra.mxu0 %v960
    %1042 = vmatpush.msra.mxu0 %v956
    %1043 = vmatpush.msra.mxu0 %v952
    %1044 = vmatpush.msra.mxu0 %v948
    %1045 = vmatpush.msra.mxu0 %v944
    %1046 = vmatpush.msra.mxu0 %v940
    %1047 = vmatpush.msra.mxu0 %v936
    %1048 = vmatpush.msra.mxu0 %v932
    %1049 = vmatpush.msra.mxu0 %v928
    %1050 = vmatpush.msra.mxu0 %v924
    %1051 = vmatpush.msra.mxu0 %v920
    %1052 = vmatpush.msra.mxu0 %v916
    %1053 = vmatmul.f32.gmra.mxu0 %v626
    %v1054 = vpop.f32.mrf.mxu0
    %v1055 = vadd.f32 0.0, %v1054
    %1056 = vdwg.mxu0
    %v1057 = vadd.f32 %v909, %v995
    %v1058 = vadd.f32 %v910, %v1015
    %v1059 = vadd.f32 %v911, %v1035
    %v1060 = vadd.f32 %v912, %v1055
    %v1061 = vld [vmem:[%s6] sm:$0xf]
    %v1063 = vperm.slane %v1061, 0
    %v1064 = vperm.slane %v1061, 1
    %v1065 = vperm.slane %v1061, 2
    %v1066 = vperm.slane %v1061, 3
    %v1071 = vadd.f32 %v1057, %v1063
    %v1072 = vadd.f32 %v1058, %v1064
    %v1073 = vadd.f32 %v1059, %v1065
    %v1074 = vadd.f32 %v1060, %v1066
    %v1075 = vxor.u32 %v1071, 2147483648
    %v1076 = vxor.u32 %v1072, 2147483648
    %v1077 = vxor.u32 %v1073, 2147483648
    %v1078 = vmul.f32 %v1075, 1.442695
    %v1079 = vpow.pop %v1078
    %v1080 = vmul.f32 %v1076, 1.442695
    %v1081 = vpow.pop %v1080
    %v1082 = vmul.f32 %v1077, 1.442695
    %v1083 = vpow.pop %v1082
    %v1084 = vadd.f32 %v1079, 1.0
    %v1085 = vadd.f32 %v1081, 1.0
    %v1086 = vadd.f32 %v1083, 1.0
    %v1087 = vrcp.pop %v1084
    %v1088 = vmul.f32 %v1084, %v1087
    %v1089 = vsub.f32 1.0, %v1088
    %v1090 = vmul.f32 %v1087, %v1089
    %v1091 = vadd.f32 %v1087, %v1090
    %vm1092 = vweird.f32 %v1084
    %vm1093 = vweird.f32 %v1087
    %vm1094 = vmor %vm1092, %vm1093
    %v1095 = vsel %vm1094, %v1087, %v1091
    %v1096 = vand.u32 2147483647, %v1084
    %vm1097 = vcmp.eq.f32.partialorder %v1096, 8.507059e+37
    %v1098 = vand.u32 %v1084, 2147483648
    %v1099 = vor.u32 1.1754944e-38, %v1098
    %v1100 = vsel %vm1097, %v1099, %v1095
    %v1101 = vmul.f32 1.0, %v1100
    %v1102 = vrcp.pop %v1085
    %v1103 = vmul.f32 %v1085, %v1102
    %v1104 = vsub.f32 1.0, %v1103
    %v1105 = vmul.f32 %v1102, %v1104
    %v1106 = vadd.f32 %v1102, %v1105
    %vm1107 = vweird.f32 %v1085
    %vm1108 = vweird.f32 %v1102
    %vm1109 = vmor %vm1107, %vm1108
    %v1110 = vsel %vm1109, %v1102, %v1106
    %v1111 = vand.u32 2147483647, %v1085
    %vm1112 = vcmp.eq.f32.partialorder %v1111, 8.507059e+37
    %v1113 = vand.u32 %v1085, 2147483648
    %v1114 = vor.u32 1.1754944e-38, %v1113
    %v1115 = vsel %vm1112, %v1114, %v1110
    %v1116 = vmul.f32 1.0, %v1115
    %v1117 = vrcp.pop %v1086
    %v1118 = vmul.f32 %v1086, %v1117
    %v1119 = vsub.f32 1.0, %v1118
    %v1120 = vmul.f32 %v1117, %v1119
    %v1121 = vadd.f32 %v1117, %v1120
    %vm1122 = vweird.f32 %v1086
    %vm1123 = vweird.f32 %v1117
    %vm1124 = vmor %vm1122, %vm1123
    %v1125 = vsel %vm1124, %v1117, %v1121
    %v1126 = vand.u32 2147483647, %v1086
    %vm1127 = vcmp.eq.f32.partialorder %v1126, 8.507059e+37
    %v1128 = vand.u32 %v1086, 2147483648
    %v1129 = vor.u32 1.1754944e-38, %v1128
    %v1130 = vsel %vm1127, %v1129, %v1125
    %v1131 = vmul.f32 1.0, %v1130
    %v1132 = vtanh.pop %v1074
    %v1133 = vmul.f32 %v1116, %v624
    %v1134 = vmul.f32 %v1101, %v1132
    %v1135 = vadd.f32 %v1133, %v1134
    %v1136 = vtanh.pop %v1135
    %v1137 = vmul.f32 %v1131, %v1136
    %s1138 = scalar_lea.vmem [#allocation4], 8
    %1139 = vst [vmem:[%s1138] sm:$0xff] %v1137
    %s1140 = sld [smem:[#allocation6 + $0x1]]
    %p1141 = scmp.eq.s32.totalorder %s1140, 0
    // Predicated region
    $region49: #{tpu_custom_call.1} parent=1 // pred_check
      %p1142 = pneg %p1141
    $region50: #{tpu_custom_call.1} parent=1 // pred_check_branch
      %1144 = sbr.rel (%p1142) target = $region52
    $region51: #{tpu_custom_call.1} parent=1 // pred_region
      %v1145 = vld [vmem:[%s7] sm:$0xff]
      %v1146 = vld [vmem:[%s7 + $0x8] sm:$0xff]
      %v1147 = vld [vmem:[%s7 + $0x10] sm:$0xff]
      %v1148 = vld [vmem:[%s7 + $0x18] sm:$0xff]
      %v1149 = vld [vmem:[%s7 + $0x20] sm:$0xff]
      %v1150 = vld [vmem:[%s7 + $0x28] sm:$0xff]
      %v1151 = vld [vmem:[%s7 + $0x30] sm:$0xff]
      %v1152 = vld [vmem:[%s7 + $0x38] sm:$0xff]
      %v1153 = vld [vmem:[%s7 + $0x40] sm:$0xff]
      %v1154 = vld [vmem:[%s7 + $0x48] sm:$0xff]
      %v1155 = vld [vmem:[%s7 + $0x50] sm:$0xff]
      %v1156 = vld [vmem:[%s7 + $0x58] sm:$0xff]
      %v1157 = vld [vmem:[%s7 + $0x60] sm:$0xff]
      %v1158 = vld [vmem:[%s7 + $0x68] sm:$0xff]
      %v1159 = vld [vmem:[%s7 + $0x70] sm:$0xff]
      %v1160 = vld [vmem:[%s7 + $0x78] sm:$0xff]
      %v1161 = vld [vmem:[%s7 + $0x80] sm:$0xff]
      %v1162 = vld [vmem:[%s7 + $0x88] sm:$0xff]
      %v1163 = vld [vmem:[%s7 + $0x90] sm:$0xff]
      %v1164 = vld [vmem:[%s7 + $0x98] sm:$0xff]
      %v1165 = vld [vmem:[%s7 + $0xa0] sm:$0xff]
      %v1166 = vld [vmem:[%s7 + $0xa8] sm:$0xff]
      %v1167 = vld [vmem:[%s7 + $0xb0] sm:$0xff]
      %v1168 = vld [vmem:[%s7 + $0xb8] sm:$0xff]
      %v1169 = vld [vmem:[%s7 + $0xc0] sm:$0xff]
      %v1170 = vld [vmem:[%s7 + $0xc8] sm:$0xff]
      %v1171 = vld [vmem:[%s7 + $0xd0] sm:$0xff]
      %v1172 = vld [vmem:[%s7 + $0xd8] sm:$0xff]
      %v1173 = vld [vmem:[%s7 + $0xe0] sm:$0xff]
      %v1174 = vld [vmem:[%s7 + $0xe8] sm:$0xff]
      %v1175 = vld [vmem:[%s7 + $0xf0] sm:$0xff]
      %v1176 = vld [vmem:[%s7 + $0xf8] sm:$0xff]
      %v1177 = vld [vmem:[%s8] sm:$0x3]
      %v1179 = vperm.slane %v1177, 0
      %v1180 = vperm.slane %v1177, 1
      %1183 = vmatpush.msra.mxu0 %v1175
      %1184 = vmatpush.msra.mxu0 %v1173
      %1185 = vmatpush.msra.mxu0 %v1171
      %1186 = vmatpush.msra.mxu0 %v1169
      %1187 = vmatpush.msra.mxu0 %v1167
      %1188 = vmatpush.msra.mxu0 %v1165
      %1189 = vmatpush.msra.mxu0 %v1163
      %1190 = vmatpush.msra.mxu0 %v1161
      %1191 = vmatpush.msra.mxu0 %v1159
      %1192 = vmatpush.msra.mxu0 %v1157
      %1193 = vmatpush.msra.mxu0 %v1155
      %1194 = vmatpush.msra.mxu0 %v1153
      %1195 = vmatpush.msra.mxu0 %v1151
      %1196 = vmatpush.msra.mxu0 %v1149
      %1197 = vmatpush.msra.mxu0 %v1147
      %1198 = vmatpush.msra.mxu0 %v1145
      %1199 = vmatmul.f32.gmra.mxu0 %v1137
      %v1200 = vpop.f32.mrf.mxu0
      %v1201 = vadd.f32 %v1179, %v1200
      %1202 = vdwg.mxu0
      %1203 = vmatpush.msra.mxu0 %v1176
      %1204 = vmatpush.msra.mxu0 %v1174
      %1205 = vmatpush.msra.mxu0 %v1172
      %1206 = vmatpush.msra.mxu0 %v1170
      %1207 = vmatpush.msra.mxu0 %v1168
      %1208 = vmatpush.msra.mxu0 %v1166
      %1209 = vmatpush.msra.mxu0 %v1164
      %1210 = vmatpush.msra.mxu0 %v1162
      %1211 = vmatpush.msra.mxu0 %v1160
      %1212 = vmatpush.msra.mxu0 %v1158
      %1213 = vmatpush.msra.mxu0 %v1156
      %1214 = vmatpush.msra.mxu0 %v1154
      %1215 = vmatpush.msra.mxu0 %v1152
      %1216 = vmatpush.msra.mxu0 %v1150
      %1217 = vmatpush.msra.mxu0 %v1148
      %1218 = vmatpush.msra.mxu0 %v1146
      %1219 = vmatmul.f32.gmra.mxu0 %v1137
      %v1220 = vpop.f32.mrf.mxu0
      %v1221 = vadd.f32 %v1180, %v1220
      %1222 = vdwg.mxu0
      %v1223 = vlaneseq
      %v1224 = vand.u32 %v1223, 127
      %v1225 = vadd.s32 %v1224, 128
      %vm1226 = vcmp.ge.f32.partialorder %v1201, %v1221
      %v1227 = vsel %vm1226, %v1201, %v1221
      %v1228 = vsel %vm1226, %v1224, %v1225
      %1229 = vmax.index.xlane.f32.xlu0 %v1227
      %v1230 = vpop.xlane.xlu0 %1229
      %1231 = vset.pattern.permute.xlu0 %v1230
      %1232 = vperm.xlu0 %1231, %v1228
      %v1233 = vpop.permute.xlu0 %1232
      %vm1234 = vcmp.eq.s32.totalorder %v1224, %v1233
      %vm1235 = vcmp.eq.s32.totalorder %v1225, %v1233
      %v1236 = vsel %vm1234, 1, 0
      %v1237 = vsel %vm1235, 1, 0
      %v1238 = vcvt.s32.f32 %v1236
      %v1239 = vcvt.s32.f32 %v1237
      %v1240 = vld [vmem:[%s3] sm:$0xff]
      %v1241 = vld [vmem:[%s3 + $0x8] sm:$0xff]
      %v1242 = vld [vmem:[%s3 + $0x10] sm:$0xff]
      %v1243 = vld [vmem:[%s3 + $0x18] sm:$0xff]
      %v1244 = vld [vmem:[%s3 + $0x20] sm:$0xff]
      %v1245 = vld [vmem:[%s3 + $0x28] sm:$0xff]
      %v1246 = vld [vmem:[%s3 + $0x30] sm:$0xff]
      %v1247 = vld [vmem:[%s3 + $0x38] sm:$0xff]
      %v1248 = vld [vmem:[%s3 + $0x40] sm:$0xff]
      %v1249 = vld [vmem:[%s3 + $0x48] sm:$0xff]
      %v1250 = vld [vmem:[%s3 + $0x50] sm:$0xff]
      %v1251 = vld [vmem:[%s3 + $0x58] sm:$0xff]
      %v1252 = vld [vmem:[%s3 + $0x60] sm:$0xff]
      %v1253 = vld [vmem:[%s3 + $0x68] sm:$0xff]
      %v1254 = vld [vmem:[%s3 + $0x70] sm:$0xff]
      %v1255 = vld [vmem:[%s3 + $0x78] sm:$0xff]
      %v1256 = vld [vmem:[%s3 + $0x80] sm:$0xff]
      %v1257 = vld [vmem:[%s3 + $0x88] sm:$0xff]
      %v1258 = vld [vmem:[%s3 + $0x90] sm:$0xff]
      %v1259 = vld [vmem:[%s3 + $0x98] sm:$0xff]
      %v1260 = vld [vmem:[%s3 + $0xa0] sm:$0xff]
      %v1261 = vld [vmem:[%s3 + $0xa8] sm:$0xff]
      %v1262 = vld [vmem:[%s3 + $0xb0] sm:$0xff]
      %v1263 = vld [vmem:[%s3 + $0xb8] sm:$0xff]
      %v1264 = vld [vmem:[%s3 + $0xc0] sm:$0xff]
      %v1265 = vld [vmem:[%s3 + $0xc8] sm:$0xff]
      %v1266 = vld [vmem:[%s3 + $0xd0] sm:$0xff]
      %v1267 = vld [vmem:[%s3 + $0xd8] sm:$0xff]
      %v1268 = vld [vmem:[%s3 + $0xe0] sm:$0xff]
      %v1269 = vld [vmem:[%s3 + $0xe8] sm:$0xff]
      %v1270 = vld [vmem:[%s3 + $0xf0] sm:$0xff]
      %v1271 = vld [vmem:[%s3 + $0xf8] sm:$0xff]
      %1272 = vmatpush.msra.mxu0 %v1255
      %1273 = vmatpush.msra.mxu0 %v1254
      %1274 = vmatpush.msra.mxu0 %v1253
      %1275 = vmatpush.msra.mxu0 %v1252
      %1276 = vmatpush.msra.mxu0 %v1251
      %1277 = vmatpush.msra.mxu0 %v1250
      %1278 = vmatpush.msra.mxu0 %v1249
      %1279 = vmatpush.msra.mxu0 %v1248
      %1280 = vmatpush.msra.mxu0 %v1247
      %1281 = vmatpush.msra.mxu0 %v1246
      %1282 = vmatpush.msra.mxu0 %v1245
      %1283 = vmatpush.msra.mxu0 %v1244
      %1284 = vmatpush.msra.mxu0 %v1243
      %1285 = vmatpush.msra.mxu0 %v1242
      %1286 = vmatpush.msra.mxu0 %v1241
      %1287 = vmatpush.msra.mxu0 %v1240
      %1288 = vmatmul.f32.gmra.mxu0 %v1238
      %v1289 = vpop.f32.mrf.mxu0
      %v1290 = vadd.f32 0.0, %v1289
      %1291 = vdwg.mxu0
      %1292 = vmatpush.msra.mxu0 %v1271
      %1293 = vmatpush.msra.mxu0 %v1270
      %1294 = vmatpush.msra.mxu0 %v1269
      %1295 = vmatpush.msra.mxu0 %v1268
      %1296 = vmatpush.msra.mxu0 %v1267
      %1297 = vmatpush.msra.mxu0 %v1266
      %1298 = vmatpush.msra.mxu0 %v1265
      %1299 = vmatpush.msra.mxu0 %v1264
      %1300 = vmatpush.msra.mxu0 %v1263
      %1301 = vmatpush.msra.mxu0 %v1262
      %1302 = vmatpush.msra.mxu0 %v1261
      %1303 = vmatpush.msra.mxu0 %v1260
      %1304 = vmatpush.msra.mxu0 %v1259
      %1305 = vmatpush.msra.mxu0 %v1258
      %1306 = vmatpush.msra.mxu0 %v1257
      %1307 = vmatpush.msra.mxu0 %v1256
      %1308 = vmatmul.f32.gmra.mxu0 %v1239
      %v1309 = vpop.f32.mrf.mxu0
      %v1310 = vadd.f32 %v1290, %v1309
      %1311 = vdwg.mxu0
      %v1312 = vld [vmem:[#allocation8] sm:$0xff]
      %v1313 = vld [vmem:[#allocation8 + $0x8] sm:$0xff]
      %v1314 = vld [vmem:[#allocation8 + $0x10] sm:$0xff]
      %v1315 = vld [vmem:[#allocation8 + $0x18] sm:$0xff]
      %v1316 = vld [vmem:[#allocation8 + $0x20] sm:$0xff]
      %v1317 = vld [vmem:[#allocation8 + $0x28] sm:$0xff]
      %v1318 = vld [vmem:[#allocation8 + $0x30] sm:$0xff]
      %v1319 = vld [vmem:[#allocation8 + $0x38] sm:$0xff]
      %v1320 = vld [vmem:[#allocation8 + $0x40] sm:$0xff]
      %v1321 = vld [vmem:[#allocation8 + $0x48] sm:$0xff]
      %v1322 = vld [vmem:[#allocation8 + $0x50] sm:$0xff]
      %v1323 = vld [vmem:[#allocation8 + $0x58] sm:$0xff]
      %v1324 = vld [vmem:[#allocation8 + $0x60] sm:$0xff]
      %v1325 = vld [vmem:[#allocation8 + $0x68] sm:$0xff]
      %v1326 = vld [vmem:[#allocation8 + $0x70] sm:$0xff]
      %v1327 = vld [vmem:[#allocation8 + $0x78] sm:$0xff]
      %v1329 = vsel %vm173, %v1310, 0
      %1331 = vmatpush.msra.mxu0 0.0
      %1332 = vmatpush.msra.mxu0 0.0
      %1333 = vmatpush.msra.mxu0 0.0
      %1334 = vmatpush.msra.mxu0 0.0
      %1335 = vmatpush.msra.mxu0 0.0
      %1336 = vmatpush.msra.mxu0 0.0
      %1337 = vmatpush.msra.mxu0 0.0
      %1338 = vmatpush.msra.mxu0 0.0
      %1339 = vmatpush.msra.mxu0 0.0
      %1340 = vmatpush.msra.mxu0 0.0
      %1341 = vmatpush.msra.mxu0 0.0
      %1342 = vmatpush.msra.mxu0 0.0
      %1343 = vmatpush.msra.mxu0 %v1324
      %1344 = vmatpush.msra.mxu0 %v1320
      %1345 = vmatpush.msra.mxu0 %v1316
      %1346 = vmatpush.msra.mxu0 %v1312
      %1347 = vmatmul.f32.gmra.mxu0 %v1329
      %v1348 = vpop.f32.mrf.mxu0
      %v1349 = vadd.f32 0.0, %v1348
      %1350 = vdwg.mxu0
      %1351 = vmatpush.msra.mxu0 0.0
      %1352 = vmatpush.msra.mxu0 0.0
      %1353 = vmatpush.msra.mxu0 0.0
      %1354 = vmatpush.msra.mxu0 0.0
      %1355 = vmatpush.msra.mxu0 0.0
      %1356 = vmatpush.msra.mxu0 0.0
      %1357 = vmatpush.msra.mxu0 0.0
      %1358 = vmatpush.msra.mxu0 0.0
      %1359 = vmatpush.msra.mxu0 0.0
      %1360 = vmatpush.msra.mxu0 0.0
      %1361 = vmatpush.msra.mxu0 0.0
      %1362 = vmatpush.msra.mxu0 0.0
      %1363 = vmatpush.msra.mxu0 %v1325
      %1364 = vmatpush.msra.mxu0 %v1321
      %1365 = vmatpush.msra.mxu0 %v1317
      %1366 = vmatpush.msra.mxu0 %v1313
      %1367 = vmatmul.f32.gmra.mxu0 %v1329
      %v1368 = vpop.f32.mrf.mxu0
      %v1369 = vadd.f32 0.0, %v1368
      %1370 = vdwg.mxu0
      %1371 = vmatpush.msra.mxu0 0.0
      %1372 = vmatpush.msra.mxu0 0.0
      %1373 = vmatpush.msra.mxu0 0.0
      %1374 = vmatpush.msra.mxu0 0.0
      %1375 = vmatpush.msra.mxu0 0.0
      %1376 = vmatpush.msra.mxu0 0.0
      %1377 = vmatpush.msra.mxu0 0.0
      %1378 = vmatpush.msra.mxu0 0.0
      %1379 = vmatpush.msra.mxu0 0.0
      %1380 = vmatpush.msra.mxu0 0.0
      %1381 = vmatpush.msra.mxu0 0.0
      %1382 = vmatpush.msra.mxu0 0.0
      %1383 = vmatpush.msra.mxu0 %v1326
      %1384 = vmatpush.msra.mxu0 %v1322
      %1385 = vmatpush.msra.mxu0 %v1318
      %1386 = vmatpush.msra.mxu0 %v1314
      %1387 = vmatmul.f32.gmra.mxu0 %v1329
      %v1388 = vpop.f32.mrf.mxu0
      %v1389 = vadd.f32 0.0, %v1388
      %1390 = vdwg.mxu0
      %1391 = vmatpush.msra.mxu0 0.0
      %1392 = vmatpush.msra.mxu0 0.0
      %1393 = vmatpush.msra.mxu0 0.0
      %1394 = vmatpush.msra.mxu0 0.0
      %1395 = vmatpush.msra.mxu0 0.0
      %1396 = vmatpush.msra.mxu0 0.0
      %1397 = vmatpush.msra.mxu0 0.0
      %1398 = vmatpush.msra.mxu0 0.0
      %1399 = vmatpush.msra.mxu0 0.0
      %1400 = vmatpush.msra.mxu0 0.0
      %1401 = vmatpush.msra.mxu0 0.0
      %1402 = vmatpush.msra.mxu0 0.0
      %1403 = vmatpush.msra.mxu0 %v1327
      %1404 = vmatpush.msra.mxu0 %v1323
      %1405 = vmatpush.msra.mxu0 %v1319
      %1406 = vmatpush.msra.mxu0 %v1315
      %1407 = vmatmul.f32.gmra.mxu0 %v1329
      %v1408 = vpop.f32.mrf.mxu0
      %v1409 = vadd.f32 0.0, %v1408
      %1410 = vdwg.mxu0
      %s1411 = smul.u32 2, 4
      %s1412 = smul.addr %s1411, 8
      %s1413 = scalar_lea.vmem [#allocation3], %s1412
      %1414 = vst [vmem:[%s1413] sm:$0xff] %v1349
      %1415 = vst [vmem:[%s1413 + $0x8] sm:$0xff] %v1369
      %1416 = vst [vmem:[%s1413 + $0x10] sm:$0xff] %v1389
      %1417 = vst [vmem:[%s1413 + $0x18] sm:$0xff] %v1409
    $region52: #{tpu_custom_call.1} parent=1 // pred_fallthru
      _
    %s1418 = smul.u32 2, 4
    %s1419 = smul.addr %s1418, 8
    %s1420 = scalar_lea.vmem [#allocation3], %s1419
    %v1421 = vld [vmem:[%s1420] sm:$0xff]
    %v1422 = vld [vmem:[%s1420 + $0x8] sm:$0xff]
    %v1423 = vld [vmem:[%s1420 + $0x10] sm:$0xff]
    %v1424 = vld [vmem:[%s1420 + $0x18] sm:$0xff]
    %v1425 = vld [vmem:[#allocation11] sm:$0xff]
    %v1426 = vld [vmem:[#allocation11 + $0x8] sm:$0xff]
    %v1427 = vld [vmem:[#allocation11 + $0x10] sm:$0xff]
    %v1428 = vld [vmem:[#allocation11 + $0x18] sm:$0xff]
    %v1429 = vld [vmem:[#allocation11 + $0x20] sm:$0xff]
    %v1430 = vld [vmem:[#allocation11 + $0x28] sm:$0xff]
    %v1431 = vld [vmem:[#allocation11 + $0x30] sm:$0xff]
    %v1432 = vld [vmem:[#allocation11 + $0x38] sm:$0xff]
    %v1433 = vld [vmem:[#allocation11 + $0x40] sm:$0xff]
    %v1434 = vld [vmem:[#allocation11 + $0x48] sm:$0xff]
    %v1435 = vld [vmem:[#allocation11 + $0x50] sm:$0xff]
    %v1436 = vld [vmem:[#allocation11 + $0x58] sm:$0xff]
    %v1437 = vld [vmem:[#allocation11 + $0x60] sm:$0xff]
    %v1438 = vld [vmem:[#allocation11 + $0x68] sm:$0xff]
    %v1439 = vld [vmem:[#allocation11 + $0x70] sm:$0xff]
    %v1440 = vld [vmem:[#allocation11 + $0x78] sm:$0xff]
    %v1441 = vld [vmem:[#allocation11 + $0x80] sm:$0xff]
    %v1442 = vld [vmem:[#allocation11 + $0x88] sm:$0xff]
    %v1443 = vld [vmem:[#allocation11 + $0x90] sm:$0xff]
    %v1444 = vld [vmem:[#allocation11 + $0x98] sm:$0xff]
    %v1445 = vld [vmem:[#allocation11 + $0xa0] sm:$0xff]
    %v1446 = vld [vmem:[#allocation11 + $0xa8] sm:$0xff]
    %v1447 = vld [vmem:[#allocation11 + $0xb0] sm:$0xff]
    %v1448 = vld [vmem:[#allocation11 + $0xb8] sm:$0xff]
    %v1449 = vld [vmem:[#allocation11 + $0xc0] sm:$0xff]
    %v1450 = vld [vmem:[#allocation11 + $0xc8] sm:$0xff]
    %v1451 = vld [vmem:[#allocation11 + $0xd0] sm:$0xff]
    %v1452 = vld [vmem:[#allocation11 + $0xd8] sm:$0xff]
    %v1453 = vld [vmem:[#allocation11 + $0xe0] sm:$0xff]
    %v1454 = vld [vmem:[#allocation11 + $0xe8] sm:$0xff]
    %v1455 = vld [vmem:[#allocation11 + $0xf0] sm:$0xff]
    %v1456 = vld [vmem:[#allocation11 + $0xf8] sm:$0xff]
    %v1457 = vld [vmem:[#allocation11 + $0x100] sm:$0xff]
    %v1458 = vld [vmem:[#allocation11 + $0x108] sm:$0xff]
    %v1459 = vld [vmem:[#allocation11 + $0x110] sm:$0xff]
    %v1460 = vld [vmem:[#allocation11 + $0x118] sm:$0xff]
    %v1461 = vld [vmem:[#allocation11 + $0x120] sm:$0xff]
    %v1462 = vld [vmem:[#allocation11 + $0x128] sm:$0xff]
    %v1463 = vld [vmem:[#allocation11 + $0x130] sm:$0xff]
    %v1464 = vld [vmem:[#allocation11 + $0x138] sm:$0xff]
    %v1465 = vld [vmem:[#allocation11 + $0x140] sm:$0xff]
    %v1466 = vld [vmem:[#allocation11 + $0x148] sm:$0xff]
    %v1467 = vld [vmem:[#allocation11 + $0x150] sm:$0xff]
    %v1468 = vld [vmem:[#allocation11 + $0x158] sm:$0xff]
    %v1469 = vld [vmem:[#allocation11 + $0x160] sm:$0xff]
    %v1470 = vld [vmem:[#allocation11 + $0x168] sm:$0xff]
    %v1471 = vld [vmem:[#allocation11 + $0x170] sm:$0xff]
    %v1472 = vld [vmem:[#allocation11 + $0x178] sm:$0xff]
    %v1473 = vld [vmem:[#allocation11 + $0x180] sm:$0xff]
    %v1474 = vld [vmem:[#allocation11 + $0x188] sm:$0xff]
    %v1475 = vld [vmem:[#allocation11 + $0x190] sm:$0xff]
    %v1476 = vld [vmem:[#allocation11 + $0x198] sm:$0xff]
    %v1477 = vld [vmem:[#allocation11 + $0x1a0] sm:$0xff]
    %v1478 = vld [vmem:[#allocation11 + $0x1a8] sm:$0xff]
    %v1479 = vld [vmem:[#allocation11 + $0x1b0] sm:$0xff]
    %v1480 = vld [vmem:[#allocation11 + $0x1b8] sm:$0xff]
    %v1481 = vld [vmem:[#allocation11 + $0x1c0] sm:$0xff]
    %v1482 = vld [vmem:[#allocation11 + $0x1c8] sm:$0xff]
    %v1483 = vld [vmem:[#allocation11 + $0x1d0] sm:$0xff]
    %v1484 = vld [vmem:[#allocation11 + $0x1d8] sm:$0xff]
    %v1485 = vld [vmem:[#allocation11 + $0x1e0] sm:$0xff]
    %v1486 = vld [vmem:[#allocation11 + $0x1e8] sm:$0xff]
    %v1487 = vld [vmem:[#allocation11 + $0x1f0] sm:$0xff]
    %v1488 = vld [vmem:[#allocation11 + $0x1f8] sm:$0xff]
    %1489 = vmatpush.msra.mxu0 %v1485
    %1490 = vmatpush.msra.mxu0 %v1481
    %1491 = vmatpush.msra.mxu0 %v1477
    %1492 = vmatpush.msra.mxu0 %v1473
    %1493 = vmatpush.msra.mxu0 %v1469
    %1494 = vmatpush.msra.mxu0 %v1465
    %1495 = vmatpush.msra.mxu0 %v1461
    %1496 = vmatpush.msra.mxu0 %v1457
    %1497 = vmatpush.msra.mxu0 %v1453
    %1498 = vmatpush.msra.mxu0 %v1449
    %1499 = vmatpush.msra.mxu0 %v1445
    %1500 = vmatpush.msra.mxu0 %v1441
    %1501 = vmatpush.msra.mxu0 %v1437
    %1502 = vmatpush.msra.mxu0 %v1433
    %1503 = vmatpush.msra.mxu0 %v1429
    %1504 = vmatpush.msra.mxu0 %v1425
    %1505 = vmatmul.f32.gmra.mxu0 %v1137
    %v1506 = vpop.f32.mrf.mxu0
    %v1507 = vadd.f32 0.0, %v1506
    %1508 = vdwg.mxu0
    %1509 = vmatpush.msra.mxu0 %v1486
    %1510 = vmatpush.msra.mxu0 %v1482
    %1511 = vmatpush.msra.mxu0 %v1478
    %1512 = vmatpush.msra.mxu0 %v1474
    %1513 = vmatpush.msra.mxu0 %v1470
    %1514 = vmatpush.msra.mxu0 %v1466
    %1515 = vmatpush.msra.mxu0 %v1462
    %1516 = vmatpush.msra.mxu0 %v1458
    %1517 = vmatpush.msra.mxu0 %v1454
    %1518 = vmatpush.msra.mxu0 %v1450
    %1519 = vmatpush.msra.mxu0 %v1446
    %1520 = vmatpush.msra.mxu0 %v1442
    %1521 = vmatpush.msra.mxu0 %v1438
    %1522 = vmatpush.msra.mxu0 %v1434
    %1523 = vmatpush.msra.mxu0 %v1430
    %1524 = vmatpush.msra.mxu0 %v1426
    %1525 = vmatmul.f32.gmra.mxu0 %v1137
    %v1526 = vpop.f32.mrf.mxu0
    %v1527 = vadd.f32 0.0, %v1526
    %1528 = vdwg.mxu0
    %1529 = vmatpush.msra.mxu0 %v1487
    %1530 = vmatpush.msra.mxu0 %v1483
    %1531 = vmatpush.msra.mxu0 %v1479
    %1532 = vmatpush.msra.mxu0 %v1475
    %1533 = vmatpush.msra.mxu0 %v1471
    %1534 = vmatpush.msra.mxu0 %v1467
    %1535 = vmatpush.msra.mxu0 %v1463
    %1536 = vmatpush.msra.mxu0 %v1459
    %1537 = vmatpush.msra.mxu0 %v1455
    %1538 = vmatpush.msra.mxu0 %v1451
    %1539 = vmatpush.msra.mxu0 %v1447
    %1540 = vmatpush.msra.mxu0 %v1443
    %1541 = vmatpush.msra.mxu0 %v1439
    %1542 = vmatpush.msra.mxu0 %v1435
    %1543 = vmatpush.msra.mxu0 %v1431
    %1544 = vmatpush.msra.mxu0 %v1427
    %1545 = vmatmul.f32.gmra.mxu0 %v1137
    %v1546 = vpop.f32.mrf.mxu0
    %v1547 = vadd.f32 0.0, %v1546
    %1548 = vdwg.mxu0
    %1549 = vmatpush.msra.mxu0 %v1488
    %1550 = vmatpush.msra.mxu0 %v1484
    %1551 = vmatpush.msra.mxu0 %v1480
    %1552 = vmatpush.msra.mxu0 %v1476
    %1553 = vmatpush.msra.mxu0 %v1472
    %1554 = vmatpush.msra.mxu0 %v1468
    %1555 = vmatpush.msra.mxu0 %v1464
    %1556 = vmatpush.msra.mxu0 %v1460
    %1557 = vmatpush.msra.mxu0 %v1456
    %1558 = vmatpush.msra.mxu0 %v1452
    %1559 = vmatpush.msra.mxu0 %v1448
    %1560 = vmatpush.msra.mxu0 %v1444
    %1561 = vmatpush.msra.mxu0 %v1440
    %1562 = vmatpush.msra.mxu0 %v1436
    %1563 = vmatpush.msra.mxu0 %v1432
    %1564 = vmatpush.msra.mxu0 %v1428
    %1565 = vmatmul.f32.gmra.mxu0 %v1137
    %v1566 = vpop.f32.mrf.mxu0
    %v1567 = vadd.f32 0.0, %v1566
    %1568 = vdwg.mxu0
    %v1569 = vadd.f32 %v1421, %v1507
    %v1570 = vadd.f32 %v1422, %v1527
    %v1571 = vadd.f32 %v1423, %v1547
    %v1572 = vadd.f32 %v1424, %v1567
    %v1573 = vld [vmem:[%s6] sm:$0xf]
    %v1575 = vperm.slane %v1573, 0
    %v1576 = vperm.slane %v1573, 1
    %v1577 = vperm.slane %v1573, 2
    %v1578 = vperm.slane %v1573, 3
    %v1583 = vadd.f32 %v1569, %v1575
    %v1584 = vadd.f32 %v1570, %v1576
    %v1585 = vadd.f32 %v1571, %v1577
    %v1586 = vadd.f32 %v1572, %v1578
    %v1587 = vxor.u32 %v1583, 2147483648
    %v1588 = vxor.u32 %v1584, 2147483648
    %v1589 = vxor.u32 %v1585, 2147483648
    %v1590 = vmul.f32 %v1587, 1.442695
    %v1591 = vpow.pop %v1590
    %v1592 = vmul.f32 %v1588, 1.442695
    %v1593 = vpow.pop %v1592
    %v1594 = vmul.f32 %v1589, 1.442695
    %v1595 = vpow.pop %v1594
    %v1596 = vadd.f32 %v1591, 1.0
    %v1597 = vadd.f32 %v1593, 1.0
    %v1598 = vadd.f32 %v1595, 1.0
    %v1599 = vrcp.pop %v1596
    %v1600 = vmul.f32 %v1596, %v1599
    %v1601 = vsub.f32 1.0, %v1600
    %v1602 = vmul.f32 %v1599, %v1601
    %v1603 = vadd.f32 %v1599, %v1602
    %vm1604 = vweird.f32 %v1596
    %vm1605 = vweird.f32 %v1599
    %vm1606 = vmor %vm1604, %vm1605
    %v1607 = vsel %vm1606, %v1599, %v1603
    %v1608 = vand.u32 2147483647, %v1596
    %vm1609 = vcmp.eq.f32.partialorder %v1608, 8.507059e+37
    %v1610 = vand.u32 %v1596, 2147483648
    %v1611 = vor.u32 1.1754944e-38, %v1610
    %v1612 = vsel %vm1609, %v1611, %v1607
    %v1613 = vmul.f32 1.0, %v1612
    %v1614 = vrcp.pop %v1597
    %v1615 = vmul.f32 %v1597, %v1614
    %v1616 = vsub.f32 1.0, %v1615
    %v1617 = vmul.f32 %v1614, %v1616
    %v1618 = vadd.f32 %v1614, %v1617
    %vm1619 = vweird.f32 %v1597
    %vm1620 = vweird.f32 %v1614
    %vm1621 = vmor %vm1619, %vm1620
    %v1622 = vsel %vm1621, %v1614, %v1618
    %v1623 = vand.u32 2147483647, %v1597
    %vm1624 = vcmp.eq.f32.partialorder %v1623, 8.507059e+37
    %v1625 = vand.u32 %v1597, 2147483648
    %v1626 = vor.u32 1.1754944e-38, %v1625
    %v1627 = vsel %vm1624, %v1626, %v1622
    %v1628 = vmul.f32 1.0, %v1627
    %v1629 = vrcp.pop %v1598
    %v1630 = vmul.f32 %v1598, %v1629
    %v1631 = vsub.f32 1.0, %v1630
    %v1632 = vmul.f32 %v1629, %v1631
    %v1633 = vadd.f32 %v1629, %v1632
    %vm1634 = vweird.f32 %v1598
    %vm1635 = vweird.f32 %v1629
    %vm1636 = vmor %vm1634, %vm1635
    %v1637 = vsel %vm1636, %v1629, %v1633
    %v1638 = vand.u32 2147483647, %v1598
    %vm1639 = vcmp.eq.f32.partialorder %v1638, 8.507059e+37
    %v1640 = vand.u32 %v1598, 2147483648
    %v1641 = vor.u32 1.1754944e-38, %v1640
    %v1642 = vsel %vm1639, %v1641, %v1637
    %v1643 = vmul.f32 1.0, %v1642
    %v1644 = vtanh.pop %v1586
    %v1645 = vmul.f32 %v1628, %v1135
    %v1646 = vmul.f32 %v1613, %v1644
    %v1647 = vadd.f32 %v1645, %v1646
    %v1648 = vtanh.pop %v1647
    %v1649 = vmul.f32 %v1643, %v1648
    %s1650 = scalar_lea.vmem [#allocation4], 16
    %1651 = vst [vmem:[%s1650] sm:$0xff] %v1649
    %s1652 = sld [smem:[#allocation6 + $0x2]]
    %p1653 = scmp.eq.s32.totalorder %s1652, 0
    // Predicated region
    $region53: #{tpu_custom_call.1} parent=1 // pred_check
      %p1654 = pneg %p1653
    $region54: #{tpu_custom_call.1} parent=1 // pred_check_branch
      %1656 = sbr.rel (%p1654) target = $region56
    $region55: #{tpu_custom_call.1} parent=1 // pred_region
      %v1657 = vld [vmem:[%s7] sm:$0xff]
      %v1658 = vld [vmem:[%s7 + $0x8] sm:$0xff]
      %v1659 = vld [vmem:[%s7 + $0x10] sm:$0xff]
      %v1660 = vld [vmem:[%s7 + $0x18] sm:$0xff]
      %v1661 = vld [vmem:[%s7 + $0x20] sm:$0xff]
      %v1662 = vld [vmem:[%s7 + $0x28] sm:$0xff]
      %v1663 = vld [vmem:[%s7 + $0x30] sm:$0xff]
      %v1664 = vld [vmem:[%s7 + $0x38] sm:$0xff]
      %v1665 = vld [vmem:[%s7 + $0x40] sm:$0xff]
      %v1666 = vld [vmem:[%s7 + $0x48] sm:$0xff]
      %v1667 = vld [vmem:[%s7 + $0x50] sm:$0xff]
      %v1668 = vld [vmem:[%s7 + $0x58] sm:$0xff]
      %v1669 = vld [vmem:[%s7 + $0x60] sm:$0xff]
      %v1670 = vld [vmem:[%s7 + $0x68] sm:$0xff]
      %v1671 = vld [vmem:[%s7 + $0x70] sm:$0xff]
      %v1672 = vld [vmem:[%s7 + $0x78] sm:$0xff]
      %v1673 = vld [vmem:[%s7 + $0x80] sm:$0xff]
      %v1674 = vld [vmem:[%s7 + $0x88] sm:$0xff]
      %v1675 = vld [vmem:[%s7 + $0x90] sm:$0xff]
      %v1676 = vld [vmem:[%s7 + $0x98] sm:$0xff]
      %v1677 = vld [vmem:[%s7 + $0xa0] sm:$0xff]
      %v1678 = vld [vmem:[%s7 + $0xa8] sm:$0xff]
      %v1679 = vld [vmem:[%s7 + $0xb0] sm:$0xff]
      %v1680 = vld [vmem:[%s7 + $0xb8] sm:$0xff]
      %v1681 = vld [vmem:[%s7 + $0xc0] sm:$0xff]
      %v1682 = vld [vmem:[%s7 + $0xc8] sm:$0xff]
      %v1683 = vld [vmem:[%s7 + $0xd0] sm:$0xff]
      %v1684 = vld [vmem:[%s7 + $0xd8] sm:$0xff]
      %v1685 = vld [vmem:[%s7 + $0xe0] sm:$0xff]
      %v1686 = vld [vmem:[%s7 + $0xe8] sm:$0xff]
      %v1687 = vld [vmem:[%s7 + $0xf0] sm:$0xff]
      %v1688 = vld [vmem:[%s7 + $0xf8] sm:$0xff]
      %v1689 = vld [vmem:[%s8] sm:$0x3]
      %v1691 = vperm.slane %v1689, 0
      %v1692 = vperm.slane %v1689, 1
      %1695 = vmatpush.msra.mxu0 %v1687
      %1696 = vmatpush.msra.mxu0 %v1685
      %1697 = vmatpush.msra.mxu0 %v1683
      %1698 = vmatpush.msra.mxu0 %v1681
      %1699 = vmatpush.msra.mxu0 %v1679
      %1700 = vmatpush.msra.mxu0 %v1677
      %1701 = vmatpush.msra.mxu0 %v1675
      %1702 = vmatpush.msra.mxu0 %v1673
      %1703 = vmatpush.msra.mxu0 %v1671
      %1704 = vmatpush.msra.mxu0 %v1669
      %1705 = vmatpush.msra.mxu0 %v1667
      %1706 = vmatpush.msra.mxu0 %v1665
      %1707 = vmatpush.msra.mxu0 %v1663
      %1708 = vmatpush.msra.mxu0 %v1661
      %1709 = vmatpush.msra.mxu0 %v1659
      %1710 = vmatpush.msra.mxu0 %v1657
      %1711 = vmatmul.f32.gmra.mxu0 %v1649
      %v1712 = vpop.f32.mrf.mxu0
      %v1713 = vadd.f32 %v1691, %v1712
      %1714 = vdwg.mxu0
      %1715 = vmatpush.msra.mxu0 %v1688
      %1716 = vmatpush.msra.mxu0 %v1686
      %1717 = vmatpush.msra.mxu0 %v1684
      %1718 = vmatpush.msra.mxu0 %v1682
      %1719 = vmatpush.msra.mxu0 %v1680
      %1720 = vmatpush.msra.mxu0 %v1678
      %1721 = vmatpush.msra.mxu0 %v1676
      %1722 = vmatpush.msra.mxu0 %v1674
      %1723 = vmatpush.msra.mxu0 %v1672
      %1724 = vmatpush.msra.mxu0 %v1670
      %1725 = vmatpush.msra.mxu0 %v1668
      %1726 = vmatpush.msra.mxu0 %v1666
      %1727 = vmatpush.msra.mxu0 %v1664
      %1728 = vmatpush.msra.mxu0 %v1662
      %1729 = vmatpush.msra.mxu0 %v1660
      %1730 = vmatpush.msra.mxu0 %v1658
      %1731 = vmatmul.f32.gmra.mxu0 %v1649
      %v1732 = vpop.f32.mrf.mxu0
      %v1733 = vadd.f32 %v1692, %v1732
      %1734 = vdwg.mxu0
      %v1735 = vlaneseq
      %v1736 = vand.u32 %v1735, 127
      %v1737 = vadd.s32 %v1736, 128
      %vm1738 = vcmp.ge.f32.partialorder %v1713, %v1733
      %v1739 = vsel %vm1738, %v1713, %v1733
      %v1740 = vsel %vm1738, %v1736, %v1737
      %1741 = vmax.index.xlane.f32.xlu0 %v1739
      %v1742 = vpop.xlane.xlu0 %1741
      %1743 = vset.pattern.permute.xlu0 %v1742
      %1744 = vperm.xlu0 %1743, %v1740
      %v1745 = vpop.permute.xlu0 %1744
      %vm1746 = vcmp.eq.s32.totalorder %v1736, %v1745
      %vm1747 = vcmp.eq.s32.totalorder %v1737, %v1745
      %v1748 = vsel %vm1746, 1, 0
      %v1749 = vsel %vm1747, 1, 0
      %v1750 = vcvt.s32.f32 %v1748
      %v1751 = vcvt.s32.f32 %v1749
      %v1752 = vld [vmem:[%s3] sm:$0xff]
      %v1753 = vld [vmem:[%s3 + $0x8] sm:$0xff]
      %v1754 = vld [vmem:[%s3 + $0x10] sm:$0xff]
      %v1755 = vld [vmem:[%s3 + $0x18] sm:$0xff]
      %v1756 = vld [vmem:[%s3 + $0x20] sm:$0xff]
      %v1757 = vld [vmem:[%s3 + $0x28] sm:$0xff]
      %v1758 = vld [vmem:[%s3 + $0x30] sm:$0xff]
      %v1759 = vld [vmem:[%s3 + $0x38] sm:$0xff]
      %v1760 = vld [vmem:[%s3 + $0x40] sm:$0xff]
      %v1761 = vld [vmem:[%s3 + $0x48] sm:$0xff]
      %v1762 = vld [vmem:[%s3 + $0x50] sm:$0xff]
      %v1763 = vld [vmem:[%s3 + $0x58] sm:$0xff]
      %v1764 = vld [vmem:[%s3 + $0x60] sm:$0xff]
      %v1765 = vld [vmem:[%s3 + $0x68] sm:$0xff]
      %v1766 = vld [vmem:[%s3 + $0x70] sm:$0xff]
      %v1767 = vld [vmem:[%s3 + $0x78] sm:$0xff]
      %v1768 = vld [vmem:[%s3 + $0x80] sm:$0xff]
      %v1769 = vld [vmem:[%s3 + $0x88] sm:$0xff]
      %v1770 = vld [vmem:[%s3 + $0x90] sm:$0xff]
      %v1771 = vld [vmem:[%s3 + $0x98] sm:$0xff]
      %v1772 = vld [vmem:[%s3 + $0xa0] sm:$0xff]
      %v1773 = vld [vmem:[%s3 + $0xa8] sm:$0xff]
      %v1774 = vld [vmem:[%s3 + $0xb0] sm:$0xff]
      %v1775 = vld [vmem:[%s3 + $0xb8] sm:$0xff]
      %v1776 = vld [vmem:[%s3 + $0xc0] sm:$0xff]
      %v1777 = vld [vmem:[%s3 + $0xc8] sm:$0xff]
      %v1778 = vld [vmem:[%s3 + $0xd0] sm:$0xff]
      %v1779 = vld [vmem:[%s3 + $0xd8] sm:$0xff]
      %v1780 = vld [vmem:[%s3 + $0xe0] sm:$0xff]
      %v1781 = vld [vmem:[%s3 + $0xe8] sm:$0xff]
      %v1782 = vld [vmem:[%s3 + $0xf0] sm:$0xff]
      %v1783 = vld [vmem:[%s3 + $0xf8] sm:$0xff]
      %1784 = vmatpush.msra.mxu0 %v1767
      %1785 = vmatpush.msra.mxu0 %v1766
      %1786 = vmatpush.msra.mxu0 %v1765
      %1787 = vmatpush.msra.mxu0 %v1764
      %1788 = vmatpush.msra.mxu0 %v1763
      %1789 = vmatpush.msra.mxu0 %v1762
      %1790 = vmatpush.msra.mxu0 %v1761
      %1791 = vmatpush.msra.mxu0 %v1760
      %1792 = vmatpush.msra.mxu0 %v1759
      %1793 = vmatpush.msra.mxu0 %v1758
      %1794 = vmatpush.msra.mxu0 %v1757
      %1795 = vmatpush.msra.mxu0 %v1756
      %1796 = vmatpush.msra.mxu0 %v1755
      %1797 = vmatpush.msra.mxu0 %v1754
      %1798 = vmatpush.msra.mxu0 %v1753
      %1799 = vmatpush.msra.mxu0 %v1752
      %1800 = vmatmul.f32.gmra.mxu0 %v1750
      %v1801 = vpop.f32.mrf.mxu0
      %v1802 = vadd.f32 0.0, %v1801
      %1803 = vdwg.mxu0
      %1804 = vmatpush.msra.mxu0 %v1783
      %1805 = vmatpush.msra.mxu0 %v1782
      %1806 = vmatpush.msra.mxu0 %v1781
      %1807 = vmatpush.msra.mxu0 %v1780
      %1808 = vmatpush.msra.mxu0 %v1779
      %1809 = vmatpush.msra.mxu0 %v1778
      %1810 = vmatpush.msra.mxu0 %v1777
      %1811 = vmatpush.msra.mxu0 %v1776
      %1812 = vmatpush.msra.mxu0 %v1775
      %1813 = vmatpush.msra.mxu0 %v1774
      %1814 = vmatpush.msra.mxu0 %v1773
      %1815 = vmatpush.msra.mxu0 %v1772
      %1816 = vmatpush.msra.mxu0 %v1771
      %1817 = vmatpush.msra.mxu0 %v1770
      %1818 = vmatpush.msra.mxu0 %v1769
      %1819 = vmatpush.msra.mxu0 %v1768
      %1820 = vmatmul.f32.gmra.mxu0 %v1751
      %v1821 = vpop.f32.mrf.mxu0
      %v1822 = vadd.f32 %v1802, %v1821
      %1823 = vdwg.mxu0
      %v1824 = vld [vmem:[#allocation8] sm:$0xff]
      %v1825 = vld [vmem:[#allocation8 + $0x8] sm:$0xff]
      %v1826 = vld [vmem:[#allocation8 + $0x10] sm:$0xff]
      %v1827 = vld [vmem:[#allocation8 + $0x18] sm:$0xff]
      %v1828 = vld [vmem:[#allocation8 + $0x20] sm:$0xff]
      %v1829 = vld [vmem:[#allocation8 + $0x28] sm:$0xff]
      %v1830 = vld [vmem:[#allocation8 + $0x30] sm:$0xff]
      %v1831 = vld [vmem:[#allocation8 + $0x38] sm:$0xff]
      %v1832 = vld [vmem:[#allocation8 + $0x40] sm:$0xff]
      %v1833 = vld [vmem:[#allocation8 + $0x48] sm:$0xff]
      %v1834 = vld [vmem:[#allocation8 + $0x50] sm:$0xff]
      %v1835 = vld [vmem:[#allocation8 + $0x58] sm:$0xff]
      %v1836 = vld [vmem:[#allocation8 + $0x60] sm:$0xff]
      %v1837 = vld [vmem:[#allocation8 + $0x68] sm:$0xff]
      %v1838 = vld [vmem:[#allocation8 + $0x70] sm:$0xff]
      %v1839 = vld [vmem:[#allocation8 + $0x78] sm:$0xff]
      %v1841 = vsel %vm173, %v1822, 0
      %1843 = vmatpush.msra.mxu0 0.0
      %1844 = vmatpush.msra.mxu0 0.0
      %1845 = vmatpush.msra.mxu0 0.0
      %1846 = vmatpush.msra.mxu0 0.0
      %1847 = vmatpush.msra.mxu0 0.0
      %1848 = vmatpush.msra.mxu0 0.0
      %1849 = vmatpush.msra.mxu0 0.0
      %1850 = vmatpush.msra.mxu0 0.0
      %1851 = vmatpush.msra.mxu0 0.0
      %1852 = vmatpush.msra.mxu0 0.0
      %1853 = vmatpush.msra.mxu0 0.0
      %1854 = vmatpush.msra.mxu0 0.0
      %1855 = vmatpush.msra.mxu0 %v1836
      %1856 = vmatpush.msra.mxu0 %v1832
      %1857 = vmatpush.msra.mxu0 %v1828
      %1858 = vmatpush.msra.mxu0 %v1824
      %1859 = vmatmul.f32.gmra.mxu0 %v1841
      %v1860 = vpop.f32.mrf.mxu0
      %v1861 = vadd.f32 0.0, %v1860
      %1862 = vdwg.mxu0
      %1863 = vmatpush.msra.mxu0 0.0
      %1864 = vmatpush.msra.mxu0 0.0
      %1865 = vmatpush.msra.mxu0 0.0
      %1866 = vmatpush.msra.mxu0 0.0
      %1867 = vmatpush.msra.mxu0 0.0
      %1868 = vmatpush.msra.mxu0 0.0
      %1869 = vmatpush.msra.mxu0 0.0
      %1870 = vmatpush.msra.mxu0 0.0
      %1871 = vmatpush.msra.mxu0 0.0
      %1872 = vmatpush.msra.mxu0 0.0
      %1873 = vmatpush.msra.mxu0 0.0
      %1874 = vmatpush.msra.mxu0 0.0
      %1875 = vmatpush.msra.mxu0 %v1837
      %1876 = vmatpush.msra.mxu0 %v1833
      %1877 = vmatpush.msra.mxu0 %v1829
      %1878 = vmatpush.msra.mxu0 %v1825
      %1879 = vmatmul.f32.gmra.mxu0 %v1841
      %v1880 = vpop.f32.mrf.mxu0
      %v1881 = vadd.f32 0.0, %v1880
      %1882 = vdwg.mxu0
      %1883 = vmatpush.msra.mxu0 0.0
      %1884 = vmatpush.msra.mxu0 0.0
      %1885 = vmatpush.msra.mxu0 0.0
      %1886 = vmatpush.msra.mxu0 0.0
      %1887 = vmatpush.msra.mxu0 0.0
      %1888 = vmatpush.msra.mxu0 0.0
      %1889 = vmatpush.msra.mxu0 0.0
      %1890 = vmatpush.msra.mxu0 0.0
      %1891 = vmatpush.msra.mxu0 0.0
      %1892 = vmatpush.msra.mxu0 0.0
      %1893 = vmatpush.msra.mxu0 0.0
      %1894 = vmatpush.msra.mxu0 0.0
      %1895 = vmatpush.msra.mxu0 %v1838
      %1896 = vmatpush.msra.mxu0 %v1834
      %1897 = vmatpush.msra.mxu0 %v1830
      %1898 = vmatpush.msra.mxu0 %v1826
      %1899 = vmatmul.f32.gmra.mxu0 %v1841
      %v1900 = vpop.f32.mrf.mxu0
      %v1901 = vadd.f32 0.0, %v1900
      %1902 = vdwg.mxu0
      %1903 = vmatpush.msra.mxu0 0.0
      %1904 = vmatpush.msra.mxu0 0.0
      %1905 = vmatpush.msra.mxu0 0.0
      %1906 = vmatpush.msra.mxu0 0.0
      %1907 = vmatpush.msra.mxu0 0.0
      %1908 = vmatpush.msra.mxu0 0.0
      %1909 = vmatpush.msra.mxu0 0.0
      %1910 = vmatpush.msra.mxu0 0.0
      %1911 = vmatpush.msra.mxu0 0.0
      %1912 = vmatpush.msra.mxu0 0.0
      %1913 = vmatpush.msra.mxu0 0.0
      %1914 = vmatpush.msra.mxu0 0.0
      %1915 = vmatpush.msra.mxu0 %v1839
      %1916 = vmatpush.msra.mxu0 %v1835
      %1917 = vmatpush.msra.mxu0 %v1831
      %1918 = vmatpush.msra.mxu0 %v1827
      %1919 = vmatmul.f32.gmra.mxu0 %v1841
      %v1920 = vpop.f32.mrf.mxu0
      %v1921 = vadd.f32 0.0, %v1920
      %1922 = vdwg.mxu0
      %s1923 = smul.u32 3, 4
      %s1924 = smul.addr %s1923, 8
      %s1925 = scalar_lea.vmem [#allocation3], %s1924
      %1926 = vst [vmem:[%s1925] sm:$0xff] %v1861
      %1927 = vst [vmem:[%s1925 + $0x8] sm:$0xff] %v1881
      %1928 = vst [vmem:[%s1925 + $0x10] sm:$0xff] %v1901
      %1929 = vst [vmem:[%s1925 + $0x18] sm:$0xff] %v1921
    $region56: #{tpu_custom_call.1} parent=1 // pred_fallthru
      _
    %s1930 = smul.u32 3, 4
    %s1931 = smul.addr %s1930, 8
    %s1932 = scalar_lea.vmem [#allocation3], %s1931
    %v1933 = vld [vmem:[%s1932] sm:$0xff]
    %v1934 = vld [vmem:[%s1932 + $0x8] sm:$0xff]
    %v1935 = vld [vmem:[%s1932 + $0x10] sm:$0xff]
    %v1936 = vld [vmem:[%s1932 + $0x18] sm:$0xff]
    %v1937 = vld [vmem:[#allocation11] sm:$0xff]
    %v1938 = vld [vmem:[#allocation11 + $0x8] sm:$0xff]
    %v1939 = vld [vmem:[#allocation11 + $0x10] sm:$0xff]
    %v1940 = vld [vmem:[#allocation11 + $0x18] sm:$0xff]
    %v1941 = vld [vmem:[#allocation11 + $0x20] sm:$0xff]
    %v1942 = vld [vmem:[#allocation11 + $0x28] sm:$0xff]
    %v1943 = vld [vmem:[#allocation11 + $0x30] sm:$0xff]
    %v1944 = vld [vmem:[#allocation11 + $0x38] sm:$0xff]
    %v1945 = vld [vmem:[#allocation11 + $0x40] sm:$0xff]
    %v1946 = vld [vmem:[#allocation11 + $0x48] sm:$0xff]
    %v1947 = vld [vmem:[#allocation11 + $0x50] sm:$0xff]
    %v1948 = vld [vmem:[#allocation11 + $0x58] sm:$0xff]
    %v1949 = vld [vmem:[#allocation11 + $0x60] sm:$0xff]
    %v1950 = vld [vmem:[#allocation11 + $0x68] sm:$0xff]
    %v1951 = vld [vmem:[#allocation11 + $0x70] sm:$0xff]
    %v1952 = vld [vmem:[#allocation11 + $0x78] sm:$0xff]
    %v1953 = vld [vmem:[#allocation11 + $0x80] sm:$0xff]
    %v1954 = vld [vmem:[#allocation11 + $0x88] sm:$0xff]
    %v1955 = vld [vmem:[#allocation11 + $0x90] sm:$0xff]
    %v1956 = vld [vmem:[#allocation11 + $0x98] sm:$0xff]
    %v1957 = vld [vmem:[#allocation11 + $0xa0] sm:$0xff]
    %v1958 = vld [vmem:[#allocation11 + $0xa8] sm:$0xff]
    %v1959 = vld [vmem:[#allocation11 + $0xb0] sm:$0xff]
    %v1960 = vld [vmem:[#allocation11 + $0xb8] sm:$0xff]
    %v1961 = vld [vmem:[#allocation11 + $0xc0] sm:$0xff]
    %v1962 = vld [vmem:[#allocation11 + $0xc8] sm:$0xff]
    %v1963 = vld [vmem:[#allocation11 + $0xd0] sm:$0xff]
    %v1964 = vld [vmem:[#allocation11 + $0xd8] sm:$0xff]
    %v1965 = vld [vmem:[#allocation11 + $0xe0] sm:$0xff]
    %v1966 = vld [vmem:[#allocation11 + $0xe8] sm:$0xff]
    %v1967 = vld [vmem:[#allocation11 + $0xf0] sm:$0xff]
    %v1968 = vld [vmem:[#allocation11 + $0xf8] sm:$0xff]
    %v1969 = vld [vmem:[#allocation11 + $0x100] sm:$0xff]
    %v1970 = vld [vmem:[#allocation11 + $0x108] sm:$0xff]
    %v1971 = vld [vmem:[#allocation11 + $0x110] sm:$0xff]
    %v1972 = vld [vmem:[#allocation11 + $0x118] sm:$0xff]
    %v1973 = vld [vmem:[#allocation11 + $0x120] sm:$0xff]
    %v1974 = vld [vmem:[#allocation11 + $0x128] sm:$0xff]
    %v1975 = vld [vmem:[#allocation11 + $0x130] sm:$0xff]
    %v1976 = vld [vmem:[#allocation11 + $0x138] sm:$0xff]
    %v1977 = vld [vmem:[#allocation11 + $0x140] sm:$0xff]
    %v1978 = vld [vmem:[#allocation11 + $0x148] sm:$0xff]
    %v1979 = vld [vmem:[#allocation11 + $0x150] sm:$0xff]
    %v1980 = vld [vmem:[#allocation11 + $0x158] sm:$0xff]
    %v1981 = vld [vmem:[#allocation11 + $0x160] sm:$0xff]
    %v1982 = vld [vmem:[#allocation11 + $0x168] sm:$0xff]
    %v1983 = vld [vmem:[#allocation11 + $0x170] sm:$0xff]
    %v1984 = vld [vmem:[#allocation11 + $0x178] sm:$0xff]
    %v1985 = vld [vmem:[#allocation11 + $0x180] sm:$0xff]
    %v1986 = vld [vmem:[#allocation11 + $0x188] sm:$0xff]
    %v1987 = vld [vmem:[#allocation11 + $0x190] sm:$0xff]
    %v1988 = vld [vmem:[#allocation11 + $0x198] sm:$0xff]
    %v1989 = vld [vmem:[#allocation11 + $0x1a0] sm:$0xff]
    %v1990 = vld [vmem:[#allocation11 + $0x1a8] sm:$0xff]
    %v1991 = vld [vmem:[#allocation11 + $0x1b0] sm:$0xff]
    %v1992 = vld [vmem:[#allocation11 + $0x1b8] sm:$0xff]
    %v1993 = vld [vmem:[#allocation11 + $0x1c0] sm:$0xff]
    %v1994 = vld [vmem:[#allocation11 + $0x1c8] sm:$0xff]
    %v1995 = vld [vmem:[#allocation11 + $0x1d0] sm:$0xff]
    %v1996 = vld [vmem:[#allocation11 + $0x1d8] sm:$0xff]
    %v1997 = vld [vmem:[#allocation11 + $0x1e0] sm:$0xff]
    %v1998 = vld [vmem:[#allocation11 + $0x1e8] sm:$0xff]
    %v1999 = vld [vmem:[#allocation11 + $0x1f0] sm:$0xff]
    %v2000 = vld [vmem:[#allocation11 + $0x1f8] sm:$0xff]
    %2001 = vmatpush.msra.mxu0 %v1997
    %2002 = vmatpush.msra.mxu0 %v1993
    %2003 = vmatpush.msra.mxu0 %v1989
    %2004 = vmatpush.msra.mxu0 %v1985
    %2005 = vmatpush.msra.mxu0 %v1981
    %2006 = vmatpush.msra.mxu0 %v1977
    %2007 = vmatpush.msra.mxu0 %v1973
    %2008 = vmatpush.msra.mxu0 %v1969
    %2009 = vmatpush.msra.mxu0 %v1965
    %2010 = vmatpush.msra.mxu0 %v1961
    %2011 = vmatpush.msra.mxu0 %v1957
    %2012 = vmatpush.msra.mxu0 %v1953
    %2013 = vmatpush.msra.mxu0 %v1949
    %2014 = vmatpush.msra.mxu0 %v1945
    %2015 = vmatpush.msra.mxu0 %v1941
    %2016 = vmatpush.msra.mxu0 %v1937
    %2017 = vmatmul.f32.gmra.mxu0 %v1649
    %v2018 = vpop.f32.mrf.mxu0
    %v2019 = vadd.f32 0.0, %v2018
    %2020 = vdwg.mxu0
    %2021 = vmatpush.msra.mxu0 %v1998
    %2022 = vmatpush.msra.mxu0 %v1994
    %2023 = vmatpush.msra.mxu0 %v1990
    %2024 = vmatpush.msra.mxu0 %v1986
    %2025 = vmatpush.msra.mxu0 %v1982
    %2026 = vmatpush.msra.mxu0 %v1978
    %2027 = vmatpush.msra.mxu0 %v1974
    %2028 = vmatpush.msra.mxu0 %v1970
    %2029 = vmatpush.msra.mxu0 %v1966
    %2030 = vmatpush.msra.mxu0 %v1962
    %2031 = vmatpush.msra.mxu0 %v1958
    %2032 = vmatpush.msra.mxu0 %v1954
    %2033 = vmatpush.msra.mxu0 %v1950
    %2034 = vmatpush.msra.mxu0 %v1946
    %2035 = vmatpush.msra.mxu0 %v1942
    %2036 = vmatpush.msra.mxu0 %v1938
    %2037 = vmatmul.f32.gmra.mxu0 %v1649
    %v2038 = vpop.f32.mrf.mxu0
    %v2039 = vadd.f32 0.0, %v2038
    %2040 = vdwg.mxu0
    %2041 = vmatpush.msra.mxu0 %v1999
    %2042 = vmatpush.msra.mxu0 %v1995
    %2043 = vmatpush.msra.mxu0 %v1991
    %2044 = vmatpush.msra.mxu0 %v1987
    %2045 = vmatpush.msra.mxu0 %v1983
    %2046 = vmatpush.msra.mxu0 %v1979
    %2047 = vmatpush.msra.mxu0 %v1975
    %2048 = vmatpush.msra.mxu0 %v1971
    %2049 = vmatpush.msra.mxu0 %v1967
    %2050 = vmatpush.msra.mxu0 %v1963
    %2051 = vmatpush.msra.mxu0 %v1959
    %2052 = vmatpush.msra.mxu0 %v1955
    %2053 = vmatpush.msra.mxu0 %v1951
    %2054 = vmatpush.msra.mxu0 %v1947
    %2055 = vmatpush.msra.mxu0 %v1943
    %2056 = vmatpush.msra.mxu0 %v1939
    %2057 = vmatmul.f32.gmra.mxu0 %v1649
    %v2058 = vpop.f32.mrf.mxu0
    %v2059 = vadd.f32 0.0, %v2058
    %2060 = vdwg.mxu0
    %2061 = vmatpush.msra.mxu0 %v2000
    %2062 = vmatpush.msra.mxu0 %v1996
    %2063 = vmatpush.msra.mxu0 %v1992
    %2064 = vmatpush.msra.mxu0 %v1988
    %2065 = vmatpush.msra.mxu0 %v1984
    %2066 = vmatpush.msra.mxu0 %v1980
    %2067 = vmatpush.msra.mxu0 %v1976
    %2068 = vmatpush.msra.mxu0 %v1972
    %2069 = vmatpush.msra.mxu0 %v1968
    %2070 = vmatpush.msra.mxu0 %v1964
    %2071 = vmatpush.msra.mxu0 %v1960
    %2072 = vmatpush.msra.mxu0 %v1956
    %2073 = vmatpush.msra.mxu0 %v1952
    %2074 = vmatpush.msra.mxu0 %v1948
    %2075 = vmatpush.msra.mxu0 %v1944
    %2076 = vmatpush.msra.mxu0 %v1940
    %2077 = vmatmul.f32.gmra.mxu0 %v1649
    %v2078 = vpop.f32.mrf.mxu0
    %v2079 = vadd.f32 0.0, %v2078
    %2080 = vdwg.mxu0
    %v2081 = vadd.f32 %v1933, %v2019
    %v2082 = vadd.f32 %v1934, %v2039
    %v2083 = vadd.f32 %v1935, %v2059
    %v2084 = vadd.f32 %v1936, %v2079
    %v2085 = vld [vmem:[%s6] sm:$0xf]
    %v2087 = vperm.slane %v2085, 0
    %v2088 = vperm.slane %v2085, 1
    %v2089 = vperm.slane %v2085, 2
    %v2090 = vperm.slane %v2085, 3
    %v2095 = vadd.f32 %v2081, %v2087
    %v2096 = vadd.f32 %v2082, %v2088
    %v2097 = vadd.f32 %v2083, %v2089
    %v2098 = vadd.f32 %v2084, %v2090
    %v2099 = vxor.u32 %v2095, 2147483648
    %v2100 = vxor.u32 %v2096, 2147483648
    %v2101 = vxor.u32 %v2097, 2147483648
    %v2102 = vmul.f32 %v2099, 1.442695
    %v2103 = vpow.pop %v2102
    %v2104 = vmul.f32 %v2100, 1.442695
    %v2105 = vpow.pop %v2104
    %v2106 = vmul.f32 %v2101, 1.442695
    %v2107 = vpow.pop %v2106
    %v2108 = vadd.f32 %v2103, 1.0
    %v2109 = vadd.f32 %v2105, 1.0
    %v2110 = vadd.f32 %v2107, 1.0
    %v2111 = vrcp.pop %v2108
    %v2112 = vmul.f32 %v2108, %v2111
    %v2113 = vsub.f32 1.0, %v2112
    %v2114 = vmul.f32 %v2111, %v2113
    %v2115 = vadd.f32 %v2111, %v2114
    %vm2116 = vweird.f32 %v2108
    %vm2117 = vweird.f32 %v2111
    %vm2118 = vmor %vm2116, %vm2117
    %v2119 = vsel %vm2118, %v2111, %v2115
    %v2120 = vand.u32 2147483647, %v2108
    %vm2121 = vcmp.eq.f32.partialorder %v2120, 8.507059e+37
    %v2122 = vand.u32 %v2108, 2147483648
    %v2123 = vor.u32 1.1754944e-38, %v2122
    %v2124 = vsel %vm2121, %v2123, %v2119
    %v2125 = vmul.f32 1.0, %v2124
    %v2126 = vrcp.pop %v2109
    %v2127 = vmul.f32 %v2109, %v2126
    %v2128 = vsub.f32 1.0, %v2127
    %v2129 = vmul.f32 %v2126, %v2128
    %v2130 = vadd.f32 %v2126, %v2129
    %vm2131 = vweird.f32 %v2109
    %vm2132 = vweird.f32 %v2126
    %vm2133 = vmor %vm2131, %vm2132
    %v2134 = vsel %vm2133, %v2126, %v2130
    %v2135 = vand.u32 2147483647, %v2109
    %vm2136 = vcmp.eq.f32.partialorder %v2135, 8.507059e+37
    %v2137 = vand.u32 %v2109, 2147483648
    %v2138 = vor.u32 1.1754944e-38, %v2137
    %v2139 = vsel %vm2136, %v2138, %v2134
    %v2140 = vmul.f32 1.0, %v2139
    %v2141 = vrcp.pop %v2110
    %v2142 = vmul.f32 %v2110, %v2141
    %v2143 = vsub.f32 1.0, %v2142
    %v2144 = vmul.f32 %v2141, %v2143
    %v2145 = vadd.f32 %v2141, %v2144
    %vm2146 = vweird.f32 %v2110
    %vm2147 = vweird.f32 %v2141
    %vm2148 = vmor %vm2146, %vm2147
    %v2149 = vsel %vm2148, %v2141, %v2145
    %v2150 = vand.u32 2147483647, %v2110
    %vm2151 = vcmp.eq.f32.partialorder %v2150, 8.507059e+37
    %v2152 = vand.u32 %v2110, 2147483648
    %v2153 = vor.u32 1.1754944e-38, %v2152
    %v2154 = vsel %vm2151, %v2153, %v2149
    %v2155 = vmul.f32 1.0, %v2154
    %v2156 = vtanh.pop %v2098
    %v2157 = vmul.f32 %v2140, %v1647
    %v2158 = vmul.f32 %v2125, %v2156
    %v2159 = vadd.f32 %v2157, %v2158
    %v2160 = vtanh.pop %v2159
    %v2161 = vmul.f32 %v2155, %v2160
    %s2162 = scalar_lea.vmem [#allocation4], 24
    %2163 = vst [vmem:[%s2162] sm:$0xff] %v2161
    %s2164 = sld [smem:[#allocation6 + $0x3]]
    %p2165 = scmp.eq.s32.totalorder %s2164, 0
    // Predicated region
    $region57: #{tpu_custom_call.1} parent=1 // pred_check
      %p2166 = pneg %p2165
    $region58: #{tpu_custom_call.1} parent=1 // pred_check_branch
      %2168 = sbr.rel (%p2166) target = $region60
    $region59: #{tpu_custom_call.1} parent=1 // pred_region
      %v2169 = vld [vmem:[%s7] sm:$0xff]
      %v2170 = vld [vmem:[%s7 + $0x8] sm:$0xff]
      %v2171 = vld [vmem:[%s7 + $0x10] sm:$0xff]
      %v2172 = vld [vmem:[%s7 + $0x18] sm:$0xff]
      %v2173 = vld [vmem:[%s7 + $0x20] sm:$0xff]
      %v2174 = vld [vmem:[%s7 + $0x28] sm:$0xff]
      %v2175 = vld [vmem:[%s7 + $0x30] sm:$0xff]
      %v2176 = vld [vmem:[%s7 + $0x38] sm:$0xff]
      %v2177 = vld [vmem:[%s7 + $0x40] sm:$0xff]
      %v2178 = vld [vmem:[%s7 + $0x48] sm:$0xff]
      %v2179 = vld [vmem:[%s7 + $0x50] sm:$0xff]
      %v2180 = vld [vmem:[%s7 + $0x58] sm:$0xff]
      %v2181 = vld [vmem:[%s7 + $0x60] sm:$0xff]
      %v2182 = vld [vmem:[%s7 + $0x68] sm:$0xff]
      %v2183 = vld [vmem:[%s7 + $0x70] sm:$0xff]
      %v2184 = vld [vmem:[%s7 + $0x78] sm:$0xff]
      %v2185 = vld [vmem:[%s7 + $0x80] sm:$0xff]
      %v2186 = vld [vmem:[%s7 + $0x88] sm:$0xff]
      %v2187 = vld [vmem:[%s7 + $0x90] sm:$0xff]
      %v2188 = vld [vmem:[%s7 + $0x98] sm:$0xff]
      %v2189 = vld [vmem:[%s7 + $0xa0] sm:$0xff]
      %v2190 = vld [vmem:[%s7 + $0xa8] sm:$0xff]
      %v2191 = vld [vmem:[%s7 + $0xb0] sm:$0xff]
      %v2192 = vld [vmem:[%s7 + $0xb8] sm:$0xff]
      %v2193 = vld [vmem:[%s7 + $0xc0] sm:$0xff]
      %v2194 = vld [vmem:[%s7 + $0xc8] sm:$0xff]
      %v2195 = vld [vmem:[%s7 + $0xd0] sm:$0xff]
      %v2196 = vld [vmem:[%s7 + $0xd8] sm:$0xff]
      %v2197 = vld [vmem:[%s7 + $0xe0] sm:$0xff]
      %v2198 = vld [vmem:[%s7 + $0xe8] sm:$0xff]
      %v2199 = vld [vmem:[%s7 + $0xf0] sm:$0xff]
      %v2200 = vld [vmem:[%s7 + $0xf8] sm:$0xff]
      %v2201 = vld [vmem:[%s8] sm:$0x3]
      %v2203 = vperm.slane %v2201, 0
      %v2204 = vperm.slane %v2201, 1
      %2207 = vmatpush.msra.mxu0 %v2199
      %2208 = vmatpush.msra.mxu0 %v2197
      %2209 = vmatpush.msra.mxu0 %v2195
      %2210 = vmatpush.msra.mxu0 %v2193
      %2211 = vmatpush.msra.mxu0 %v2191
      %2212 = vmatpush.msra.mxu0 %v2189
      %2213 = vmatpush.msra.mxu0 %v2187
      %2214 = vmatpush.msra.mxu0 %v2185
      %2215 = vmatpush.msra.mxu0 %v2183
      %2216 = vmatpush.msra.mxu0 %v2181
      %2217 = vmatpush.msra.mxu0 %v2179
      %2218 = vmatpush.msra.mxu0 %v2177
      %2219 = vmatpush.msra.mxu0 %v2175
      %2220 = vmatpush.msra.mxu0 %v2173
      %2221 = vmatpush.msra.mxu0 %v2171
      %2222 = vmatpush.msra.mxu0 %v2169
      %2223 = vmatmul.f32.gmra.mxu0 %v2161
      %v2224 = vpop.f32.mrf.mxu0
      %v2225 = vadd.f32 %v2203, %v2224
      %2226 = vdwg.mxu0
      %2227 = vmatpush.msra.mxu0 %v2200
      %2228 = vmatpush.msra.mxu0 %v2198
      %2229 = vmatpush.msra.mxu0 %v2196
      %2230 = vmatpush.msra.mxu0 %v2194
      %2231 = vmatpush.msra.mxu0 %v2192
      %2232 = vmatpush.msra.mxu0 %v2190
      %2233 = vmatpush.msra.mxu0 %v2188
      %2234 = vmatpush.msra.mxu0 %v2186
      %2235 = vmatpush.msra.mxu0 %v2184
      %2236 = vmatpush.msra.mxu0 %v2182
      %2237 = vmatpush.msra.mxu0 %v2180
      %2238 = vmatpush.msra.mxu0 %v2178
      %2239 = vmatpush.msra.mxu0 %v2176
      %2240 = vmatpush.msra.mxu0 %v2174
      %2241 = vmatpush.msra.mxu0 %v2172
      %2242 = vmatpush.msra.mxu0 %v2170
      %2243 = vmatmul.f32.gmra.mxu0 %v2161
      %v2244 = vpop.f32.mrf.mxu0
      %v2245 = vadd.f32 %v2204, %v2244
      %2246 = vdwg.mxu0
      %v2247 = vlaneseq
      %v2248 = vand.u32 %v2247, 127
      %v2249 = vadd.s32 %v2248, 128
      %vm2250 = vcmp.ge.f32.partialorder %v2225, %v2245
      %v2251 = vsel %vm2250, %v2225, %v2245
      %v2252 = vsel %vm2250, %v2248, %v2249
      %2253 = vmax.index.xlane.f32.xlu0 %v2251
      %v2254 = vpop.xlane.xlu0 %2253
      %2255 = vset.pattern.permute.xlu0 %v2254
      %2256 = vperm.xlu0 %2255, %v2252
      %v2257 = vpop.permute.xlu0 %2256
      %vm2258 = vcmp.eq.s32.totalorder %v2248, %v2257
      %vm2259 = vcmp.eq.s32.totalorder %v2249, %v2257
      %v2260 = vsel %vm2258, 1, 0
      %v2261 = vsel %vm2259, 1, 0
      %v2262 = vcvt.s32.f32 %v2260
      %v2263 = vcvt.s32.f32 %v2261
      %v2264 = vld [vmem:[%s3] sm:$0xff]
      %v2265 = vld [vmem:[%s3 + $0x8] sm:$0xff]
      %v2266 = vld [vmem:[%s3 + $0x10] sm:$0xff]
      %v2267 = vld [vmem:[%s3 + $0x18] sm:$0xff]
      %v2268 = vld [vmem:[%s3 + $0x20] sm:$0xff]
      %v2269 = vld [vmem:[%s3 + $0x28] sm:$0xff]
      %v2270 = vld [vmem:[%s3 + $0x30] sm:$0xff]
      %v2271 = vld [vmem:[%s3 + $0x38] sm:$0xff]
      %v2272 = vld [vmem:[%s3 + $0x40] sm:$0xff]
      %v2273 = vld [vmem:[%s3 + $0x48] sm:$0xff]
      %v2274 = vld [vmem:[%s3 + $0x50] sm:$0xff]
      %v2275 = vld [vmem:[%s3 + $0x58] sm:$0xff]
      %v2276 = vld [vmem:[%s3 + $0x60] sm:$0xff]
      %v2277 = vld [vmem:[%s3 + $0x68] sm:$0xff]
      %v2278 = vld [vmem:[%s3 + $0x70] sm:$0xff]
      %v2279 = vld [vmem:[%s3 + $0x78] sm:$0xff]
      %v2280 = vld [vmem:[%s3 + $0x80] sm:$0xff]
      %v2281 = vld [vmem:[%s3 + $0x88] sm:$0xff]
      %v2282 = vld [vmem:[%s3 + $0x90] sm:$0xff]
      %v2283 = vld [vmem:[%s3 + $0x98] sm:$0xff]
      %v2284 = vld [vmem:[%s3 + $0xa0] sm:$0xff]
      %v2285 = vld [vmem:[%s3 + $0xa8] sm:$0xff]
      %v2286 = vld [vmem:[%s3 + $0xb0] sm:$0xff]
      %v2287 = vld [vmem:[%s3 + $0xb8] sm:$0xff]
      %v2288 = vld [vmem:[%s3 + $0xc0] sm:$0xff]
      %v2289 = vld [vmem:[%s3 + $0xc8] sm:$0xff]
      %v2290 = vld [vmem:[%s3 + $0xd0] sm:$0xff]
      %v2291 = vld [vmem:[%s3 + $0xd8] sm:$0xff]
      %v2292 = vld [vmem:[%s3 + $0xe0] sm:$0xff]
      %v2293 = vld [vmem:[%s3 + $0xe8] sm:$0xff]
      %v2294 = vld [vmem:[%s3 + $0xf0] sm:$0xff]
      %v2295 = vld [vmem:[%s3 + $0xf8] sm:$0xff]
      %2296 = vmatpush.msra.mxu0 %v2279
      %2297 = vmatpush.msra.mxu0 %v2278
      %2298 = vmatpush.msra.mxu0 %v2277
      %2299 = vmatpush.msra.mxu0 %v2276
      %2300 = vmatpush.msra.mxu0 %v2275
      %2301 = vmatpush.msra.mxu0 %v2274
      %2302 = vmatpush.msra.mxu0 %v2273
      %2303 = vmatpush.msra.mxu0 %v2272
      %2304 = vmatpush.msra.mxu0 %v2271
      %2305 = vmatpush.msra.mxu0 %v2270
      %2306 = vmatpush.msra.mxu0 %v2269
      %2307 = vmatpush.msra.mxu0 %v2268
      %2308 = vmatpush.msra.mxu0 %v2267
      %2309 = vmatpush.msra.mxu0 %v2266
      %2310 = vmatpush.msra.mxu0 %v2265
      %2311 = vmatpush.msra.mxu0 %v2264
      %2312 = vmatmul.f32.gmra.mxu0 %v2262
      %v2313 = vpop.f32.mrf.mxu0
      %v2314 = vadd.f32 0.0, %v2313
      %2315 = vdwg.mxu0
      %2316 = vmatpush.msra.mxu0 %v2295
      %2317 = vmatpush.msra.mxu0 %v2294
      %2318 = vmatpush.msra.mxu0 %v2293
      %2319 = vmatpush.msra.mxu0 %v2292
      %2320 = vmatpush.msra.mxu0 %v2291
      %2321 = vmatpush.msra.mxu0 %v2290
      %2322 = vmatpush.msra.mxu0 %v2289
      %2323 = vmatpush.msra.mxu0 %v2288
      %2324 = vmatpush.msra.mxu0 %v2287
      %2325 = vmatpush.msra.mxu0 %v2286
      %2326 = vmatpush.msra.mxu0 %v2285
      %2327 = vmatpush.msra.mxu0 %v2284
      %2328 = vmatpush.msra.mxu0 %v2283
      %2329 = vmatpush.msra.mxu0 %v2282
      %2330 = vmatpush.msra.mxu0 %v2281
      %2331 = vmatpush.msra.mxu0 %v2280
      %2332 = vmatmul.f32.gmra.mxu0 %v2263
      %v2333 = vpop.f32.mrf.mxu0
      %v2334 = vadd.f32 %v2314, %v2333
      %2335 = vdwg.mxu0
      %v2336 = vld [vmem:[#allocation8] sm:$0xff]
      %v2337 = vld [vmem:[#allocation8 + $0x8] sm:$0xff]
      %v2338 = vld [vmem:[#allocation8 + $0x10] sm:$0xff]
      %v2339 = vld [vmem:[#allocation8 + $0x18] sm:$0xff]
      %v2340 = vld [vmem:[#allocation8 + $0x20] sm:$0xff]
      %v2341 = vld [vmem:[#allocation8 + $0x28] sm:$0xff]
      %v2342 = vld [vmem:[#allocation8 + $0x30] sm:$0xff]
      %v2343 = vld [vmem:[#allocation8 + $0x38] sm:$0xff]
      %v2344 = vld [vmem:[#allocation8 + $0x40] sm:$0xff]
      %v2345 = vld [vmem:[#allocation8 + $0x48] sm:$0xff]
      %v2346 = vld [vmem:[#allocation8 + $0x50] sm:$0xff]
      %v2347 = vld [vmem:[#allocation8 + $0x58] sm:$0xff]
      %v2348 = vld [vmem:[#allocation8 + $0x60] sm:$0xff]
      %v2349 = vld [vmem:[#allocation8 + $0x68] sm:$0xff]
      %v2350 = vld [vmem:[#allocation8 + $0x70] sm:$0xff]
      %v2351 = vld [vmem:[#allocation8 + $0x78] sm:$0xff]
      %v2353 = vsel %vm173, %v2334, 0
      %2355 = vmatpush.msra.mxu0 0.0
      %2356 = vmatpush.msra.mxu0 0.0
      %2357 = vmatpush.msra.mxu0 0.0
      %2358 = vmatpush.msra.mxu0 0.0
      %2359 = vmatpush.msra.mxu0 0.0
      %2360 = vmatpush.msra.mxu0 0.0
      %2361 = vmatpush.msra.mxu0 0.0
      %2362 = vmatpush.msra.mxu0 0.0
      %2363 = vmatpush.msra.mxu0 0.0
      %2364 = vmatpush.msra.mxu0 0.0
      %2365 = vmatpush.msra.mxu0 0.0
      %2366 = vmatpush.msra.mxu0 0.0
      %2367 = vmatpush.msra.mxu0 %v2348
      %2368 = vmatpush.msra.mxu0 %v2344
      %2369 = vmatpush.msra.mxu0 %v2340
      %2370 = vmatpush.msra.mxu0 %v2336
      %2371 = vmatmul.f32.gmra.mxu0 %v2353
      %v2372 = vpop.f32.mrf.mxu0
      %v2373 = vadd.f32 0.0, %v2372
      %2374 = vdwg.mxu0
      %2375 = vmatpush.msra.mxu0 0.0
      %2376 = vmatpush.msra.mxu0 0.0
      %2377 = vmatpush.msra.mxu0 0.0
      %2378 = vmatpush.msra.mxu0 0.0
      %2379 = vmatpush.msra.mxu0 0.0
      %2380 = vmatpush.msra.mxu0 0.0
      %2381 = vmatpush.msra.mxu0 0.0
      %2382 = vmatpush.msra.mxu0 0.0
      %2383 = vmatpush.msra.mxu0 0.0
      %2384 = vmatpush.msra.mxu0 0.0
      %2385 = vmatpush.msra.mxu0 0.0
      %2386 = vmatpush.msra.mxu0 0.0
      %2387 = vmatpush.msra.mxu0 %v2349
      %2388 = vmatpush.msra.mxu0 %v2345
      %2389 = vmatpush.msra.mxu0 %v2341
      %2390 = vmatpush.msra.mxu0 %v2337
      %2391 = vmatmul.f32.gmra.mxu0 %v2353
      %v2392 = vpop.f32.mrf.mxu0
      %v2393 = vadd.f32 0.0, %v2392
      %2394 = vdwg.mxu0
      %2395 = vmatpush.msra.mxu0 0.0
      %2396 = vmatpush.msra.mxu0 0.0
      %2397 = vmatpush.msra.mxu0 0.0
      %2398 = vmatpush.msra.mxu0 0.0
      %2399 = vmatpush.msra.mxu0 0.0
      %2400 = vmatpush.msra.mxu0 0.0
      %2401 = vmatpush.msra.mxu0 0.0
      %2402 = vmatpush.msra.mxu0 0.0
      %2403 = vmatpush.msra.mxu0 0.0
      %2404 = vmatpush.msra.mxu0 0.0
      %2405 = vmatpush.msra.mxu0 0.0
      %2406 = vmatpush.msra.mxu0 0.0
      %2407 = vmatpush.msra.mxu0 %v2350
      %2408 = vmatpush.msra.mxu0 %v2346
      %2409 = vmatpush.msra.mxu0 %v2342
      %2410 = vmatpush.msra.mxu0 %v2338
      %2411 = vmatmul.f32.gmra.mxu0 %v2353
      %v2412 = vpop.f32.mrf.mxu0
      %v2413 = vadd.f32 0.0, %v2412
      %2414 = vdwg.mxu0
      %2415 = vmatpush.msra.mxu0 0.0
      %2416 = vmatpush.msra.mxu0 0.0
      %2417 = vmatpush.msra.mxu0 0.0
      %2418 = vmatpush.msra.mxu0 0.0
      %2419 = vmatpush.msra.mxu0 0.0
      %2420 = vmatpush.msra.mxu0 0.0
      %2421 = vmatpush.msra.mxu0 0.0
      %2422 = vmatpush.msra.mxu0 0.0
      %2423 = vmatpush.msra.mxu0 0.0
      %2424 = vmatpush.msra.mxu0 0.0
      %2425 = vmatpush.msra.mxu0 0.0
      %2426 = vmatpush.msra.mxu0 0.0
      %2427 = vmatpush.msra.mxu0 %v2351
      %2428 = vmatpush.msra.mxu0 %v2347
      %2429 = vmatpush.msra.mxu0 %v2343
      %2430 = vmatpush.msra.mxu0 %v2339
      %2431 = vmatmul.f32.gmra.mxu0 %v2353
      %v2432 = vpop.f32.mrf.mxu0
      %v2433 = vadd.f32 0.0, %v2432
      %2434 = vdwg.mxu0
      %s2435 = smul.u32 4, 4
      %s2436 = smul.addr %s2435, 8
      %s2437 = scalar_lea.vmem [#allocation3], %s2436
      %2438 = vst [vmem:[%s2437] sm:$0xff] %v2373
      %2439 = vst [vmem:[%s2437 + $0x8] sm:$0xff] %v2393
      %2440 = vst [vmem:[%s2437 + $0x10] sm:$0xff] %v2413
      %2441 = vst [vmem:[%s2437 + $0x18] sm:$0xff] %v2433
    $region60: #{tpu_custom_call.1} parent=1 // pred_fallthru
      _
    %s2442 = smul.u32 4, 4
    %s2443 = smul.addr %s2442, 8
    %s2444 = scalar_lea.vmem [#allocation3], %s2443
    %v2445 = vld [vmem:[%s2444] sm:$0xff]
    %v2446 = vld [vmem:[%s2444 + $0x8] sm:$0xff]
    %v2447 = vld [vmem:[%s2444 + $0x10] sm:$0xff]
    %v2448 = vld [vmem:[%s2444 + $0x18] sm:$0xff]
    %v2449 = vld [vmem:[#allocation11] sm:$0xff]
    %v2450 = vld [vmem:[#allocation11 + $0x8] sm:$0xff]
    %v2451 = vld [vmem:[#allocation11 + $0x10] sm:$0xff]
    %v2452 = vld [vmem:[#allocation11 + $0x18] sm:$0xff]
    %v2453 = vld [vmem:[#allocation11 + $0x20] sm:$0xff]
    %v2454 = vld [vmem:[#allocation11 + $0x28] sm:$0xff]
    %v2455 = vld [vmem:[#allocation11 + $0x30] sm:$0xff]
    %v2456 = vld [vmem:[#allocation11 + $0x38] sm:$0xff]
    %v2457 = vld [vmem:[#allocation11 + $0x40] sm:$0xff]
    %v2458 = vld [vmem:[#allocation11 + $0x48] sm:$0xff]
    %v2459 = vld [vmem:[#allocation11 + $0x50] sm:$0xff]
    %v2460 = vld [vmem:[#allocation11 + $0x58] sm:$0xff]
    %v2461 = vld [vmem:[#allocation11 + $0x60] sm:$0xff]
    %v2462 = vld [vmem:[#allocation11 + $0x68] sm:$0xff]
    %v2463 = vld [vmem:[#allocation11 + $0x70] sm:$0xff]
    %v2464 = vld [vmem:[#allocation11 + $0x78] sm:$0xff]
    %v2465 = vld [vmem:[#allocation11 + $0x80] sm:$0xff]
    %v2466 = vld [vmem:[#allocation11 + $0x88] sm:$0xff]
    %v2467 = vld [vmem:[#allocation11 + $0x90] sm:$0xff]
    %v2468 = vld [vmem:[#allocation11 + $0x98] sm:$0xff]
    %v2469 = vld [vmem:[#allocation11 + $0xa0] sm:$0xff]
    %v2470 = vld [vmem:[#allocation11 + $0xa8] sm:$0xff]
    %v2471 = vld [vmem:[#allocation11 + $0xb0] sm:$0xff]
    %v2472 = vld [vmem:[#allocation11 + $0xb8] sm:$0xff]
    %v2473 = vld [vmem:[#allocation11 + $0xc0] sm:$0xff]
    %v2474 = vld [vmem:[#allocation11 + $0xc8] sm:$0xff]
    %v2475 = vld [vmem:[#allocation11 + $0xd0] sm:$0xff]
    %v2476 = vld [vmem:[#allocation11 + $0xd8] sm:$0xff]
    %v2477 = vld [vmem:[#allocation11 + $0xe0] sm:$0xff]
    %v2478 = vld [vmem:[#allocation11 + $0xe8] sm:$0xff]
    %v2479 = vld [vmem:[#allocation11 + $0xf0] sm:$0xff]
    %v2480 = vld [vmem:[#allocation11 + $0xf8] sm:$0xff]
    %v2481 = vld [vmem:[#allocation11 + $0x100] sm:$0xff]
    %v2482 = vld [vmem:[#allocation11 + $0x108] sm:$0xff]
    %v2483 = vld [vmem:[#allocation11 + $0x110] sm:$0xff]
    %v2484 = vld [vmem:[#allocation11 + $0x118] sm:$0xff]
    %v2485 = vld [vmem:[#allocation11 + $0x120] sm:$0xff]
    %v2486 = vld [vmem:[#allocation11 + $0x128] sm:$0xff]
    %v2487 = vld [vmem:[#allocation11 + $0x130] sm:$0xff]
    %v2488 = vld [vmem:[#allocation11 + $0x138] sm:$0xff]
    %v2489 = vld [vmem:[#allocation11 + $0x140] sm:$0xff]
    %v2490 = vld [vmem:[#allocation11 + $0x148] sm:$0xff]
    %v2491 = vld [vmem:[#allocation11 + $0x150] sm:$0xff]
    %v2492 = vld [vmem:[#allocation11 + $0x158] sm:$0xff]
    %v2493 = vld [vmem:[#allocation11 + $0x160] sm:$0xff]
    %v2494 = vld [vmem:[#allocation11 + $0x168] sm:$0xff]
    %v2495 = vld [vmem:[#allocation11 + $0x170] sm:$0xff]
    %v2496 = vld [vmem:[#allocation11 + $0x178] sm:$0xff]
    %v2497 = vld [vmem:[#allocation11 + $0x180] sm:$0xff]
    %v2498 = vld [vmem:[#allocation11 + $0x188] sm:$0xff]
    %v2499 = vld [vmem:[#allocation11 + $0x190] sm:$0xff]
    %v2500 = vld [vmem:[#allocation11 + $0x198] sm:$0xff]
    %v2501 = vld [vmem:[#allocation11 + $0x1a0] sm:$0xff]
    %v2502 = vld [vmem:[#allocation11 + $0x1a8] sm:$0xff]
    %v2503 = vld [vmem:[#allocation11 + $0x1b0] sm:$0xff]
    %v2504 = vld [vmem:[#allocation11 + $0x1b8] sm:$0xff]
    %v2505 = vld [vmem:[#allocation11 + $0x1c0] sm:$0xff]
    %v2506 = vld [vmem:[#allocation11 + $0x1c8] sm:$0xff]
    %v2507 = vld [vmem:[#allocation11 + $0x1d0] sm:$0xff]
    %v2508 = vld [vmem:[#allocation11 + $0x1d8] sm:$0xff]
    %v2509 = vld [vmem:[#allocation11 + $0x1e0] sm:$0xff]
    %v2510 = vld [vmem:[#allocation11 + $0x1e8] sm:$0xff]
    %v2511 = vld [vmem:[#allocation11 + $0x1f0] sm:$0xff]
    %v2512 = vld [vmem:[#allocation11 + $0x1f8] sm:$0xff]
    %2513 = vmatpush.msra.mxu0 %v2509
    %2514 = vmatpush.msra.mxu0 %v2505
    %2515 = vmatpush.msra.mxu0 %v2501
    %2516 = vmatpush.msra.mxu0 %v2497
    %2517 = vmatpush.msra.mxu0 %v2493
    %2518 = vmatpush.msra.mxu0 %v2489
    %2519 = vmatpush.msra.mxu0 %v2485
    %2520 = vmatpush.msra.mxu0 %v2481
    %2521 = vmatpush.msra.mxu0 %v2477
    %2522 = vmatpush.msra.mxu0 %v2473
    %2523 = vmatpush.msra.mxu0 %v2469
    %2524 = vmatpush.msra.mxu0 %v2465
    %2525 = vmatpush.msra.mxu0 %v2461
    %2526 = vmatpush.msra.mxu0 %v2457
    %2527 = vmatpush.msra.mxu0 %v2453
    %2528 = vmatpush.msra.mxu0 %v2449
    %2529 = vmatmul.f32.gmra.mxu0 %v2161
    %v2530 = vpop.f32.mrf.mxu0
    %v2531 = vadd.f32 0.0, %v2530
    %2532 = vdwg.mxu0
    %2533 = vmatpush.msra.mxu0 %v2510
    %2534 = vmatpush.msra.mxu0 %v2506
    %2535 = vmatpush.msra.mxu0 %v2502
    %2536 = vmatpush.msra.mxu0 %v2498
    %2537 = vmatpush.msra.mxu0 %v2494
    %2538 = vmatpush.msra.mxu0 %v2490
    %2539 = vmatpush.msra.mxu0 %v2486
    %2540 = vmatpush.msra.mxu0 %v2482
    %2541 = vmatpush.msra.mxu0 %v2478
    %2542 = vmatpush.msra.mxu0 %v2474
    %2543 = vmatpush.msra.mxu0 %v2470
    %2544 = vmatpush.msra.mxu0 %v2466
    %2545 = vmatpush.msra.mxu0 %v2462
    %2546 = vmatpush.msra.mxu0 %v2458
    %2547 = vmatpush.msra.mxu0 %v2454
    %2548 = vmatpush.msra.mxu0 %v2450
    %2549 = vmatmul.f32.gmra.mxu0 %v2161
    %v2550 = vpop.f32.mrf.mxu0
    %v2551 = vadd.f32 0.0, %v2550
    %2552 = vdwg.mxu0
    %2553 = vmatpush.msra.mxu0 %v2511
    %2554 = vmatpush.msra.mxu0 %v2507
    %2555 = vmatpush.msra.mxu0 %v2503
    %2556 = vmatpush.msra.mxu0 %v2499
    %2557 = vmatpush.msra.mxu0 %v2495
    %2558 = vmatpush.msra.mxu0 %v2491
    %2559 = vmatpush.msra.mxu0 %v2487
    %2560 = vmatpush.msra.mxu0 %v2483
    %2561 = vmatpush.msra.mxu0 %v2479
    %2562 = vmatpush.msra.mxu0 %v2475
    %2563 = vmatpush.msra.mxu0 %v2471
    %2564 = vmatpush.msra.mxu0 %v2467
    %2565 = vmatpush.msra.mxu0 %v2463
    %2566 = vmatpush.msra.mxu0 %v2459
    %2567 = vmatpush.msra.mxu0 %v2455
    %2568 = vmatpush.msra.mxu0 %v2451
    %2569 = vmatmul.f32.gmra.mxu0 %v2161
    %v2570 = vpop.f32.mrf.mxu0
    %v2571 = vadd.f32 0.0, %v2570
    %2572 = vdwg.mxu0
    %2573 = vmatpush.msra.mxu0 %v2512
    %2574 = vmatpush.msra.mxu0 %v2508
    %2575 = vmatpush.msra.mxu0 %v2504
    %2576 = vmatpush.msra.mxu0 %v2500
    %2577 = vmatpush.msra.mxu0 %v2496
    %2578 = vmatpush.msra.mxu0 %v2492
    %2579 = vmatpush.msra.mxu0 %v2488
    %2580 = vmatpush.msra.mxu0 %v2484
    %2581 = vmatpush.msra.mxu0 %v2480
    %2582 = vmatpush.msra.mxu0 %v2476
    %2583 = vmatpush.msra.mxu0 %v2472
    %2584 = vmatpush.msra.mxu0 %v2468
    %2585 = vmatpush.msra.mxu0 %v2464
    %2586 = vmatpush.msra.mxu0 %v2460
    %2587 = vmatpush.msra.mxu0 %v2456
    %2588 = vmatpush.msra.mxu0 %v2452
    %2589 = vmatmul.f32.gmra.mxu0 %v2161
    %v2590 = vpop.f32.mrf.mxu0
    %v2591 = vadd.f32 0.0, %v2590
    %2592 = vdwg.mxu0
    %v2593 = vadd.f32 %v2445, %v2531
    %v2594 = vadd.f32 %v2446, %v2551
    %v2595 = vadd.f32 %v2447, %v2571
    %v2596 = vadd.f32 %v2448, %v2591
    %v2597 = vld [vmem:[%s6] sm:$0xf]
    %v2599 = vperm.slane %v2597, 0
    %v2600 = vperm.slane %v2597, 1
    %v2601 = vperm.slane %v2597, 2
    %v2602 = vperm.slane %v2597, 3
    %v2607 = vadd.f32 %v2593, %v2599
    %v2608 = vadd.f32 %v2594, %v2600
    %v2609 = vadd.f32 %v2595, %v2601
    %v2610 = vadd.f32 %v2596, %v2602
    %v2611 = vxor.u32 %v2607, 2147483648
    %v2612 = vxor.u32 %v2608, 2147483648
    %v2613 = vxor.u32 %v2609, 2147483648
    %v2614 = vmul.f32 %v2611, 1.442695
    %v2615 = vpow.pop %v2614
    %v2616 = vmul.f32 %v2612, 1.442695
    %v2617 = vpow.pop %v2616
    %v2618 = vmul.f32 %v2613, 1.442695
    %v2619 = vpow.pop %v2618
    %v2620 = vadd.f32 %v2615, 1.0
    %v2621 = vadd.f32 %v2617, 1.0
    %v2622 = vadd.f32 %v2619, 1.0
    %v2623 = vrcp.pop %v2620
    %v2624 = vmul.f32 %v2620, %v2623
    %v2625 = vsub.f32 1.0, %v2624
    %v2626 = vmul.f32 %v2623, %v2625
    %v2627 = vadd.f32 %v2623, %v2626
    %vm2628 = vweird.f32 %v2620
    %vm2629 = vweird.f32 %v2623
    %vm2630 = vmor %vm2628, %vm2629
    %v2631 = vsel %vm2630, %v2623, %v2627
    %v2632 = vand.u32 2147483647, %v2620
    %vm2633 = vcmp.eq.f32.partialorder %v2632, 8.507059e+37
    %v2634 = vand.u32 %v2620, 2147483648
    %v2635 = vor.u32 1.1754944e-38, %v2634
    %v2636 = vsel %vm2633, %v2635, %v2631
    %v2637 = vmul.f32 1.0, %v2636
    %v2638 = vrcp.pop %v2621
    %v2639 = vmul.f32 %v2621, %v2638
    %v2640 = vsub.f32 1.0, %v2639
    %v2641 = vmul.f32 %v2638, %v2640
    %v2642 = vadd.f32 %v2638, %v2641
    %vm2643 = vweird.f32 %v2621
    %vm2644 = vweird.f32 %v2638
    %vm2645 = vmor %vm2643, %vm2644
    %v2646 = vsel %vm2645, %v2638, %v2642
    %v2647 = vand.u32 2147483647, %v2621
    %vm2648 = vcmp.eq.f32.partialorder %v2647, 8.507059e+37
    %v2649 = vand.u32 %v2621, 2147483648
    %v2650 = vor.u32 1.1754944e-38, %v2649
    %v2651 = vsel %vm2648, %v2650, %v2646
    %v2652 = vmul.f32 1.0, %v2651
    %v2653 = vrcp.pop %v2622
    %v2654 = vmul.f32 %v2622, %v2653
    %v2655 = vsub.f32 1.0, %v2654
    %v2656 = vmul.f32 %v2653, %v2655
    %v2657 = vadd.f32 %v2653, %v2656
    %vm2658 = vweird.f32 %v2622
    %vm2659 = vweird.f32 %v2653
    %vm2660 = vmor %vm2658, %vm2659
    %v2661 = vsel %vm2660, %v2653, %v2657
    %v2662 = vand.u32 2147483647, %v2622
    %vm2663 = vcmp.eq.f32.partialorder %v2662, 8.507059e+37
    %v2664 = vand.u32 %v2622, 2147483648
    %v2665 = vor.u32 1.1754944e-38, %v2664
    %v2666 = vsel %vm2663, %v2665, %v2661
    %v2667 = vmul.f32 1.0, %v2666
    %v2668 = vtanh.pop %v2610
    %v2669 = vmul.f32 %v2652, %v2159
    %v2670 = vmul.f32 %v2637, %v2668
    %v2671 = vadd.f32 %v2669, %v2670
    %v2672 = vtanh.pop %v2671
    %v2673 = vmul.f32 %v2667, %v2672
    %s2674 = scalar_lea.vmem [#allocation4], 32
    %2675 = vst [vmem:[%s2674] sm:$0xff] %v2673
    %s2676 = sld [smem:[#allocation6 + $0x4]]
    %p2677 = scmp.eq.s32.totalorder %s2676, 0
    // Predicated region
    $region61: #{tpu_custom_call.1} parent=1 // pred_check
      %p2678 = pneg %p2677
    $region62: #{tpu_custom_call.1} parent=1 // pred_check_branch
      %2680 = sbr.rel (%p2678) target = $region64
    $region63: #{tpu_custom_call.1} parent=1 // pred_region
      %v2681 = vld [vmem:[%s7] sm:$0xff]
      %v2682 = vld [vmem:[%s7 + $0x8] sm:$0xff]
      %v2683 = vld [vmem:[%s7 + $0x10] sm:$0xff]
      %v2684 = vld [vmem:[%s7 + $0x18] sm:$0xff]
      %v2685 = vld [vmem:[%s7 + $0x20] sm:$0xff]
      %v2686 = vld [vmem:[%s7 + $0x28] sm:$0xff]
      %v2687 = vld [vmem:[%s7 + $0x30] sm:$0xff]
      %v2688 = vld [vmem:[%s7 + $0x38] sm:$0xff]
      %v2689 = vld [vmem:[%s7 + $0x40] sm:$0xff]
      %v2690 = vld [vmem:[%s7 + $0x48] sm:$0xff]
      %v2691 = vld [vmem:[%s7 + $0x50] sm:$0xff]
      %v2692 = vld [vmem:[%s7 + $0x58] sm:$0xff]
      %v2693 = vld [vmem:[%s7 + $0x60] sm:$0xff]
      %v2694 = vld [vmem:[%s7 + $0x68] sm:$0xff]
      %v2695 = vld [vmem:[%s7 + $0x70] sm:$0xff]
      %v2696 = vld [vmem:[%s7 + $0x78] sm:$0xff]
      %v2697 = vld [vmem:[%s7 + $0x80] sm:$0xff]
      %v2698 = vld [vmem:[%s7 + $0x88] sm:$0xff]
      %v2699 = vld [vmem:[%s7 + $0x90] sm:$0xff]
      %v2700 = vld [vmem:[%s7 + $0x98] sm:$0xff]
      %v2701 = vld [vmem:[%s7 + $0xa0] sm:$0xff]
      %v2702 = vld [vmem:[%s7 + $0xa8] sm:$0xff]
      %v2703 = vld [vmem:[%s7 + $0xb0] sm:$0xff]
      %v2704 = vld [vmem:[%s7 + $0xb8] sm:$0xff]
      %v2705 = vld [vmem:[%s7 + $0xc0] sm:$0xff]
      %v2706 = vld [vmem:[%s7 + $0xc8] sm:$0xff]
      %v2707 = vld [vmem:[%s7 + $0xd0] sm:$0xff]
      %v2708 = vld [vmem:[%s7 + $0xd8] sm:$0xff]
      %v2709 = vld [vmem:[%s7 + $0xe0] sm:$0xff]
      %v2710 = vld [vmem:[%s7 + $0xe8] sm:$0xff]
      %v2711 = vld [vmem:[%s7 + $0xf0] sm:$0xff]
      %v2712 = vld [vmem:[%s7 + $0xf8] sm:$0xff]
      %v2713 = vld [vmem:[%s8] sm:$0x3]
      %v2715 = vperm.slane %v2713, 0
      %v2716 = vperm.slane %v2713, 1
      %2719 = vmatpush.msra.mxu0 %v2711
      %2720 = vmatpush.msra.mxu0 %v2709
      %2721 = vmatpush.msra.mxu0 %v2707
      %2722 = vmatpush.msra.mxu0 %v2705
      %2723 = vmatpush.msra.mxu0 %v2703
      %2724 = vmatpush.msra.mxu0 %v2701
      %2725 = vmatpush.msra.mxu0 %v2699
      %2726 = vmatpush.msra.mxu0 %v2697
      %2727 = vmatpush.msra.mxu0 %v2695
      %2728 = vmatpush.msra.mxu0 %v2693
      %2729 = vmatpush.msra.mxu0 %v2691
      %2730 = vmatpush.msra.mxu0 %v2689
      %2731 = vmatpush.msra.mxu0 %v2687
      %2732 = vmatpush.msra.mxu0 %v2685
      %2733 = vmatpush.msra.mxu0 %v2683
      %2734 = vmatpush.msra.mxu0 %v2681
      %2735 = vmatmul.f32.gmra.mxu0 %v2673
      %v2736 = vpop.f32.mrf.mxu0
      %v2737 = vadd.f32 %v2715, %v2736
      %2738 = vdwg.mxu0
      %2739 = vmatpush.msra.mxu0 %v2712
      %2740 = vmatpush.msra.mxu0 %v2710
      %2741 = vmatpush.msra.mxu0 %v2708
      %2742 = vmatpush.msra.mxu0 %v2706
      %2743 = vmatpush.msra.mxu0 %v2704
      %2744 = vmatpush.msra.mxu0 %v2702
      %2745 = vmatpush.msra.mxu0 %v2700
      %2746 = vmatpush.msra.mxu0 %v2698
      %2747 = vmatpush.msra.mxu0 %v2696
      %2748 = vmatpush.msra.mxu0 %v2694
      %2749 = vmatpush.msra.mxu0 %v2692
      %2750 = vmatpush.msra.mxu0 %v2690
      %2751 = vmatpush.msra.mxu0 %v2688
      %2752 = vmatpush.msra.mxu0 %v2686
      %2753 = vmatpush.msra.mxu0 %v2684
      %2754 = vmatpush.msra.mxu0 %v2682
      %2755 = vmatmul.f32.gmra.mxu0 %v2673
      %v2756 = vpop.f32.mrf.mxu0
      %v2757 = vadd.f32 %v2716, %v2756
      %2758 = vdwg.mxu0
      %v2759 = vlaneseq
      %v2760 = vand.u32 %v2759, 127
      %v2761 = vadd.s32 %v2760, 128
      %vm2762 = vcmp.ge.f32.partialorder %v2737, %v2757
      %v2763 = vsel %vm2762, %v2737, %v2757
      %v2764 = vsel %vm2762, %v2760, %v2761
      %2765 = vmax.index.xlane.f32.xlu0 %v2763
      %v2766 = vpop.xlane.xlu0 %2765
      %2767 = vset.pattern.permute.xlu0 %v2766
      %2768 = vperm.xlu0 %2767, %v2764
      %v2769 = vpop.permute.xlu0 %2768
      %vm2770 = vcmp.eq.s32.totalorder %v2760, %v2769
      %vm2771 = vcmp.eq.s32.totalorder %v2761, %v2769
      %v2772 = vsel %vm2770, 1, 0
      %v2773 = vsel %vm2771, 1, 0
      %v2774 = vcvt.s32.f32 %v2772
      %v2775 = vcvt.s32.f32 %v2773
      %v2776 = vld [vmem:[%s3] sm:$0xff]
      %v2777 = vld [vmem:[%s3 + $0x8] sm:$0xff]
      %v2778 = vld [vmem:[%s3 + $0x10] sm:$0xff]
      %v2779 = vld [vmem:[%s3 + $0x18] sm:$0xff]
      %v2780 = vld [vmem:[%s3 + $0x20] sm:$0xff]
      %v2781 = vld [vmem:[%s3 + $0x28] sm:$0xff]
      %v2782 = vld [vmem:[%s3 + $0x30] sm:$0xff]
      %v2783 = vld [vmem:[%s3 + $0x38] sm:$0xff]
      %v2784 = vld [vmem:[%s3 + $0x40] sm:$0xff]
      %v2785 = vld [vmem:[%s3 + $0x48] sm:$0xff]
      %v2786 = vld [vmem:[%s3 + $0x50] sm:$0xff]
      %v2787 = vld [vmem:[%s3 + $0x58] sm:$0xff]
      %v2788 = vld [vmem:[%s3 + $0x60] sm:$0xff]
      %v2789 = vld [vmem:[%s3 + $0x68] sm:$0xff]
      %v2790 = vld [vmem:[%s3 + $0x70] sm:$0xff]
      %v2791 = vld [vmem:[%s3 + $0x78] sm:$0xff]
      %v2792 = vld [vmem:[%s3 + $0x80] sm:$0xff]
      %v2793 = vld [vmem:[%s3 + $0x88] sm:$0xff]
      %v2794 = vld [vmem:[%s3 + $0x90] sm:$0xff]
      %v2795 = vld [vmem:[%s3 + $0x98] sm:$0xff]
      %v2796 = vld [vmem:[%s3 + $0xa0] sm:$0xff]
      %v2797 = vld [vmem:[%s3 + $0xa8] sm:$0xff]
      %v2798 = vld [vmem:[%s3 + $0xb0] sm:$0xff]
      %v2799 = vld [vmem:[%s3 + $0xb8] sm:$0xff]
      %v2800 = vld [vmem:[%s3 + $0xc0] sm:$0xff]
      %v2801 = vld [vmem:[%s3 + $0xc8] sm:$0xff]
      %v2802 = vld [vmem:[%s3 + $0xd0] sm:$0xff]
      %v2803 = vld [vmem:[%s3 + $0xd8] sm:$0xff]
      %v2804 = vld [vmem:[%s3 + $0xe0] sm:$0xff]
      %v2805 = vld [vmem:[%s3 + $0xe8] sm:$0xff]
      %v2806 = vld [vmem:[%s3 + $0xf0] sm:$0xff]
      %v2807 = vld [vmem:[%s3 + $0xf8] sm:$0xff]
      %2808 = vmatpush.msra.mxu0 %v2791
      %2809 = vmatpush.msra.mxu0 %v2790
      %2810 = vmatpush.msra.mxu0 %v2789
      %2811 = vmatpush.msra.mxu0 %v2788
      %2812 = vmatpush.msra.mxu0 %v2787
      %2813 = vmatpush.msra.mxu0 %v2786
      %2814 = vmatpush.msra.mxu0 %v2785
      %2815 = vmatpush.msra.mxu0 %v2784
      %2816 = vmatpush.msra.mxu0 %v2783
      %2817 = vmatpush.msra.mxu0 %v2782
      %2818 = vmatpush.msra.mxu0 %v2781
      %2819 = vmatpush.msra.mxu0 %v2780
      %2820 = vmatpush.msra.mxu0 %v2779
      %2821 = vmatpush.msra.mxu0 %v2778
      %2822 = vmatpush.msra.mxu0 %v2777
      %2823 = vmatpush.msra.mxu0 %v2776
      %2824 = vmatmul.f32.gmra.mxu0 %v2774
      %v2825 = vpop.f32.mrf.mxu0
      %v2826 = vadd.f32 0.0, %v2825
      %2827 = vdwg.mxu0
      %2828 = vmatpush.msra.mxu0 %v2807
      %2829 = vmatpush.msra.mxu0 %v2806
      %2830 = vmatpush.msra.mxu0 %v2805
      %2831 = vmatpush.msra.mxu0 %v2804
      %2832 = vmatpush.msra.mxu0 %v2803
      %2833 = vmatpush.msra.mxu0 %v2802
      %2834 = vmatpush.msra.mxu0 %v2801
      %2835 = vmatpush.msra.mxu0 %v2800
      %2836 = vmatpush.msra.mxu0 %v2799
      %2837 = vmatpush.msra.mxu0 %v2798
      %2838 = vmatpush.msra.mxu0 %v2797
      %2839 = vmatpush.msra.mxu0 %v2796
      %2840 = vmatpush.msra.mxu0 %v2795
      %2841 = vmatpush.msra.mxu0 %v2794
      %2842 = vmatpush.msra.mxu0 %v2793
      %2843 = vmatpush.msra.mxu0 %v2792
      %2844 = vmatmul.f32.gmra.mxu0 %v2775
      %v2845 = vpop.f32.mrf.mxu0
      %v2846 = vadd.f32 %v2826, %v2845
      %2847 = vdwg.mxu0
      %v2848 = vld [vmem:[#allocation8] sm:$0xff]
      %v2849 = vld [vmem:[#allocation8 + $0x8] sm:$0xff]
      %v2850 = vld [vmem:[#allocation8 + $0x10] sm:$0xff]
      %v2851 = vld [vmem:[#allocation8 + $0x18] sm:$0xff]
      %v2852 = vld [vmem:[#allocation8 + $0x20] sm:$0xff]
      %v2853 = vld [vmem:[#allocation8 + $0x28] sm:$0xff]
      %v2854 = vld [vmem:[#allocation8 + $0x30] sm:$0xff]
      %v2855 = vld [vmem:[#allocation8 + $0x38] sm:$0xff]
      %v2856 = vld [vmem:[#allocation8 + $0x40] sm:$0xff]
      %v2857 = vld [vmem:[#allocation8 + $0x48] sm:$0xff]
      %v2858 = vld [vmem:[#allocation8 + $0x50] sm:$0xff]
      %v2859 = vld [vmem:[#allocation8 + $0x58] sm:$0xff]
      %v2860 = vld [vmem:[#allocation8 + $0x60] sm:$0xff]
      %v2861 = vld [vmem:[#allocation8 + $0x68] sm:$0xff]
      %v2862 = vld [vmem:[#allocation8 + $0x70] sm:$0xff]
      %v2863 = vld [vmem:[#allocation8 + $0x78] sm:$0xff]
      %v2865 = vsel %vm173, %v2846, 0
      %2867 = vmatpush.msra.mxu0 0.0
      %2868 = vmatpush.msra.mxu0 0.0
      %2869 = vmatpush.msra.mxu0 0.0
      %2870 = vmatpush.msra.mxu0 0.0
      %2871 = vmatpush.msra.mxu0 0.0
      %2872 = vmatpush.msra.mxu0 0.0
      %2873 = vmatpush.msra.mxu0 0.0
      %2874 = vmatpush.msra.mxu0 0.0
      %2875 = vmatpush.msra.mxu0 0.0
      %2876 = vmatpush.msra.mxu0 0.0
      %2877 = vmatpush.msra.mxu0 0.0
      %2878 = vmatpush.msra.mxu0 0.0
      %2879 = vmatpush.msra.mxu0 %v2860
      %2880 = vmatpush.msra.mxu0 %v2856
      %2881 = vmatpush.msra.mxu0 %v2852
      %2882 = vmatpush.msra.mxu0 %v2848
      %2883 = vmatmul.f32.gmra.mxu0 %v2865
      %v2884 = vpop.f32.mrf.mxu0
      %v2885 = vadd.f32 0.0, %v2884
      %2886 = vdwg.mxu0
      %2887 = vmatpush.msra.mxu0 0.0
      %2888 = vmatpush.msra.mxu0 0.0
      %2889 = vmatpush.msra.mxu0 0.0
      %2890 = vmatpush.msra.mxu0 0.0
      %2891 = vmatpush.msra.mxu0 0.0
      %2892 = vmatpush.msra.mxu0 0.0
      %2893 = vmatpush.msra.mxu0 0.0
      %2894 = vmatpush.msra.mxu0 0.0
      %2895 = vmatpush.msra.mxu0 0.0
      %2896 = vmatpush.msra.mxu0 0.0
      %2897 = vmatpush.msra.mxu0 0.0
      %2898 = vmatpush.msra.mxu0 0.0
      %2899 = vmatpush.msra.mxu0 %v2861
      %2900 = vmatpush.msra.mxu0 %v2857
      %2901 = vmatpush.msra.mxu0 %v2853
      %2902 = vmatpush.msra.mxu0 %v2849
      %2903 = vmatmul.f32.gmra.mxu0 %v2865
      %v2904 = vpop.f32.mrf.mxu0
      %v2905 = vadd.f32 0.0, %v2904
      %2906 = vdwg.mxu0
      %2907 = vmatpush.msra.mxu0 0.0
      %2908 = vmatpush.msra.mxu0 0.0
      %2909 = vmatpush.msra.mxu0 0.0
      %2910 = vmatpush.msra.mxu0 0.0
      %2911 = vmatpush.msra.mxu0 0.0
      %2912 = vmatpush.msra.mxu0 0.0
      %2913 = vmatpush.msra.mxu0 0.0
      %2914 = vmatpush.msra.mxu0 0.0
      %2915 = vmatpush.msra.mxu0 0.0
      %2916 = vmatpush.msra.mxu0 0.0
      %2917 = vmatpush.msra.mxu0 0.0
      %2918 = vmatpush.msra.mxu0 0.0
      %2919 = vmatpush.msra.mxu0 %v2862
      %2920 = vmatpush.msra.mxu0 %v2858
      %2921 = vmatpush.msra.mxu0 %v2854
      %2922 = vmatpush.msra.mxu0 %v2850
      %2923 = vmatmul.f32.gmra.mxu0 %v2865
      %v2924 = vpop.f32.mrf.mxu0
      %v2925 = vadd.f32 0.0, %v2924
      %2926 = vdwg.mxu0
      %2927 = vmatpush.msra.mxu0 0.0
      %2928 = vmatpush.msra.mxu0 0.0
      %2929 = vmatpush.msra.mxu0 0.0
      %2930 = vmatpush.msra.mxu0 0.0
      %2931 = vmatpush.msra.mxu0 0.0
      %2932 = vmatpush.msra.mxu0 0.0
      %2933 = vmatpush.msra.mxu0 0.0
      %2934 = vmatpush.msra.mxu0 0.0
      %2935 = vmatpush.msra.mxu0 0.0
      %2936 = vmatpush.msra.mxu0 0.0
      %2937 = vmatpush.msra.mxu0 0.0
      %2938 = vmatpush.msra.mxu0 0.0
      %2939 = vmatpush.msra.mxu0 %v2863
      %2940 = vmatpush.msra.mxu0 %v2859
      %2941 = vmatpush.msra.mxu0 %v2855
      %2942 = vmatpush.msra.mxu0 %v2851
      %2943 = vmatmul.f32.gmra.mxu0 %v2865
      %v2944 = vpop.f32.mrf.mxu0
      %v2945 = vadd.f32 0.0, %v2944
      %2946 = vdwg.mxu0
      %s2947 = smul.u32 5, 4
      %s2948 = smul.addr %s2947, 8
      %s2949 = scalar_lea.vmem [#allocation3], %s2948
      %2950 = vst [vmem:[%s2949] sm:$0xff] %v2885
      %2951 = vst [vmem:[%s2949 + $0x8] sm:$0xff] %v2905
      %2952 = vst [vmem:[%s2949 + $0x10] sm:$0xff] %v2925
      %2953 = vst [vmem:[%s2949 + $0x18] sm:$0xff] %v2945
    $region64: #{tpu_custom_call.1} parent=1 // pred_fallthru
      _
    %s2954 = smul.u32 5, 4
    %s2955 = smul.addr %s2954, 8
    %s2956 = scalar_lea.vmem [#allocation3], %s2955
    %v2957 = vld [vmem:[%s2956] sm:$0xff]
    %v2958 = vld [vmem:[%s2956 + $0x8] sm:$0xff]
    %v2959 = vld [vmem:[%s2956 + $0x10] sm:$0xff]
    %v2960 = vld [vmem:[%s2956 + $0x18] sm:$0xff]
    %v2961 = vld [vmem:[#allocation11] sm:$0xff]
    %v2962 = vld [vmem:[#allocation11 + $0x8] sm:$0xff]
    %v2963 = vld [vmem:[#allocation11 + $0x10] sm:$0xff]
    %v2964 = vld [vmem:[#allocation11 + $0x18] sm:$0xff]
    %v2965 = vld [vmem:[#allocation11 + $0x20] sm:$0xff]
    %v2966 = vld [vmem:[#allocation11 + $0x28] sm:$0xff]
    %v2967 = vld [vmem:[#allocation11 + $0x30] sm:$0xff]
    %v2968 = vld [vmem:[#allocation11 + $0x38] sm:$0xff]
    %v2969 = vld [vmem:[#allocation11 + $0x40] sm:$0xff]
    %v2970 = vld [vmem:[#allocation11 + $0x48] sm:$0xff]
    %v2971 = vld [vmem:[#allocation11 + $0x50] sm:$0xff]
    %v2972 = vld [vmem:[#allocation11 + $0x58] sm:$0xff]
    %v2973 = vld [vmem:[#allocation11 + $0x60] sm:$0xff]
    %v2974 = vld [vmem:[#allocation11 + $0x68] sm:$0xff]
    %v2975 = vld [vmem:[#allocation11 + $0x70] sm:$0xff]
    %v2976 = vld [vmem:[#allocation11 + $0x78] sm:$0xff]
    %v2977 = vld [vmem:[#allocation11 + $0x80] sm:$0xff]
    %v2978 = vld [vmem:[#allocation11 + $0x88] sm:$0xff]
    %v2979 = vld [vmem:[#allocation11 + $0x90] sm:$0xff]
    %v2980 = vld [vmem:[#allocation11 + $0x98] sm:$0xff]
    %v2981 = vld [vmem:[#allocation11 + $0xa0] sm:$0xff]
    %v2982 = vld [vmem:[#allocation11 + $0xa8] sm:$0xff]
    %v2983 = vld [vmem:[#allocation11 + $0xb0] sm:$0xff]
    %v2984 = vld [vmem:[#allocation11 + $0xb8] sm:$0xff]
    %v2985 = vld [vmem:[#allocation11 + $0xc0] sm:$0xff]
    %v2986 = vld [vmem:[#allocation11 + $0xc8] sm:$0xff]
    %v2987 = vld [vmem:[#allocation11 + $0xd0] sm:$0xff]
    %v2988 = vld [vmem:[#allocation11 + $0xd8] sm:$0xff]
    %v2989 = vld [vmem:[#allocation11 + $0xe0] sm:$0xff]
    %v2990 = vld [vmem:[#allocation11 + $0xe8] sm:$0xff]
    %v2991 = vld [vmem:[#allocation11 + $0xf0] sm:$0xff]
    %v2992 = vld [vmem:[#allocation11 + $0xf8] sm:$0xff]
    %v2993 = vld [vmem:[#allocation11 + $0x100] sm:$0xff]
    %v2994 = vld [vmem:[#allocation11 + $0x108] sm:$0xff]
    %v2995 = vld [vmem:[#allocation11 + $0x110] sm:$0xff]
    %v2996 = vld [vmem:[#allocation11 + $0x118] sm:$0xff]
    %v2997 = vld [vmem:[#allocation11 + $0x120] sm:$0xff]
    %v2998 = vld [vmem:[#allocation11 + $0x128] sm:$0xff]
    %v2999 = vld [vmem:[#allocation11 + $0x130] sm:$0xff]
    %v3000 = vld [vmem:[#allocation11 + $0x138] sm:$0xff]
    %v3001 = vld [vmem:[#allocation11 + $0x140] sm:$0xff]
    %v3002 = vld [vmem:[#allocation11 + $0x148] sm:$0xff]
    %v3003 = vld [vmem:[#allocation11 + $0x150] sm:$0xff]
    %v3004 = vld [vmem:[#allocation11 + $0x158] sm:$0xff]
    %v3005 = vld [vmem:[#allocation11 + $0x160] sm:$0xff]
    %v3006 = vld [vmem:[#allocation11 + $0x168] sm:$0xff]
    %v3007 = vld [vmem:[#allocation11 + $0x170] sm:$0xff]
    %v3008 = vld [vmem:[#allocation11 + $0x178] sm:$0xff]
    %v3009 = vld [vmem:[#allocation11 + $0x180] sm:$0xff]
    %v3010 = vld [vmem:[#allocation11 + $0x188] sm:$0xff]
    %v3011 = vld [vmem:[#allocation11 + $0x190] sm:$0xff]
    %v3012 = vld [vmem:[#allocation11 + $0x198] sm:$0xff]
    %v3013 = vld [vmem:[#allocation11 + $0x1a0] sm:$0xff]
    %v3014 = vld [vmem:[#allocation11 + $0x1a8] sm:$0xff]
    %v3015 = vld [vmem:[#allocation11 + $0x1b0] sm:$0xff]
    %v3016 = vld [vmem:[#allocation11 + $0x1b8] sm:$0xff]
    %v3017 = vld [vmem:[#allocation11 + $0x1c0] sm:$0xff]
    %v3018 = vld [vmem:[#allocation11 + $0x1c8] sm:$0xff]
    %v3019 = vld [vmem:[#allocation11 + $0x1d0] sm:$0xff]
    %v3020 = vld [vmem:[#allocation11 + $0x1d8] sm:$0xff]
    %v3021 = vld [vmem:[#allocation11 + $0x1e0] sm:$0xff]
    %v3022 = vld [vmem:[#allocation11 + $0x1e8] sm:$0xff]
    %v3023 = vld [vmem:[#allocation11 + $0x1f0] sm:$0xff]
    %v3024 = vld [vmem:[#allocation11 + $0x1f8] sm:$0xff]
    %3025 = vmatpush.msra.mxu0 %v3021
    %3026 = vmatpush.msra.mxu0 %v3017
    %3027 = vmatpush.msra.mxu0 %v3013
    %3028 = vmatpush.msra.mxu0 %v3009
    %3029 = vmatpush.msra.mxu0 %v3005
    %3030 = vmatpush.msra.mxu0 %v3001
    %3031 = vmatpush.msra.mxu0 %v2997
    %3032 = vmatpush.msra.mxu0 %v2993
    %3033 = vmatpush.msra.mxu0 %v2989
    %3034 = vmatpush.msra.mxu0 %v2985
    %3035 = vmatpush.msra.mxu0 %v2981
    %3036 = vmatpush.msra.mxu0 %v2977
    %3037 = vmatpush.msra.mxu0 %v2973
    %3038 = vmatpush.msra.mxu0 %v2969
    %3039 = vmatpush.msra.mxu0 %v2965
    %3040 = vmatpush.msra.mxu0 %v2961
    %3041 = vmatmul.f32.gmra.mxu0 %v2673
    %v3042 = vpop.f32.mrf.mxu0
    %v3043 = vadd.f32 0.0, %v3042
    %3044 = vdwg.mxu0
    %3045 = vmatpush.msra.mxu0 %v3022
    %3046 = vmatpush.msra.mxu0 %v3018
    %3047 = vmatpush.msra.mxu0 %v3014
    %3048 = vmatpush.msra.mxu0 %v3010
    %3049 = vmatpush.msra.mxu0 %v3006
    %3050 = vmatpush.msra.mxu0 %v3002
    %3051 = vmatpush.msra.mxu0 %v2998
    %3052 = vmatpush.msra.mxu0 %v2994
    %3053 = vmatpush.msra.mxu0 %v2990
    %3054 = vmatpush.msra.mxu0 %v2986
    %3055 = vmatpush.msra.mxu0 %v2982
    %3056 = vmatpush.msra.mxu0 %v2978
    %3057 = vmatpush.msra.mxu0 %v2974
    %3058 = vmatpush.msra.mxu0 %v2970
    %3059 = vmatpush.msra.mxu0 %v2966
    %3060 = vmatpush.msra.mxu0 %v2962
    %3061 = vmatmul.f32.gmra.mxu0 %v2673
    %v3062 = vpop.f32.mrf.mxu0
    %v3063 = vadd.f32 0.0, %v3062
    %3064 = vdwg.mxu0
    %3065 = vmatpush.msra.mxu0 %v3023
    %3066 = vmatpush.msra.mxu0 %v3019
    %3067 = vmatpush.msra.mxu0 %v3015
    %3068 = vmatpush.msra.mxu0 %v3011
    %3069 = vmatpush.msra.mxu0 %v3007
    %3070 = vmatpush.msra.mxu0 %v3003
    %3071 = vmatpush.msra.mxu0 %v2999
    %3072 = vmatpush.msra.mxu0 %v2995
    %3073 = vmatpush.msra.mxu0 %v2991
    %3074 = vmatpush.msra.mxu0 %v2987
    %3075 = vmatpush.msra.mxu0 %v2983
    %3076 = vmatpush.msra.mxu0 %v2979
    %3077 = vmatpush.msra.mxu0 %v2975
    %3078 = vmatpush.msra.mxu0 %v2971
    %3079 = vmatpush.msra.mxu0 %v2967
    %3080 = vmatpush.msra.mxu0 %v2963
    %3081 = vmatmul.f32.gmra.mxu0 %v2673
    %v3082 = vpop.f32.mrf.mxu0
    %v3083 = vadd.f32 0.0, %v3082
    %3084 = vdwg.mxu0
    %3085 = vmatpush.msra.mxu0 %v3024
    %3086 = vmatpush.msra.mxu0 %v3020
    %3087 = vmatpush.msra.mxu0 %v3016
    %3088 = vmatpush.msra.mxu0 %v3012
    %3089 = vmatpush.msra.mxu0 %v3008
    %3090 = vmatpush.msra.mxu0 %v3004
    %3091 = vmatpush.msra.mxu0 %v3000
    %3092 = vmatpush.msra.mxu0 %v2996
    %3093 = vmatpush.msra.mxu0 %v2992
    %3094 = vmatpush.msra.mxu0 %v2988
    %3095 = vmatpush.msra.mxu0 %v2984
    %3096 = vmatpush.msra.mxu0 %v2980
    %3097 = vmatpush.msra.mxu0 %v2976
    %3098 = vmatpush.msra.mxu0 %v2972
    %3099 = vmatpush.msra.mxu0 %v2968
    %3100 = vmatpush.msra.mxu0 %v2964
    %3101 = vmatmul.f32.gmra.mxu0 %v2673
    %v3102 = vpop.f32.mrf.mxu0
    %v3103 = vadd.f32 0.0, %v3102
    %3104 = vdwg.mxu0
    %v3105 = vadd.f32 %v2957, %v3043
    %v3106 = vadd.f32 %v2958, %v3063
    %v3107 = vadd.f32 %v2959, %v3083
    %v3108 = vadd.f32 %v2960, %v3103
    %v3109 = vld [vmem:[%s6] sm:$0xf]
    %v3111 = vperm.slane %v3109, 0
    %v3112 = vperm.slane %v3109, 1
    %v3113 = vperm.slane %v3109, 2
    %v3114 = vperm.slane %v3109, 3
    %v3119 = vadd.f32 %v3105, %v3111
    %v3120 = vadd.f32 %v3106, %v3112
    %v3121 = vadd.f32 %v3107, %v3113
    %v3122 = vadd.f32 %v3108, %v3114
    %v3123 = vxor.u32 %v3119, 2147483648
    %v3124 = vxor.u32 %v3120, 2147483648
    %v3125 = vxor.u32 %v3121, 2147483648
    %v3126 = vmul.f32 %v3123, 1.442695
    %v3127 = vpow.pop %v3126
    %v3128 = vmul.f32 %v3124, 1.442695
    %v3129 = vpow.pop %v3128
    %v3130 = vmul.f32 %v3125, 1.442695
    %v3131 = vpow.pop %v3130
    %v3132 = vadd.f32 %v3127, 1.0
    %v3133 = vadd.f32 %v3129, 1.0
    %v3134 = vadd.f32 %v3131, 1.0
    %v3135 = vrcp.pop %v3132
    %v3136 = vmul.f32 %v3132, %v3135
    %v3137 = vsub.f32 1.0, %v3136
    %v3138 = vmul.f32 %v3135, %v3137
    %v3139 = vadd.f32 %v3135, %v3138
    %vm3140 = vweird.f32 %v3132
    %vm3141 = vweird.f32 %v3135
    %vm3142 = vmor %vm3140, %vm3141
    %v3143 = vsel %vm3142, %v3135, %v3139
    %v3144 = vand.u32 2147483647, %v3132
    %vm3145 = vcmp.eq.f32.partialorder %v3144, 8.507059e+37
    %v3146 = vand.u32 %v3132, 2147483648
    %v3147 = vor.u32 1.1754944e-38, %v3146
    %v3148 = vsel %vm3145, %v3147, %v3143
    %v3149 = vmul.f32 1.0, %v3148
    %v3150 = vrcp.pop %v3133
    %v3151 = vmul.f32 %v3133, %v3150
    %v3152 = vsub.f32 1.0, %v3151
    %v3153 = vmul.f32 %v3150, %v3152
    %v3154 = vadd.f32 %v3150, %v3153
    %vm3155 = vweird.f32 %v3133
    %vm3156 = vweird.f32 %v3150
    %vm3157 = vmor %vm3155, %vm3156
    %v3158 = vsel %vm3157, %v3150, %v3154
    %v3159 = vand.u32 2147483647, %v3133
    %vm3160 = vcmp.eq.f32.partialorder %v3159, 8.507059e+37
    %v3161 = vand.u32 %v3133, 2147483648
    %v3162 = vor.u32 1.1754944e-38, %v3161
    %v3163 = vsel %vm3160, %v3162, %v3158
    %v3164 = vmul.f32 1.0, %v3163
    %v3165 = vrcp.pop %v3134
    %v3166 = vmul.f32 %v3134, %v3165
    %v3167 = vsub.f32 1.0, %v3166
    %v3168 = vmul.f32 %v3165, %v3167
    %v3169 = vadd.f32 %v3165, %v3168
    %vm3170 = vweird.f32 %v3134
    %vm3171 = vweird.f32 %v3165
    %vm3172 = vmor %vm3170, %vm3171
    %v3173 = vsel %vm3172, %v3165, %v3169
    %v3174 = vand.u32 2147483647, %v3134
    %vm3175 = vcmp.eq.f32.partialorder %v3174, 8.507059e+37
    %v3176 = vand.u32 %v3134, 2147483648
    %v3177 = vor.u32 1.1754944e-38, %v3176
    %v3178 = vsel %vm3175, %v3177, %v3173
    %v3179 = vmul.f32 1.0, %v3178
    %v3180 = vtanh.pop %v3122
    %v3181 = vmul.f32 %v3164, %v2671
    %v3182 = vmul.f32 %v3149, %v3180
    %v3183 = vadd.f32 %v3181, %v3182
    %v3184 = vtanh.pop %v3183
    %v3185 = vmul.f32 %v3179, %v3184
    %s3186 = scalar_lea.vmem [#allocation4], 40
    %3187 = vst [vmem:[%s3186] sm:$0xff] %v3185
    %s3188 = sld [smem:[#allocation6 + $0x5]]
    %p3189 = scmp.eq.s32.totalorder %s3188, 0
    // Predicated region
    $region65: #{tpu_custom_call.1} parent=1 // pred_check
      %p3190 = pneg %p3189
    $region66: #{tpu_custom_call.1} parent=1 // pred_check_branch
      %3192 = sbr.rel (%p3190) target = $region68
    $region67: #{tpu_custom_call.1} parent=1 // pred_region
      %v3193 = vld [vmem:[%s7] sm:$0xff]
      %v3194 = vld [vmem:[%s7 + $0x8] sm:$0xff]
      %v3195 = vld [vmem:[%s7 + $0x10] sm:$0xff]
      %v3196 = vld [vmem:[%s7 + $0x18] sm:$0xff]
      %v3197 = vld [vmem:[%s7 + $0x20] sm:$0xff]
      %v3198 = vld [vmem:[%s7 + $0x28] sm:$0xff]
      %v3199 = vld [vmem:[%s7 + $0x30] sm:$0xff]
      %v3200 = vld [vmem:[%s7 + $0x38] sm:$0xff]
      %v3201 = vld [vmem:[%s7 + $0x40] sm:$0xff]
      %v3202 = vld [vmem:[%s7 + $0x48] sm:$0xff]
      %v3203 = vld [vmem:[%s7 + $0x50] sm:$0xff]
      %v3204 = vld [vmem:[%s7 + $0x58] sm:$0xff]
      %v3205 = vld [vmem:[%s7 + $0x60] sm:$0xff]
      %v3206 = vld [vmem:[%s7 + $0x68] sm:$0xff]
      %v3207 = vld [vmem:[%s7 + $0x70] sm:$0xff]
      %v3208 = vld [vmem:[%s7 + $0x78] sm:$0xff]
      %v3209 = vld [vmem:[%s7 + $0x80] sm:$0xff]
      %v3210 = vld [vmem:[%s7 + $0x88] sm:$0xff]
      %v3211 = vld [vmem:[%s7 + $0x90] sm:$0xff]
      %v3212 = vld [vmem:[%s7 + $0x98] sm:$0xff]
      %v3213 = vld [vmem:[%s7 + $0xa0] sm:$0xff]
      %v3214 = vld [vmem:[%s7 + $0xa8] sm:$0xff]
      %v3215 = vld [vmem:[%s7 + $0xb0] sm:$0xff]
      %v3216 = vld [vmem:[%s7 + $0xb8] sm:$0xff]
      %v3217 = vld [vmem:[%s7 + $0xc0] sm:$0xff]
      %v3218 = vld [vmem:[%s7 + $0xc8] sm:$0xff]
      %v3219 = vld [vmem:[%s7 + $0xd0] sm:$0xff]
      %v3220 = vld [vmem:[%s7 + $0xd8] sm:$0xff]
      %v3221 = vld [vmem:[%s7 + $0xe0] sm:$0xff]
      %v3222 = vld [vmem:[%s7 + $0xe8] sm:$0xff]
      %v3223 = vld [vmem:[%s7 + $0xf0] sm:$0xff]
      %v3224 = vld [vmem:[%s7 + $0xf8] sm:$0xff]
      %v3225 = vld [vmem:[%s8] sm:$0x3]
      %v3227 = vperm.slane %v3225, 0
      %v3228 = vperm.slane %v3225, 1
      %3231 = vmatpush.msra.mxu0 %v3223
      %3232 = vmatpush.msra.mxu0 %v3221
      %3233 = vmatpush.msra.mxu0 %v3219
      %3234 = vmatpush.msra.mxu0 %v3217
      %3235 = vmatpush.msra.mxu0 %v3215
      %3236 = vmatpush.msra.mxu0 %v3213
      %3237 = vmatpush.msra.mxu0 %v3211
      %3238 = vmatpush.msra.mxu0 %v3209
      %3239 = vmatpush.msra.mxu0 %v3207
      %3240 = vmatpush.msra.mxu0 %v3205
      %3241 = vmatpush.msra.mxu0 %v3203
      %3242 = vmatpush.msra.mxu0 %v3201
      %3243 = vmatpush.msra.mxu0 %v3199
      %3244 = vmatpush.msra.mxu0 %v3197
      %3245 = vmatpush.msra.mxu0 %v3195
      %3246 = vmatpush.msra.mxu0 %v3193
      %3247 = vmatmul.f32.gmra.mxu0 %v3185
      %v3248 = vpop.f32.mrf.mxu0
      %v3249 = vadd.f32 %v3227, %v3248
      %3250 = vdwg.mxu0
      %3251 = vmatpush.msra.mxu0 %v3224
      %3252 = vmatpush.msra.mxu0 %v3222
      %3253 = vmatpush.msra.mxu0 %v3220
      %3254 = vmatpush.msra.mxu0 %v3218
      %3255 = vmatpush.msra.mxu0 %v3216
      %3256 = vmatpush.msra.mxu0 %v3214
      %3257 = vmatpush.msra.mxu0 %v3212
      %3258 = vmatpush.msra.mxu0 %v3210
      %3259 = vmatpush.msra.mxu0 %v3208
      %3260 = vmatpush.msra.mxu0 %v3206
      %3261 = vmatpush.msra.mxu0 %v3204
      %3262 = vmatpush.msra.mxu0 %v3202
      %3263 = vmatpush.msra.mxu0 %v3200
      %3264 = vmatpush.msra.mxu0 %v3198
      %3265 = vmatpush.msra.mxu0 %v3196
      %3266 = vmatpush.msra.mxu0 %v3194
      %3267 = vmatmul.f32.gmra.mxu0 %v3185
      %v3268 = vpop.f32.mrf.mxu0
      %v3269 = vadd.f32 %v3228, %v3268
      %3270 = vdwg.mxu0
      %v3271 = vlaneseq
      %v3272 = vand.u32 %v3271, 127
      %v3273 = vadd.s32 %v3272, 128
      %vm3274 = vcmp.ge.f32.partialorder %v3249, %v3269
      %v3275 = vsel %vm3274, %v3249, %v3269
      %v3276 = vsel %vm3274, %v3272, %v3273
      %3277 = vmax.index.xlane.f32.xlu0 %v3275
      %v3278 = vpop.xlane.xlu0 %3277
      %3279 = vset.pattern.permute.xlu0 %v3278
      %3280 = vperm.xlu0 %3279, %v3276
      %v3281 = vpop.permute.xlu0 %3280
      %vm3282 = vcmp.eq.s32.totalorder %v3272, %v3281
      %vm3283 = vcmp.eq.s32.totalorder %v3273, %v3281
      %v3284 = vsel %vm3282, 1, 0
      %v3285 = vsel %vm3283, 1, 0
      %v3286 = vcvt.s32.f32 %v3284
      %v3287 = vcvt.s32.f32 %v3285
      %v3288 = vld [vmem:[%s3] sm:$0xff]
      %v3289 = vld [vmem:[%s3 + $0x8] sm:$0xff]
      %v3290 = vld [vmem:[%s3 + $0x10] sm:$0xff]
      %v3291 = vld [vmem:[%s3 + $0x18] sm:$0xff]
      %v3292 = vld [vmem:[%s3 + $0x20] sm:$0xff]
      %v3293 = vld [vmem:[%s3 + $0x28] sm:$0xff]
      %v3294 = vld [vmem:[%s3 + $0x30] sm:$0xff]
      %v3295 = vld [vmem:[%s3 + $0x38] sm:$0xff]
      %v3296 = vld [vmem:[%s3 + $0x40] sm:$0xff]
      %v3297 = vld [vmem:[%s3 + $0x48] sm:$0xff]
      %v3298 = vld [vmem:[%s3 + $0x50] sm:$0xff]
      %v3299 = vld [vmem:[%s3 + $0x58] sm:$0xff]
      %v3300 = vld [vmem:[%s3 + $0x60] sm:$0xff]
      %v3301 = vld [vmem:[%s3 + $0x68] sm:$0xff]
      %v3302 = vld [vmem:[%s3 + $0x70] sm:$0xff]
      %v3303 = vld [vmem:[%s3 + $0x78] sm:$0xff]
      %v3304 = vld [vmem:[%s3 + $0x80] sm:$0xff]
      %v3305 = vld [vmem:[%s3 + $0x88] sm:$0xff]
      %v3306 = vld [vmem:[%s3 + $0x90] sm:$0xff]
      %v3307 = vld [vmem:[%s3 + $0x98] sm:$0xff]
      %v3308 = vld [vmem:[%s3 + $0xa0] sm:$0xff]
      %v3309 = vld [vmem:[%s3 + $0xa8] sm:$0xff]
      %v3310 = vld [vmem:[%s3 + $0xb0] sm:$0xff]
      %v3311 = vld [vmem:[%s3 + $0xb8] sm:$0xff]
      %v3312 = vld [vmem:[%s3 + $0xc0] sm:$0xff]
      %v3313 = vld [vmem:[%s3 + $0xc8] sm:$0xff]
      %v3314 = vld [vmem:[%s3 + $0xd0] sm:$0xff]
      %v3315 = vld [vmem:[%s3 + $0xd8] sm:$0xff]
      %v3316 = vld [vmem:[%s3 + $0xe0] sm:$0xff]
      %v3317 = vld [vmem:[%s3 + $0xe8] sm:$0xff]
      %v3318 = vld [vmem:[%s3 + $0xf0] sm:$0xff]
      %v3319 = vld [vmem:[%s3 + $0xf8] sm:$0xff]
      %3320 = vmatpush.msra.mxu0 %v3303
      %3321 = vmatpush.msra.mxu0 %v3302
      %3322 = vmatpush.msra.mxu0 %v3301
      %3323 = vmatpush.msra.mxu0 %v3300
      %3324 = vmatpush.msra.mxu0 %v3299
      %3325 = vmatpush.msra.mxu0 %v3298
      %3326 = vmatpush.msra.mxu0 %v3297
      %3327 = vmatpush.msra.mxu0 %v3296
      %3328 = vmatpush.msra.mxu0 %v3295
      %3329 = vmatpush.msra.mxu0 %v3294
      %3330 = vmatpush.msra.mxu0 %v3293
      %3331 = vmatpush.msra.mxu0 %v3292
      %3332 = vmatpush.msra.mxu0 %v3291
      %3333 = vmatpush.msra.mxu0 %v3290
      %3334 = vmatpush.msra.mxu0 %v3289
      %3335 = vmatpush.msra.mxu0 %v3288
      %3336 = vmatmul.f32.gmra.mxu0 %v3286
      %v3337 = vpop.f32.mrf.mxu0
      %v3338 = vadd.f32 0.0, %v3337
      %3339 = vdwg.mxu0
      %3340 = vmatpush.msra.mxu0 %v3319
      %3341 = vmatpush.msra.mxu0 %v3318
      %3342 = vmatpush.msra.mxu0 %v3317
      %3343 = vmatpush.msra.mxu0 %v3316
      %3344 = vmatpush.msra.mxu0 %v3315
      %3345 = vmatpush.msra.mxu0 %v3314
      %3346 = vmatpush.msra.mxu0 %v3313
      %3347 = vmatpush.msra.mxu0 %v3312
      %3348 = vmatpush.msra.mxu0 %v3311
      %3349 = vmatpush.msra.mxu0 %v3310
      %3350 = vmatpush.msra.mxu0 %v3309
      %3351 = vmatpush.msra.mxu0 %v3308
      %3352 = vmatpush.msra.mxu0 %v3307
      %3353 = vmatpush.msra.mxu0 %v3306
      %3354 = vmatpush.msra.mxu0 %v3305
      %3355 = vmatpush.msra.mxu0 %v3304
      %3356 = vmatmul.f32.gmra.mxu0 %v3287
      %v3357 = vpop.f32.mrf.mxu0
      %v3358 = vadd.f32 %v3338, %v3357
      %3359 = vdwg.mxu0
      %v3360 = vld [vmem:[#allocation8] sm:$0xff]
      %v3361 = vld [vmem:[#allocation8 + $0x8] sm:$0xff]
      %v3362 = vld [vmem:[#allocation8 + $0x10] sm:$0xff]
      %v3363 = vld [vmem:[#allocation8 + $0x18] sm:$0xff]
      %v3364 = vld [vmem:[#allocation8 + $0x20] sm:$0xff]
      %v3365 = vld [vmem:[#allocation8 + $0x28] sm:$0xff]
      %v3366 = vld [vmem:[#allocation8 + $0x30] sm:$0xff]
      %v3367 = vld [vmem:[#allocation8 + $0x38] sm:$0xff]
      %v3368 = vld [vmem:[#allocation8 + $0x40] sm:$0xff]
      %v3369 = vld [vmem:[#allocation8 + $0x48] sm:$0xff]
      %v3370 = vld [vmem:[#allocation8 + $0x50] sm:$0xff]
      %v3371 = vld [vmem:[#allocation8 + $0x58] sm:$0xff]
      %v3372 = vld [vmem:[#allocation8 + $0x60] sm:$0xff]
      %v3373 = vld [vmem:[#allocation8 + $0x68] sm:$0xff]
      %v3374 = vld [vmem:[#allocation8 + $0x70] sm:$0xff]
      %v3375 = vld [vmem:[#allocation8 + $0x78] sm:$0xff]
      %v3377 = vsel %vm173, %v3358, 0
      %3379 = vmatpush.msra.mxu0 0.0
      %3380 = vmatpush.msra.mxu0 0.0
      %3381 = vmatpush.msra.mxu0 0.0
      %3382 = vmatpush.msra.mxu0 0.0
      %3383 = vmatpush.msra.mxu0 0.0
      %3384 = vmatpush.msra.mxu0 0.0
      %3385 = vmatpush.msra.mxu0 0.0
      %3386 = vmatpush.msra.mxu0 0.0
      %3387 = vmatpush.msra.mxu0 0.0
      %3388 = vmatpush.msra.mxu0 0.0
      %3389 = vmatpush.msra.mxu0 0.0
      %3390 = vmatpush.msra.mxu0 0.0
      %3391 = vmatpush.msra.mxu0 %v3372
      %3392 = vmatpush.msra.mxu0 %v3368
      %3393 = vmatpush.msra.mxu0 %v3364
      %3394 = vmatpush.msra.mxu0 %v3360
      %3395 = vmatmul.f32.gmra.mxu0 %v3377
      %v3396 = vpop.f32.mrf.mxu0
      %v3397 = vadd.f32 0.0, %v3396
      %3398 = vdwg.mxu0
      %3399 = vmatpush.msra.mxu0 0.0
      %3400 = vmatpush.msra.mxu0 0.0
      %3401 = vmatpush.msra.mxu0 0.0
      %3402 = vmatpush.msra.mxu0 0.0
      %3403 = vmatpush.msra.mxu0 0.0
      %3404 = vmatpush.msra.mxu0 0.0
      %3405 = vmatpush.msra.mxu0 0.0
      %3406 = vmatpush.msra.mxu0 0.0
      %3407 = vmatpush.msra.mxu0 0.0
      %3408 = vmatpush.msra.mxu0 0.0
      %3409 = vmatpush.msra.mxu0 0.0
      %3410 = vmatpush.msra.mxu0 0.0
      %3411 = vmatpush.msra.mxu0 %v3373
      %3412 = vmatpush.msra.mxu0 %v3369
      %3413 = vmatpush.msra.mxu0 %v3365
      %3414 = vmatpush.msra.mxu0 %v3361
      %3415 = vmatmul.f32.gmra.mxu0 %v3377
      %v3416 = vpop.f32.mrf.mxu0
      %v3417 = vadd.f32 0.0, %v3416
      %3418 = vdwg.mxu0
      %3419 = vmatpush.msra.mxu0 0.0
      %3420 = vmatpush.msra.mxu0 0.0
      %3421 = vmatpush.msra.mxu0 0.0
      %3422 = vmatpush.msra.mxu0 0.0
      %3423 = vmatpush.msra.mxu0 0.0
      %3424 = vmatpush.msra.mxu0 0.0
      %3425 = vmatpush.msra.mxu0 0.0
      %3426 = vmatpush.msra.mxu0 0.0
      %3427 = vmatpush.msra.mxu0 0.0
      %3428 = vmatpush.msra.mxu0 0.0
      %3429 = vmatpush.msra.mxu0 0.0
      %3430 = vmatpush.msra.mxu0 0.0
      %3431 = vmatpush.msra.mxu0 %v3374
      %3432 = vmatpush.msra.mxu0 %v3370
      %3433 = vmatpush.msra.mxu0 %v3366
      %3434 = vmatpush.msra.mxu0 %v3362
      %3435 = vmatmul.f32.gmra.mxu0 %v3377
      %v3436 = vpop.f32.mrf.mxu0
      %v3437 = vadd.f32 0.0, %v3436
      %3438 = vdwg.mxu0
      %3439 = vmatpush.msra.mxu0 0.0
      %3440 = vmatpush.msra.mxu0 0.0
      %3441 = vmatpush.msra.mxu0 0.0
      %3442 = vmatpush.msra.mxu0 0.0
      %3443 = vmatpush.msra.mxu0 0.0
      %3444 = vmatpush.msra.mxu0 0.0
      %3445 = vmatpush.msra.mxu0 0.0
      %3446 = vmatpush.msra.mxu0 0.0
      %3447 = vmatpush.msra.mxu0 0.0
      %3448 = vmatpush.msra.mxu0 0.0
      %3449 = vmatpush.msra.mxu0 0.0
      %3450 = vmatpush.msra.mxu0 0.0
      %3451 = vmatpush.msra.mxu0 %v3375
      %3452 = vmatpush.msra.mxu0 %v3371
      %3453 = vmatpush.msra.mxu0 %v3367
      %3454 = vmatpush.msra.mxu0 %v3363
      %3455 = vmatmul.f32.gmra.mxu0 %v3377
      %v3456 = vpop.f32.mrf.mxu0
      %v3457 = vadd.f32 0.0, %v3456
      %3458 = vdwg.mxu0
      %s3459 = smul.u32 6, 4
      %s3460 = smul.addr %s3459, 8
      %s3461 = scalar_lea.vmem [#allocation3], %s3460
      %3462 = vst [vmem:[%s3461] sm:$0xff] %v3397
      %3463 = vst [vmem:[%s3461 + $0x8] sm:$0xff] %v3417
      %3464 = vst [vmem:[%s3461 + $0x10] sm:$0xff] %v3437
      %3465 = vst [vmem:[%s3461 + $0x18] sm:$0xff] %v3457
    $region68: #{tpu_custom_call.1} parent=1 // pred_fallthru
      _
    %s3466 = smul.u32 6, 4
    %s3467 = smul.addr %s3466, 8
    %s3468 = scalar_lea.vmem [#allocation3], %s3467
    %v3469 = vld [vmem:[%s3468] sm:$0xff]
    %v3470 = vld [vmem:[%s3468 + $0x8] sm:$0xff]
    %v3471 = vld [vmem:[%s3468 + $0x10] sm:$0xff]
    %v3472 = vld [vmem:[%s3468 + $0x18] sm:$0xff]
    %v3473 = vld [vmem:[#allocation11] sm:$0xff]
    %v3474 = vld [vmem:[#allocation11 + $0x8] sm:$0xff]
    %v3475 = vld [vmem:[#allocation11 + $0x10] sm:$0xff]
    %v3476 = vld [vmem:[#allocation11 + $0x18] sm:$0xff]
    %v3477 = vld [vmem:[#allocation11 + $0x20] sm:$0xff]
    %v3478 = vld [vmem:[#allocation11 + $0x28] sm:$0xff]
    %v3479 = vld [vmem:[#allocation11 + $0x30] sm:$0xff]
    %v3480 = vld [vmem:[#allocation11 + $0x38] sm:$0xff]
    %v3481 = vld [vmem:[#allocation11 + $0x40] sm:$0xff]
    %v3482 = vld [vmem:[#allocation11 + $0x48] sm:$0xff]
    %v3483 = vld [vmem:[#allocation11 + $0x50] sm:$0xff]
    %v3484 = vld [vmem:[#allocation11 + $0x58] sm:$0xff]
    %v3485 = vld [vmem:[#allocation11 + $0x60] sm:$0xff]
    %v3486 = vld [vmem:[#allocation11 + $0x68] sm:$0xff]
    %v3487 = vld [vmem:[#allocation11 + $0x70] sm:$0xff]
    %v3488 = vld [vmem:[#allocation11 + $0x78] sm:$0xff]
    %v3489 = vld [vmem:[#allocation11 + $0x80] sm:$0xff]
    %v3490 = vld [vmem:[#allocation11 + $0x88] sm:$0xff]
    %v3491 = vld [vmem:[#allocation11 + $0x90] sm:$0xff]
    %v3492 = vld [vmem:[#allocation11 + $0x98] sm:$0xff]
    %v3493 = vld [vmem:[#allocation11 + $0xa0] sm:$0xff]
    %v3494 = vld [vmem:[#allocation11 + $0xa8] sm:$0xff]
    %v3495 = vld [vmem:[#allocation11 + $0xb0] sm:$0xff]
    %v3496 = vld [vmem:[#allocation11 + $0xb8] sm:$0xff]
    %v3497 = vld [vmem:[#allocation11 + $0xc0] sm:$0xff]
    %v3498 = vld [vmem:[#allocation11 + $0xc8] sm:$0xff]
    %v3499 = vld [vmem:[#allocation11 + $0xd0] sm:$0xff]
    %v3500 = vld [vmem:[#allocation11 + $0xd8] sm:$0xff]
    %v3501 = vld [vmem:[#allocation11 + $0xe0] sm:$0xff]
    %v3502 = vld [vmem:[#allocation11 + $0xe8] sm:$0xff]
    %v3503 = vld [vmem:[#allocation11 + $0xf0] sm:$0xff]
    %v3504 = vld [vmem:[#allocation11 + $0xf8] sm:$0xff]
    %v3505 = vld [vmem:[#allocation11 + $0x100] sm:$0xff]
    %v3506 = vld [vmem:[#allocation11 + $0x108] sm:$0xff]
    %v3507 = vld [vmem:[#allocation11 + $0x110] sm:$0xff]
    %v3508 = vld [vmem:[#allocation11 + $0x118] sm:$0xff]
    %v3509 = vld [vmem:[#allocation11 + $0x120] sm:$0xff]
    %v3510 = vld [vmem:[#allocation11 + $0x128] sm:$0xff]
    %v3511 = vld [vmem:[#allocation11 + $0x130] sm:$0xff]
    %v3512 = vld [vmem:[#allocation11 + $0x138] sm:$0xff]
    %v3513 = vld [vmem:[#allocation11 + $0x140] sm:$0xff]
    %v3514 = vld [vmem:[#allocation11 + $0x148] sm:$0xff]
    %v3515 = vld [vmem:[#allocation11 + $0x150] sm:$0xff]
    %v3516 = vld [vmem:[#allocation11 + $0x158] sm:$0xff]
    %v3517 = vld [vmem:[#allocation11 + $0x160] sm:$0xff]
    %v3518 = vld [vmem:[#allocation11 + $0x168] sm:$0xff]
    %v3519 = vld [vmem:[#allocation11 + $0x170] sm:$0xff]
    %v3520 = vld [vmem:[#allocation11 + $0x178] sm:$0xff]
    %v3521 = vld [vmem:[#allocation11 + $0x180] sm:$0xff]
    %v3522 = vld [vmem:[#allocation11 + $0x188] sm:$0xff]
    %v3523 = vld [vmem:[#allocation11 + $0x190] sm:$0xff]
    %v3524 = vld [vmem:[#allocation11 + $0x198] sm:$0xff]
    %v3525 = vld [vmem:[#allocation11 + $0x1a0] sm:$0xff]
    %v3526 = vld [vmem:[#allocation11 + $0x1a8] sm:$0xff]
    %v3527 = vld [vmem:[#allocation11 + $0x1b0] sm:$0xff]
    %v3528 = vld [vmem:[#allocation11 + $0x1b8] sm:$0xff]
    %v3529 = vld [vmem:[#allocation11 + $0x1c0] sm:$0xff]
    %v3530 = vld [vmem:[#allocation11 + $0x1c8] sm:$0xff]
    %v3531 = vld [vmem:[#allocation11 + $0x1d0] sm:$0xff]
    %v3532 = vld [vmem:[#allocation11 + $0x1d8] sm:$0xff]
    %v3533 = vld [vmem:[#allocation11 + $0x1e0] sm:$0xff]
    %v3534 = vld [vmem:[#allocation11 + $0x1e8] sm:$0xff]
    %v3535 = vld [vmem:[#allocation11 + $0x1f0] sm:$0xff]
    %v3536 = vld [vmem:[#allocation11 + $0x1f8] sm:$0xff]
    %3537 = vmatpush.msra.mxu0 %v3533
    %3538 = vmatpush.msra.mxu0 %v3529
    %3539 = vmatpush.msra.mxu0 %v3525
    %3540 = vmatpush.msra.mxu0 %v3521
    %3541 = vmatpush.msra.mxu0 %v3517
    %3542 = vmatpush.msra.mxu0 %v3513
    %3543 = vmatpush.msra.mxu0 %v3509
    %3544 = vmatpush.msra.mxu0 %v3505
    %3545 = vmatpush.msra.mxu0 %v3501
    %3546 = vmatpush.msra.mxu0 %v3497
    %3547 = vmatpush.msra.mxu0 %v3493
    %3548 = vmatpush.msra.mxu0 %v3489
    %3549 = vmatpush.msra.mxu0 %v3485
    %3550 = vmatpush.msra.mxu0 %v3481
    %3551 = vmatpush.msra.mxu0 %v3477
    %3552 = vmatpush.msra.mxu0 %v3473
    %3553 = vmatmul.f32.gmra.mxu0 %v3185
    %v3554 = vpop.f32.mrf.mxu0
    %v3555 = vadd.f32 0.0, %v3554
    %3556 = vdwg.mxu0
    %3557 = vmatpush.msra.mxu0 %v3534
    %3558 = vmatpush.msra.mxu0 %v3530
    %3559 = vmatpush.msra.mxu0 %v3526
    %3560 = vmatpush.msra.mxu0 %v3522
    %3561 = vmatpush.msra.mxu0 %v3518
    %3562 = vmatpush.msra.mxu0 %v3514
    %3563 = vmatpush.msra.mxu0 %v3510
    %3564 = vmatpush.msra.mxu0 %v3506
    %3565 = vmatpush.msra.mxu0 %v3502
    %3566 = vmatpush.msra.mxu0 %v3498
    %3567 = vmatpush.msra.mxu0 %v3494
    %3568 = vmatpush.msra.mxu0 %v3490
    %3569 = vmatpush.msra.mxu0 %v3486
    %3570 = vmatpush.msra.mxu0 %v3482
    %3571 = vmatpush.msra.mxu0 %v3478
    %3572 = vmatpush.msra.mxu0 %v3474
    %3573 = vmatmul.f32.gmra.mxu0 %v3185
    %v3574 = vpop.f32.mrf.mxu0
    %v3575 = vadd.f32 0.0, %v3574
    %3576 = vdwg.mxu0
    %3577 = vmatpush.msra.mxu0 %v3535
    %3578 = vmatpush.msra.mxu0 %v3531
    %3579 = vmatpush.msra.mxu0 %v3527
    %3580 = vmatpush.msra.mxu0 %v3523
    %3581 = vmatpush.msra.mxu0 %v3519
    %3582 = vmatpush.msra.mxu0 %v3515
    %3583 = vmatpush.msra.mxu0 %v3511
    %3584 = vmatpush.msra.mxu0 %v3507
    %3585 = vmatpush.msra.mxu0 %v3503
    %3586 = vmatpush.msra.mxu0 %v3499
    %3587 = vmatpush.msra.mxu0 %v3495
    %3588 = vmatpush.msra.mxu0 %v3491
    %3589 = vmatpush.msra.mxu0 %v3487
    %3590 = vmatpush.msra.mxu0 %v3483
    %3591 = vmatpush.msra.mxu0 %v3479
    %3592 = vmatpush.msra.mxu0 %v3475
    %3593 = vmatmul.f32.gmra.mxu0 %v3185
    %v3594 = vpop.f32.mrf.mxu0
    %v3595 = vadd.f32 0.0, %v3594
    %3596 = vdwg.mxu0
    %3597 = vmatpush.msra.mxu0 %v3536
    %3598 = vmatpush.msra.mxu0 %v3532
    %3599 = vmatpush.msra.mxu0 %v3528
    %3600 = vmatpush.msra.mxu0 %v3524
    %3601 = vmatpush.msra.mxu0 %v3520
    %3602 = vmatpush.msra.mxu0 %v3516
    %3603 = vmatpush.msra.mxu0 %v3512
    %3604 = vmatpush.msra.mxu0 %v3508
    %3605 = vmatpush.msra.mxu0 %v3504
    %3606 = vmatpush.msra.mxu0 %v3500
    %3607 = vmatpush.msra.mxu0 %v3496
    %3608 = vmatpush.msra.mxu0 %v3492
    %3609 = vmatpush.msra.mxu0 %v3488
    %3610 = vmatpush.msra.mxu0 %v3484
    %3611 = vmatpush.msra.mxu0 %v3480
    %3612 = vmatpush.msra.mxu0 %v3476
    %3613 = vmatmul.f32.gmra.mxu0 %v3185
    %v3614 = vpop.f32.mrf.mxu0
    %v3615 = vadd.f32 0.0, %v3614
    %3616 = vdwg.mxu0
    %v3617 = vadd.f32 %v3469, %v3555
    %v3618 = vadd.f32 %v3470, %v3575
    %v3619 = vadd.f32 %v3471, %v3595
    %v3620 = vadd.f32 %v3472, %v3615
    %v3621 = vld [vmem:[%s6] sm:$0xf]
    %v3623 = vperm.slane %v3621, 0
    %v3624 = vperm.slane %v3621, 1
    %v3625 = vperm.slane %v3621, 2
    %v3626 = vperm.slane %v3621, 3
    %v3631 = vadd.f32 %v3617, %v3623
    %v3632 = vadd.f32 %v3618, %v3624
    %v3633 = vadd.f32 %v3619, %v3625
    %v3634 = vadd.f32 %v3620, %v3626
    %v3635 = vxor.u32 %v3631, 2147483648
    %v3636 = vxor.u32 %v3632, 2147483648
    %v3637 = vxor.u32 %v3633, 2147483648
    %v3638 = vmul.f32 %v3635, 1.442695
    %v3639 = vpow.pop %v3638
    %v3640 = vmul.f32 %v3636, 1.442695
    %v3641 = vpow.pop %v3640
    %v3642 = vmul.f32 %v3637, 1.442695
    %v3643 = vpow.pop %v3642
    %v3644 = vadd.f32 %v3639, 1.0
    %v3645 = vadd.f32 %v3641, 1.0
    %v3646 = vadd.f32 %v3643, 1.0
    %v3647 = vrcp.pop %v3644
    %v3648 = vmul.f32 %v3644, %v3647
    %v3649 = vsub.f32 1.0, %v3648
    %v3650 = vmul.f32 %v3647, %v3649
    %v3651 = vadd.f32 %v3647, %v3650
    %vm3652 = vweird.f32 %v3644
    %vm3653 = vweird.f32 %v3647
    %vm3654 = vmor %vm3652, %vm3653
    %v3655 = vsel %vm3654, %v3647, %v3651
    %v3656 = vand.u32 2147483647, %v3644
    %vm3657 = vcmp.eq.f32.partialorder %v3656, 8.507059e+37
    %v3658 = vand.u32 %v3644, 2147483648
    %v3659 = vor.u32 1.1754944e-38, %v3658
    %v3660 = vsel %vm3657, %v3659, %v3655
    %v3661 = vmul.f32 1.0, %v3660
    %v3662 = vrcp.pop %v3645
    %v3663 = vmul.f32 %v3645, %v3662
    %v3664 = vsub.f32 1.0, %v3663
    %v3665 = vmul.f32 %v3662, %v3664
    %v3666 = vadd.f32 %v3662, %v3665
    %vm3667 = vweird.f32 %v3645
    %vm3668 = vweird.f32 %v3662
    %vm3669 = vmor %vm3667, %vm3668
    %v3670 = vsel %vm3669, %v3662, %v3666
    %v3671 = vand.u32 2147483647, %v3645
    %vm3672 = vcmp.eq.f32.partialorder %v3671, 8.507059e+37
    %v3673 = vand.u32 %v3645, 2147483648
    %v3674 = vor.u32 1.1754944e-38, %v3673
    %v3675 = vsel %vm3672, %v3674, %v3670
    %v3676 = vmul.f32 1.0, %v3675
    %v3677 = vrcp.pop %v3646
    %v3678 = vmul.f32 %v3646, %v3677
    %v3679 = vsub.f32 1.0, %v3678
    %v3680 = vmul.f32 %v3677, %v3679
    %v3681 = vadd.f32 %v3677, %v3680
    %vm3682 = vweird.f32 %v3646
    %vm3683 = vweird.f32 %v3677
    %vm3684 = vmor %vm3682, %vm3683
    %v3685 = vsel %vm3684, %v3677, %v3681
    %v3686 = vand.u32 2147483647, %v3646
    %vm3687 = vcmp.eq.f32.partialorder %v3686, 8.507059e+37
    %v3688 = vand.u32 %v3646, 2147483648
    %v3689 = vor.u32 1.1754944e-38, %v3688
    %v3690 = vsel %vm3687, %v3689, %v3685
    %v3691 = vmul.f32 1.0, %v3690
    %v3692 = vtanh.pop %v3634
    %v3693 = vmul.f32 %v3676, %v3183
    %v3694 = vmul.f32 %v3661, %v3692
    %v3695 = vadd.f32 %v3693, %v3694
    %v3696 = vtanh.pop %v3695
    %v3697 = vmul.f32 %v3691, %v3696
    %s3698 = scalar_lea.vmem [#allocation4], 48
    %3699 = vst [vmem:[%s3698] sm:$0xff] %v3697
    %s3700 = sld [smem:[#allocation6 + $0x6]]
    %p3701 = scmp.eq.s32.totalorder %s3700, 0
    // Predicated region
    $region69: #{tpu_custom_call.1} parent=1 // pred_check
      %p3702 = pneg %p3701
    $region70: #{tpu_custom_call.1} parent=1 // pred_check_branch
      %3704 = sbr.rel (%p3702) target = $region72
    $region71: #{tpu_custom_call.1} parent=1 // pred_region
      %v3705 = vld [vmem:[%s7] sm:$0xff]
      %v3706 = vld [vmem:[%s7 + $0x8] sm:$0xff]
      %v3707 = vld [vmem:[%s7 + $0x10] sm:$0xff]
      %v3708 = vld [vmem:[%s7 + $0x18] sm:$0xff]
      %v3709 = vld [vmem:[%s7 + $0x20] sm:$0xff]
      %v3710 = vld [vmem:[%s7 + $0x28] sm:$0xff]
      %v3711 = vld [vmem:[%s7 + $0x30] sm:$0xff]
      %v3712 = vld [vmem:[%s7 + $0x38] sm:$0xff]
      %v3713 = vld [vmem:[%s7 + $0x40] sm:$0xff]
      %v3714 = vld [vmem:[%s7 + $0x48] sm:$0xff]
      %v3715 = vld [vmem:[%s7 + $0x50] sm:$0xff]
      %v3716 = vld [vmem:[%s7 + $0x58] sm:$0xff]
      %v3717 = vld [vmem:[%s7 + $0x60] sm:$0xff]
      %v3718 = vld [vmem:[%s7 + $0x68] sm:$0xff]
      %v3719 = vld [vmem:[%s7 + $0x70] sm:$0xff]
      %v3720 = vld [vmem:[%s7 + $0x78] sm:$0xff]
      %v3721 = vld [vmem:[%s7 + $0x80] sm:$0xff]
      %v3722 = vld [vmem:[%s7 + $0x88] sm:$0xff]
      %v3723 = vld [vmem:[%s7 + $0x90] sm:$0xff]
      %v3724 = vld [vmem:[%s7 + $0x98] sm:$0xff]
      %v3725 = vld [vmem:[%s7 + $0xa0] sm:$0xff]
      %v3726 = vld [vmem:[%s7 + $0xa8] sm:$0xff]
      %v3727 = vld [vmem:[%s7 + $0xb0] sm:$0xff]
      %v3728 = vld [vmem:[%s7 + $0xb8] sm:$0xff]
      %v3729 = vld [vmem:[%s7 + $0xc0] sm:$0xff]
      %v3730 = vld [vmem:[%s7 + $0xc8] sm:$0xff]
      %v3731 = vld [vmem:[%s7 + $0xd0] sm:$0xff]
      %v3732 = vld [vmem:[%s7 + $0xd8] sm:$0xff]
      %v3733 = vld [vmem:[%s7 + $0xe0] sm:$0xff]
      %v3734 = vld [vmem:[%s7 + $0xe8] sm:$0xff]
      %v3735 = vld [vmem:[%s7 + $0xf0] sm:$0xff]
      %v3736 = vld [vmem:[%s7 + $0xf8] sm:$0xff]
      %v3737 = vld [vmem:[%s8] sm:$0x3]
      %v3739 = vperm.slane %v3737, 0
      %v3740 = vperm.slane %v3737, 1
      %3743 = vmatpush.msra.mxu0 %v3735
      %3744 = vmatpush.msra.mxu0 %v3733
      %3745 = vmatpush.msra.mxu0 %v3731
      %3746 = vmatpush.msra.mxu0 %v3729
      %3747 = vmatpush.msra.mxu0 %v3727
      %3748 = vmatpush.msra.mxu0 %v3725
      %3749 = vmatpush.msra.mxu0 %v3723
      %3750 = vmatpush.msra.mxu0 %v3721
      %3751 = vmatpush.msra.mxu0 %v3719
      %3752 = vmatpush.msra.mxu0 %v3717
      %3753 = vmatpush.msra.mxu0 %v3715
      %3754 = vmatpush.msra.mxu0 %v3713
      %3755 = vmatpush.msra.mxu0 %v3711
      %3756 = vmatpush.msra.mxu0 %v3709
      %3757 = vmatpush.msra.mxu0 %v3707
      %3758 = vmatpush.msra.mxu0 %v3705
      %3759 = vmatmul.f32.gmra.mxu0 %v3697
      %v3760 = vpop.f32.mrf.mxu0
      %v3761 = vadd.f32 %v3739, %v3760
      %3762 = vdwg.mxu0
      %3763 = vmatpush.msra.mxu0 %v3736
      %3764 = vmatpush.msra.mxu0 %v3734
      %3765 = vmatpush.msra.mxu0 %v3732
      %3766 = vmatpush.msra.mxu0 %v3730
      %3767 = vmatpush.msra.mxu0 %v3728
      %3768 = vmatpush.msra.mxu0 %v3726
      %3769 = vmatpush.msra.mxu0 %v3724
      %3770 = vmatpush.msra.mxu0 %v3722
      %3771 = vmatpush.msra.mxu0 %v3720
      %3772 = vmatpush.msra.mxu0 %v3718
      %3773 = vmatpush.msra.mxu0 %v3716
      %3774 = vmatpush.msra.mxu0 %v3714
      %3775 = vmatpush.msra.mxu0 %v3712
      %3776 = vmatpush.msra.mxu0 %v3710
      %3777 = vmatpush.msra.mxu0 %v3708
      %3778 = vmatpush.msra.mxu0 %v3706
      %3779 = vmatmul.f32.gmra.mxu0 %v3697
      %v3780 = vpop.f32.mrf.mxu0
      %v3781 = vadd.f32 %v3740, %v3780
      %3782 = vdwg.mxu0
      %v3783 = vlaneseq
      %v3784 = vand.u32 %v3783, 127
      %v3785 = vadd.s32 %v3784, 128
      %vm3786 = vcmp.ge.f32.partialorder %v3761, %v3781
      %v3787 = vsel %vm3786, %v3761, %v3781
      %v3788 = vsel %vm3786, %v3784, %v3785
      %3789 = vmax.index.xlane.f32.xlu0 %v3787
      %v3790 = vpop.xlane.xlu0 %3789
      %3791 = vset.pattern.permute.xlu0 %v3790
      %3792 = vperm.xlu0 %3791, %v3788
      %v3793 = vpop.permute.xlu0 %3792
      %vm3794 = vcmp.eq.s32.totalorder %v3784, %v3793
      %vm3795 = vcmp.eq.s32.totalorder %v3785, %v3793
      %v3796 = vsel %vm3794, 1, 0
      %v3797 = vsel %vm3795, 1, 0
      %v3798 = vcvt.s32.f32 %v3796
      %v3799 = vcvt.s32.f32 %v3797
      %v3800 = vld [vmem:[%s3] sm:$0xff]
      %v3801 = vld [vmem:[%s3 + $0x8] sm:$0xff]
      %v3802 = vld [vmem:[%s3 + $0x10] sm:$0xff]
      %v3803 = vld [vmem:[%s3 + $0x18] sm:$0xff]
      %v3804 = vld [vmem:[%s3 + $0x20] sm:$0xff]
      %v3805 = vld [vmem:[%s3 + $0x28] sm:$0xff]
      %v3806 = vld [vmem:[%s3 + $0x30] sm:$0xff]
      %v3807 = vld [vmem:[%s3 + $0x38] sm:$0xff]
      %v3808 = vld [vmem:[%s3 + $0x40] sm:$0xff]
      %v3809 = vld [vmem:[%s3 + $0x48] sm:$0xff]
      %v3810 = vld [vmem:[%s3 + $0x50] sm:$0xff]
      %v3811 = vld [vmem:[%s3 + $0x58] sm:$0xff]
      %v3812 = vld [vmem:[%s3 + $0x60] sm:$0xff]
      %v3813 = vld [vmem:[%s3 + $0x68] sm:$0xff]
      %v3814 = vld [vmem:[%s3 + $0x70] sm:$0xff]
      %v3815 = vld [vmem:[%s3 + $0x78] sm:$0xff]
      %v3816 = vld [vmem:[%s3 + $0x80] sm:$0xff]
      %v3817 = vld [vmem:[%s3 + $0x88] sm:$0xff]
      %v3818 = vld [vmem:[%s3 + $0x90] sm:$0xff]
      %v3819 = vld [vmem:[%s3 + $0x98] sm:$0xff]
      %v3820 = vld [vmem:[%s3 + $0xa0] sm:$0xff]
      %v3821 = vld [vmem:[%s3 + $0xa8] sm:$0xff]
      %v3822 = vld [vmem:[%s3 + $0xb0] sm:$0xff]
      %v3823 = vld [vmem:[%s3 + $0xb8] sm:$0xff]
      %v3824 = vld [vmem:[%s3 + $0xc0] sm:$0xff]
      %v3825 = vld [vmem:[%s3 + $0xc8] sm:$0xff]
      %v3826 = vld [vmem:[%s3 + $0xd0] sm:$0xff]
      %v3827 = vld [vmem:[%s3 + $0xd8] sm:$0xff]
      %v3828 = vld [vmem:[%s3 + $0xe0] sm:$0xff]
      %v3829 = vld [vmem:[%s3 + $0xe8] sm:$0xff]
      %v3830 = vld [vmem:[%s3 + $0xf0] sm:$0xff]
      %v3831 = vld [vmem:[%s3 + $0xf8] sm:$0xff]
      %3832 = vmatpush.msra.mxu0 %v3815
      %3833 = vmatpush.msra.mxu0 %v3814
      %3834 = vmatpush.msra.mxu0 %v3813
      %3835 = vmatpush.msra.mxu0 %v3812
      %3836 = vmatpush.msra.mxu0 %v3811
      %3837 = vmatpush.msra.mxu0 %v3810
      %3838 = vmatpush.msra.mxu0 %v3809
      %3839 = vmatpush.msra.mxu0 %v3808
      %3840 = vmatpush.msra.mxu0 %v3807
      %3841 = vmatpush.msra.mxu0 %v3806
      %3842 = vmatpush.msra.mxu0 %v3805
      %3843 = vmatpush.msra.mxu0 %v3804
      %3844 = vmatpush.msra.mxu0 %v3803
      %3845 = vmatpush.msra.mxu0 %v3802
      %3846 = vmatpush.msra.mxu0 %v3801
      %3847 = vmatpush.msra.mxu0 %v3800
      %3848 = vmatmul.f32.gmra.mxu0 %v3798
      %v3849 = vpop.f32.mrf.mxu0
      %v3850 = vadd.f32 0.0, %v3849
      %3851 = vdwg.mxu0
      %3852 = vmatpush.msra.mxu0 %v3831
      %3853 = vmatpush.msra.mxu0 %v3830
      %3854 = vmatpush.msra.mxu0 %v3829
      %3855 = vmatpush.msra.mxu0 %v3828
      %3856 = vmatpush.msra.mxu0 %v3827
      %3857 = vmatpush.msra.mxu0 %v3826
      %3858 = vmatpush.msra.mxu0 %v3825
      %3859 = vmatpush.msra.mxu0 %v3824
      %3860 = vmatpush.msra.mxu0 %v3823
      %3861 = vmatpush.msra.mxu0 %v3822
      %3862 = vmatpush.msra.mxu0 %v3821
      %3863 = vmatpush.msra.mxu0 %v3820
      %3864 = vmatpush.msra.mxu0 %v3819
      %3865 = vmatpush.msra.mxu0 %v3818
      %3866 = vmatpush.msra.mxu0 %v3817
      %3867 = vmatpush.msra.mxu0 %v3816
      %3868 = vmatmul.f32.gmra.mxu0 %v3799
      %v3869 = vpop.f32.mrf.mxu0
      %v3870 = vadd.f32 %v3850, %v3869
      %3871 = vdwg.mxu0
      %v3872 = vld [vmem:[#allocation8] sm:$0xff]
      %v3873 = vld [vmem:[#allocation8 + $0x8] sm:$0xff]
      %v3874 = vld [vmem:[#allocation8 + $0x10] sm:$0xff]
      %v3875 = vld [vmem:[#allocation8 + $0x18] sm:$0xff]
      %v3876 = vld [vmem:[#allocation8 + $0x20] sm:$0xff]
      %v3877 = vld [vmem:[#allocation8 + $0x28] sm:$0xff]
      %v3878 = vld [vmem:[#allocation8 + $0x30] sm:$0xff]
      %v3879 = vld [vmem:[#allocation8 + $0x38] sm:$0xff]
      %v3880 = vld [vmem:[#allocation8 + $0x40] sm:$0xff]
      %v3881 = vld [vmem:[#allocation8 + $0x48] sm:$0xff]
      %v3882 = vld [vmem:[#allocation8 + $0x50] sm:$0xff]
      %v3883 = vld [vmem:[#allocation8 + $0x58] sm:$0xff]
      %v3884 = vld [vmem:[#allocation8 + $0x60] sm:$0xff]
      %v3885 = vld [vmem:[#allocation8 + $0x68] sm:$0xff]
      %v3886 = vld [vmem:[#allocation8 + $0x70] sm:$0xff]
      %v3887 = vld [vmem:[#allocation8 + $0x78] sm:$0xff]
      %v3889 = vsel %vm173, %v3870, 0
      %3891 = vmatpush.msra.mxu0 0.0
      %3892 = vmatpush.msra.mxu0 0.0
      %3893 = vmatpush.msra.mxu0 0.0
      %3894 = vmatpush.msra.mxu0 0.0
      %3895 = vmatpush.msra.mxu0 0.0
      %3896 = vmatpush.msra.mxu0 0.0
      %3897 = vmatpush.msra.mxu0 0.0
      %3898 = vmatpush.msra.mxu0 0.0
      %3899 = vmatpush.msra.mxu0 0.0
      %3900 = vmatpush.msra.mxu0 0.0
      %3901 = vmatpush.msra.mxu0 0.0
      %3902 = vmatpush.msra.mxu0 0.0
      %3903 = vmatpush.msra.mxu0 %v3884
      %3904 = vmatpush.msra.mxu0 %v3880
      %3905 = vmatpush.msra.mxu0 %v3876
      %3906 = vmatpush.msra.mxu0 %v3872
      %3907 = vmatmul.f32.gmra.mxu0 %v3889
      %v3908 = vpop.f32.mrf.mxu0
      %v3909 = vadd.f32 0.0, %v3908
      %3910 = vdwg.mxu0
      %3911 = vmatpush.msra.mxu0 0.0
      %3912 = vmatpush.msra.mxu0 0.0
      %3913 = vmatpush.msra.mxu0 0.0
      %3914 = vmatpush.msra.mxu0 0.0
      %3915 = vmatpush.msra.mxu0 0.0
      %3916 = vmatpush.msra.mxu0 0.0
      %3917 = vmatpush.msra.mxu0 0.0
      %3918 = vmatpush.msra.mxu0 0.0
      %3919 = vmatpush.msra.mxu0 0.0
      %3920 = vmatpush.msra.mxu0 0.0
      %3921 = vmatpush.msra.mxu0 0.0
      %3922 = vmatpush.msra.mxu0 0.0
      %3923 = vmatpush.msra.mxu0 %v3885
      %3924 = vmatpush.msra.mxu0 %v3881
      %3925 = vmatpush.msra.mxu0 %v3877
      %3926 = vmatpush.msra.mxu0 %v3873
      %3927 = vmatmul.f32.gmra.mxu0 %v3889
      %v3928 = vpop.f32.mrf.mxu0
      %v3929 = vadd.f32 0.0, %v3928
      %3930 = vdwg.mxu0
      %3931 = vmatpush.msra.mxu0 0.0
      %3932 = vmatpush.msra.mxu0 0.0
      %3933 = vmatpush.msra.mxu0 0.0
      %3934 = vmatpush.msra.mxu0 0.0
      %3935 = vmatpush.msra.mxu0 0.0
      %3936 = vmatpush.msra.mxu0 0.0
      %3937 = vmatpush.msra.mxu0 0.0
      %3938 = vmatpush.msra.mxu0 0.0
      %3939 = vmatpush.msra.mxu0 0.0
      %3940 = vmatpush.msra.mxu0 0.0
      %3941 = vmatpush.msra.mxu0 0.0
      %3942 = vmatpush.msra.mxu0 0.0
      %3943 = vmatpush.msra.mxu0 %v3886
      %3944 = vmatpush.msra.mxu0 %v3882
      %3945 = vmatpush.msra.mxu0 %v3878
      %3946 = vmatpush.msra.mxu0 %v3874
      %3947 = vmatmul.f32.gmra.mxu0 %v3889
      %v3948 = vpop.f32.mrf.mxu0
      %v3949 = vadd.f32 0.0, %v3948
      %3950 = vdwg.mxu0
      %3951 = vmatpush.msra.mxu0 0.0
      %3952 = vmatpush.msra.mxu0 0.0
      %3953 = vmatpush.msra.mxu0 0.0
      %3954 = vmatpush.msra.mxu0 0.0
      %3955 = vmatpush.msra.mxu0 0.0
      %3956 = vmatpush.msra.mxu0 0.0
      %3957 = vmatpush.msra.mxu0 0.0
      %3958 = vmatpush.msra.mxu0 0.0
      %3959 = vmatpush.msra.mxu0 0.0
      %3960 = vmatpush.msra.mxu0 0.0
      %3961 = vmatpush.msra.mxu0 0.0
      %3962 = vmatpush.msra.mxu0 0.0
      %3963 = vmatpush.msra.mxu0 %v3887
      %3964 = vmatpush.msra.mxu0 %v3883
      %3965 = vmatpush.msra.mxu0 %v3879
      %3966 = vmatpush.msra.mxu0 %v3875
      %3967 = vmatmul.f32.gmra.mxu0 %v3889
      %v3968 = vpop.f32.mrf.mxu0
      %v3969 = vadd.f32 0.0, %v3968
      %3970 = vdwg.mxu0
      %s3971 = smul.u32 7, 4
      %s3972 = smul.addr %s3971, 8
      %s3973 = scalar_lea.vmem [#allocation3], %s3972
      %3974 = vst [vmem:[%s3973] sm:$0xff] %v3909
      %3975 = vst [vmem:[%s3973 + $0x8] sm:$0xff] %v3929
      %3976 = vst [vmem:[%s3973 + $0x10] sm:$0xff] %v3949
      %3977 = vst [vmem:[%s3973 + $0x18] sm:$0xff] %v3969
    $region72: #{tpu_custom_call.1} parent=1 // pred_fallthru
      _
    %s3978 = smul.u32 7, 4
    %s3979 = smul.addr %s3978, 8
    %s3980 = scalar_lea.vmem [#allocation3], %s3979
    %v3981 = vld [vmem:[%s3980] sm:$0xff]
    %v3982 = vld [vmem:[%s3980 + $0x8] sm:$0xff]
    %v3983 = vld [vmem:[%s3980 + $0x10] sm:$0xff]
    %v3984 = vld [vmem:[%s3980 + $0x18] sm:$0xff]
    %v3985 = vld [vmem:[#allocation11] sm:$0xff]
    %v3986 = vld [vmem:[#allocation11 + $0x8] sm:$0xff]
    %v3987 = vld [vmem:[#allocation11 + $0x10] sm:$0xff]
    %v3988 = vld [vmem:[#allocation11 + $0x18] sm:$0xff]
    %v3989 = vld [vmem:[#allocation11 + $0x20] sm:$0xff]
    %v3990 = vld [vmem:[#allocation11 + $0x28] sm:$0xff]
    %v3991 = vld [vmem:[#allocation11 + $0x30] sm:$0xff]
    %v3992 = vld [vmem:[#allocation11 + $0x38] sm:$0xff]
    %v3993 = vld [vmem:[#allocation11 + $0x40] sm:$0xff]
    %v3994 = vld [vmem:[#allocation11 + $0x48] sm:$0xff]
    %v3995 = vld [vmem:[#allocation11 + $0x50] sm:$0xff]
    %v3996 = vld [vmem:[#allocation11 + $0x58] sm:$0xff]
    %v3997 = vld [vmem:[#allocation11 + $0x60] sm:$0xff]
    %v3998 = vld [vmem:[#allocation11 + $0x68] sm:$0xff]
    %v3999 = vld [vmem:[#allocation11 + $0x70] sm:$0xff]
    %v4000 = vld [vmem:[#allocation11 + $0x78] sm:$0xff]
    %v4001 = vld [vmem:[#allocation11 + $0x80] sm:$0xff]
    %v4002 = vld [vmem:[#allocation11 + $0x88] sm:$0xff]
    %v4003 = vld [vmem:[#allocation11 + $0x90] sm:$0xff]
    %v4004 = vld [vmem:[#allocation11 + $0x98] sm:$0xff]
    %v4005 = vld [vmem:[#allocation11 + $0xa0] sm:$0xff]
    %v4006 = vld [vmem:[#allocation11 + $0xa8] sm:$0xff]
    %v4007 = vld [vmem:[#allocation11 + $0xb0] sm:$0xff]
    %v4008 = vld [vmem:[#allocation11 + $0xb8] sm:$0xff]
    %v4009 = vld [vmem:[#allocation11 + $0xc0] sm:$0xff]
    %v4010 = vld [vmem:[#allocation11 + $0xc8] sm:$0xff]
    %v4011 = vld [vmem:[#allocation11 + $0xd0] sm:$0xff]
    %v4012 = vld [vmem:[#allocation11 + $0xd8] sm:$0xff]
    %v4013 = vld [vmem:[#allocation11 + $0xe0] sm:$0xff]
    %v4014 = vld [vmem:[#allocation11 + $0xe8] sm:$0xff]
    %v4015 = vld [vmem:[#allocation11 + $0xf0] sm:$0xff]
    %v4016 = vld [vmem:[#allocation11 + $0xf8] sm:$0xff]
    %v4017 = vld [vmem:[#allocation11 + $0x100] sm:$0xff]
    %v4018 = vld [vmem:[#allocation11 + $0x108] sm:$0xff]
    %v4019 = vld [vmem:[#allocation11 + $0x110] sm:$0xff]
    %v4020 = vld [vmem:[#allocation11 + $0x118] sm:$0xff]
    %v4021 = vld [vmem:[#allocation11 + $0x120] sm:$0xff]
    %v4022 = vld [vmem:[#allocation11 + $0x128] sm:$0xff]
    %v4023 = vld [vmem:[#allocation11 + $0x130] sm:$0xff]
    %v4024 = vld [vmem:[#allocation11 + $0x138] sm:$0xff]
    %v4025 = vld [vmem:[#allocation11 + $0x140] sm:$0xff]
    %v4026 = vld [vmem:[#allocation11 + $0x148] sm:$0xff]
    %v4027 = vld [vmem:[#allocation11 + $0x150] sm:$0xff]
    %v4028 = vld [vmem:[#allocation11 + $0x158] sm:$0xff]
    %v4029 = vld [vmem:[#allocation11 + $0x160] sm:$0xff]
    %v4030 = vld [vmem:[#allocation11 + $0x168] sm:$0xff]
    %v4031 = vld [vmem:[#allocation11 + $0x170] sm:$0xff]
    %v4032 = vld [vmem:[#allocation11 + $0x178] sm:$0xff]
    %v4033 = vld [vmem:[#allocation11 + $0x180] sm:$0xff]
    %v4034 = vld [vmem:[#allocation11 + $0x188] sm:$0xff]
    %v4035 = vld [vmem:[#allocation11 + $0x190] sm:$0xff]
    %v4036 = vld [vmem:[#allocation11 + $0x198] sm:$0xff]
    %v4037 = vld [vmem:[#allocation11 + $0x1a0] sm:$0xff]
    %v4038 = vld [vmem:[#allocation11 + $0x1a8] sm:$0xff]
    %v4039 = vld [vmem:[#allocation11 + $0x1b0] sm:$0xff]
    %v4040 = vld [vmem:[#allocation11 + $0x1b8] sm:$0xff]
    %v4041 = vld [vmem:[#allocation11 + $0x1c0] sm:$0xff]
    %v4042 = vld [vmem:[#allocation11 + $0x1c8] sm:$0xff]
    %v4043 = vld [vmem:[#allocation11 + $0x1d0] sm:$0xff]
    %v4044 = vld [vmem:[#allocation11 + $0x1d8] sm:$0xff]
    %v4045 = vld [vmem:[#allocation11 + $0x1e0] sm:$0xff]
    %v4046 = vld [vmem:[#allocation11 + $0x1e8] sm:$0xff]
    %v4047 = vld [vmem:[#allocation11 + $0x1f0] sm:$0xff]
    %v4048 = vld [vmem:[#allocation11 + $0x1f8] sm:$0xff]
    %4049 = vmatpush.msra.mxu0 %v4045
    %4050 = vmatpush.msra.mxu0 %v4041
    %4051 = vmatpush.msra.mxu0 %v4037
    %4052 = vmatpush.msra.mxu0 %v4033
    %4053 = vmatpush.msra.mxu0 %v4029
    %4054 = vmatpush.msra.mxu0 %v4025
    %4055 = vmatpush.msra.mxu0 %v4021
    %4056 = vmatpush.msra.mxu0 %v4017
    %4057 = vmatpush.msra.mxu0 %v4013
    %4058 = vmatpush.msra.mxu0 %v4009
    %4059 = vmatpush.msra.mxu0 %v4005
    %4060 = vmatpush.msra.mxu0 %v4001
    %4061 = vmatpush.msra.mxu0 %v3997
    %4062 = vmatpush.msra.mxu0 %v3993
    %4063 = vmatpush.msra.mxu0 %v3989
    %4064 = vmatpush.msra.mxu0 %v3985
    %4065 = vmatmul.f32.gmra.mxu0 %v3697
    %v4066 = vpop.f32.mrf.mxu0
    %v4067 = vadd.f32 0.0, %v4066
    %4068 = vdwg.mxu0
    %4069 = vmatpush.msra.mxu0 %v4046
    %4070 = vmatpush.msra.mxu0 %v4042
    %4071 = vmatpush.msra.mxu0 %v4038
    %4072 = vmatpush.msra.mxu0 %v4034
    %4073 = vmatpush.msra.mxu0 %v4030
    %4074 = vmatpush.msra.mxu0 %v4026
    %4075 = vmatpush.msra.mxu0 %v4022
    %4076 = vmatpush.msra.mxu0 %v4018
    %4077 = vmatpush.msra.mxu0 %v4014
    %4078 = vmatpush.msra.mxu0 %v4010
    %4079 = vmatpush.msra.mxu0 %v4006
    %4080 = vmatpush.msra.mxu0 %v4002
    %4081 = vmatpush.msra.mxu0 %v3998
    %4082 = vmatpush.msra.mxu0 %v3994
    %4083 = vmatpush.msra.mxu0 %v3990
    %4084 = vmatpush.msra.mxu0 %v3986
    %4085 = vmatmul.f32.gmra.mxu0 %v3697
    %v4086 = vpop.f32.mrf.mxu0
    %v4087 = vadd.f32 0.0, %v4086
    %4088 = vdwg.mxu0
    %4089 = vmatpush.msra.mxu0 %v4047
    %4090 = vmatpush.msra.mxu0 %v4043
    %4091 = vmatpush.msra.mxu0 %v4039
    %4092 = vmatpush.msra.mxu0 %v4035
    %4093 = vmatpush.msra.mxu0 %v4031
    %4094 = vmatpush.msra.mxu0 %v4027
    %4095 = vmatpush.msra.mxu0 %v4023
    %4096 = vmatpush.msra.mxu0 %v4019
    %4097 = vmatpush.msra.mxu0 %v4015
    %4098 = vmatpush.msra.mxu0 %v4011
    %4099 = vmatpush.msra.mxu0 %v4007
    %4100 = vmatpush.msra.mxu0 %v4003
    %4101 = vmatpush.msra.mxu0 %v3999
    %4102 = vmatpush.msra.mxu0 %v3995
    %4103 = vmatpush.msra.mxu0 %v3991
    %4104 = vmatpush.msra.mxu0 %v3987
    %4105 = vmatmul.f32.gmra.mxu0 %v3697
    %v4106 = vpop.f32.mrf.mxu0
    %v4107 = vadd.f32 0.0, %v4106
    %4108 = vdwg.mxu0
    %4109 = vmatpush.msra.mxu0 %v4048
    %4110 = vmatpush.msra.mxu0 %v4044
    %4111 = vmatpush.msra.mxu0 %v4040
    %4112 = vmatpush.msra.mxu0 %v4036
    %4113 = vmatpush.msra.mxu0 %v4032
    %4114 = vmatpush.msra.mxu0 %v4028
    %4115 = vmatpush.msra.mxu0 %v4024
    %4116 = vmatpush.msra.mxu0 %v4020
    %4117 = vmatpush.msra.mxu0 %v4016
    %4118 = vmatpush.msra.mxu0 %v4012
    %4119 = vmatpush.msra.mxu0 %v4008
    %4120 = vmatpush.msra.mxu0 %v4004
    %4121 = vmatpush.msra.mxu0 %v4000
    %4122 = vmatpush.msra.mxu0 %v3996
    %4123 = vmatpush.msra.mxu0 %v3992
    %4124 = vmatpush.msra.mxu0 %v3988
    %4125 = vmatmul.f32.gmra.mxu0 %v3697
    %v4126 = vpop.f32.mrf.mxu0
    %v4127 = vadd.f32 0.0, %v4126
    %4128 = vdwg.mxu0
    %v4129 = vadd.f32 %v3981, %v4067
    %v4130 = vadd.f32 %v3982, %v4087
    %v4131 = vadd.f32 %v3983, %v4107
    %v4132 = vadd.f32 %v3984, %v4127
    %v4133 = vld [vmem:[%s6] sm:$0xf]
    %v4135 = vperm.slane %v4133, 0
    %v4136 = vperm.slane %v4133, 1
    %v4137 = vperm.slane %v4133, 2
    %v4138 = vperm.slane %v4133, 3
    %v4143 = vadd.f32 %v4129, %v4135
    %v4144 = vadd.f32 %v4130, %v4136
    %v4145 = vadd.f32 %v4131, %v4137
    %v4146 = vadd.f32 %v4132, %v4138
    %v4147 = vxor.u32 %v4143, 2147483648
    %v4148 = vxor.u32 %v4144, 2147483648
    %v4149 = vxor.u32 %v4145, 2147483648
    %v4150 = vmul.f32 %v4147, 1.442695
    %v4151 = vpow.pop %v4150
    %v4152 = vmul.f32 %v4148, 1.442695
    %v4153 = vpow.pop %v4152
    %v4154 = vmul.f32 %v4149, 1.442695
    %v4155 = vpow.pop %v4154
    %v4156 = vadd.f32 %v4151, 1.0
    %v4157 = vadd.f32 %v4153, 1.0
    %v4158 = vadd.f32 %v4155, 1.0
    %v4159 = vrcp.pop %v4156
    %v4160 = vmul.f32 %v4156, %v4159
    %v4161 = vsub.f32 1.0, %v4160
    %v4162 = vmul.f32 %v4159, %v4161
    %v4163 = vadd.f32 %v4159, %v4162
    %vm4164 = vweird.f32 %v4156
    %vm4165 = vweird.f32 %v4159
    %vm4166 = vmor %vm4164, %vm4165
    %v4167 = vsel %vm4166, %v4159, %v4163
    %v4168 = vand.u32 2147483647, %v4156
    %vm4169 = vcmp.eq.f32.partialorder %v4168, 8.507059e+37
    %v4170 = vand.u32 %v4156, 2147483648
    %v4171 = vor.u32 1.1754944e-38, %v4170
    %v4172 = vsel %vm4169, %v4171, %v4167
    %v4173 = vmul.f32 1.0, %v4172
    %v4174 = vrcp.pop %v4157
    %v4175 = vmul.f32 %v4157, %v4174
    %v4176 = vsub.f32 1.0, %v4175
    %v4177 = vmul.f32 %v4174, %v4176
    %v4178 = vadd.f32 %v4174, %v4177
    %vm4179 = vweird.f32 %v4157
    %vm4180 = vweird.f32 %v4174
    %vm4181 = vmor %vm4179, %vm4180
    %v4182 = vsel %vm4181, %v4174, %v4178
    %v4183 = vand.u32 2147483647, %v4157
    %vm4184 = vcmp.eq.f32.partialorder %v4183, 8.507059e+37
    %v4185 = vand.u32 %v4157, 2147483648
    %v4186 = vor.u32 1.1754944e-38, %v4185
    %v4187 = vsel %vm4184, %v4186, %v4182
    %v4188 = vmul.f32 1.0, %v4187
    %v4189 = vrcp.pop %v4158
    %v4190 = vmul.f32 %v4158, %v4189
    %v4191 = vsub.f32 1.0, %v4190
    %v4192 = vmul.f32 %v4189, %v4191
    %v4193 = vadd.f32 %v4189, %v4192
    %vm4194 = vweird.f32 %v4158
    %vm4195 = vweird.f32 %v4189
    %vm4196 = vmor %vm4194, %vm4195
    %v4197 = vsel %vm4196, %v4189, %v4193
    %v4198 = vand.u32 2147483647, %v4158
    %vm4199 = vcmp.eq.f32.partialorder %v4198, 8.507059e+37
    %v4200 = vand.u32 %v4158, 2147483648
    %v4201 = vor.u32 1.1754944e-38, %v4200
    %v4202 = vsel %vm4199, %v4201, %v4197
    %v4203 = vmul.f32 1.0, %v4202
    %v4204 = vtanh.pop %v4146
    %v4205 = vmul.f32 %v4188, %v3695
    %v4206 = vmul.f32 %v4173, %v4204
    %v4207 = vadd.f32 %v4205, %v4206
    %v4208 = vtanh.pop %v4207
    %v4209 = vmul.f32 %v4203, %v4208
    %s4210 = scalar_lea.vmem [#allocation4], 56
    %4211 = vst [vmem:[%s4210] sm:$0xff] %v4209
    %v4212 = vld [vmem:[#allocation4] sm:$0xff]
    %v4213 = vld [vmem:[#allocation4 + $0x8] sm:$0xff]
    %v4214 = vld [vmem:[#allocation4 + $0x10] sm:$0xff]
    %v4215 = vld [vmem:[#allocation4 + $0x18] sm:$0xff]
    %v4216 = vld [vmem:[#allocation4 + $0x20] sm:$0xff]
    %v4217 = vld [vmem:[#allocation4 + $0x28] sm:$0xff]
    %v4218 = vld [vmem:[#allocation4 + $0x30] sm:$0xff]
    %v4219 = vld [vmem:[#allocation4 + $0x38] sm:$0xff]
    %v4220 = vld [vmem:[%s7] sm:$0xff]
    %v4221 = vld [vmem:[%s7 + $0x8] sm:$0xff]
    %v4222 = vld [vmem:[%s7 + $0x10] sm:$0xff]
    %v4223 = vld [vmem:[%s7 + $0x18] sm:$0xff]
    %v4224 = vld [vmem:[%s7 + $0x20] sm:$0xff]
    %v4225 = vld [vmem:[%s7 + $0x28] sm:$0xff]
    %v4226 = vld [vmem:[%s7 + $0x30] sm:$0xff]
    %v4227 = vld [vmem:[%s7 + $0x38] sm:$0xff]
    %v4228 = vld [vmem:[%s7 + $0x40] sm:$0xff]
    %v4229 = vld [vmem:[%s7 + $0x48] sm:$0xff]
    %v4230 = vld [vmem:[%s7 + $0x50] sm:$0xff]
    %v4231 = vld [vmem:[%s7 + $0x58] sm:$0xff]
    %v4232 = vld [vmem:[%s7 + $0x60] sm:$0xff]
    %v4233 = vld [vmem:[%s7 + $0x68] sm:$0xff]
    %v4234 = vld [vmem:[%s7 + $0x70] sm:$0xff]
    %v4235 = vld [vmem:[%s7 + $0x78] sm:$0xff]
    %v4236 = vld [vmem:[%s7 + $0x80] sm:$0xff]
    %v4237 = vld [vmem:[%s7 + $0x88] sm:$0xff]
    %v4238 = vld [vmem:[%s7 + $0x90] sm:$0xff]
    %v4239 = vld [vmem:[%s7 + $0x98] sm:$0xff]
    %v4240 = vld [vmem:[%s7 + $0xa0] sm:$0xff]
    %v4241 = vld [vmem:[%s7 + $0xa8] sm:$0xff]
    %v4242 = vld [vmem:[%s7 + $0xb0] sm:$0xff]
    %v4243 = vld [vmem:[%s7 + $0xb8] sm:$0xff]
    %v4244 = vld [vmem:[%s7 + $0xc0] sm:$0xff]
    %v4245 = vld [vmem:[%s7 + $0xc8] sm:$0xff]
    %v4246 = vld [vmem:[%s7 + $0xd0] sm:$0xff]
    %v4247 = vld [vmem:[%s7 + $0xd8] sm:$0xff]
    %v4248 = vld [vmem:[%s7 + $0xe0] sm:$0xff]
    %v4249 = vld [vmem:[%s7 + $0xe8] sm:$0xff]
    %v4250 = vld [vmem:[%s7 + $0xf0] sm:$0xff]
    %v4251 = vld [vmem:[%s7 + $0xf8] sm:$0xff]
    %v4252 = vld [vmem:[%s8] sm:$0x3]
    %v4254 = vperm.slane %v4252, 0
    %v4255 = vperm.slane %v4252, 1
    %4258 = vmatpush.msra.mxu0 %v4250
    %4259 = vmatpush.msra.mxu0 %v4248
    %4260 = vmatpush.msra.mxu0 %v4246
    %4261 = vmatpush.msra.mxu0 %v4244
    %4262 = vmatpush.msra.mxu0 %v4242
    %4263 = vmatpush.msra.mxu0 %v4240
    %4264 = vmatpush.msra.mxu0 %v4238
    %4265 = vmatpush.msra.mxu0 %v4236
    %4266 = vmatpush.msra.mxu0 %v4234
    %4267 = vmatpush.msra.mxu0 %v4232
    %4268 = vmatpush.msra.mxu0 %v4230
    %4269 = vmatpush.msra.mxu0 %v4228
    %4270 = vmatpush.msra.mxu0 %v4226
    %4271 = vmatpush.msra.mxu0 %v4224
    %4272 = vmatpush.msra.mxu0 %v4222
    %4273 = vmatpush.msra.mxu0 %v4220
    %4274 = vmatmul.f32.gmra.mxu0 %v4212
    %v4275 = vpop.f32.mrf.mxu0
    %v4276 = vadd.f32 %v4254, %v4275
    %4277 = vmatmul.f32.gmra.mxu0 %v4213
    %v4278 = vpop.f32.mrf.mxu0
    %v4279 = vadd.f32 %v4254, %v4278
    %4280 = vmatmul.f32.gmra.mxu0 %v4214
    %v4281 = vpop.f32.mrf.mxu0
    %v4282 = vadd.f32 %v4254, %v4281
    %4283 = vmatmul.f32.gmra.mxu0 %v4215
    %v4284 = vpop.f32.mrf.mxu0
    %v4285 = vadd.f32 %v4254, %v4284
    %4286 = vmatmul.f32.gmra.mxu0 %v4216
    %v4287 = vpop.f32.mrf.mxu0
    %v4288 = vadd.f32 %v4254, %v4287
    %4289 = vmatmul.f32.gmra.mxu0 %v4217
    %v4290 = vpop.f32.mrf.mxu0
    %v4291 = vadd.f32 %v4254, %v4290
    %4292 = vmatmul.f32.gmra.mxu0 %v4218
    %v4293 = vpop.f32.mrf.mxu0
    %v4294 = vadd.f32 %v4254, %v4293
    %4295 = vmatmul.f32.gmra.mxu0 %v4219
    %v4296 = vpop.f32.mrf.mxu0
    %v4297 = vadd.f32 %v4254, %v4296
    %4298 = vdwg.mxu0
    %4299 = vmatpush.msra.mxu0 %v4251
    %4300 = vmatpush.msra.mxu0 %v4249
    %4301 = vmatpush.msra.mxu0 %v4247
    %4302 = vmatpush.msra.mxu0 %v4245
    %4303 = vmatpush.msra.mxu0 %v4243
    %4304 = vmatpush.msra.mxu0 %v4241
    %4305 = vmatpush.msra.mxu0 %v4239
    %4306 = vmatpush.msra.mxu0 %v4237
    %4307 = vmatpush.msra.mxu0 %v4235
    %4308 = vmatpush.msra.mxu0 %v4233
    %4309 = vmatpush.msra.mxu0 %v4231
    %4310 = vmatpush.msra.mxu0 %v4229
    %4311 = vmatpush.msra.mxu0 %v4227
    %4312 = vmatpush.msra.mxu0 %v4225
    %4313 = vmatpush.msra.mxu0 %v4223
    %4314 = vmatpush.msra.mxu0 %v4221
    %4315 = vmatmul.f32.gmra.mxu0 %v4212
    %v4316 = vpop.f32.mrf.mxu0
    %v4317 = vadd.f32 %v4255, %v4316
    %4318 = vmatmul.f32.gmra.mxu0 %v4213
    %v4319 = vpop.f32.mrf.mxu0
    %v4320 = vadd.f32 %v4255, %v4319
    %4321 = vmatmul.f32.gmra.mxu0 %v4214
    %v4322 = vpop.f32.mrf.mxu0
    %v4323 = vadd.f32 %v4255, %v4322
    %4324 = vmatmul.f32.gmra.mxu0 %v4215
    %v4325 = vpop.f32.mrf.mxu0
    %v4326 = vadd.f32 %v4255, %v4325
    %4327 = vmatmul.f32.gmra.mxu0 %v4216
    %v4328 = vpop.f32.mrf.mxu0
    %v4329 = vadd.f32 %v4255, %v4328
    %4330 = vmatmul.f32.gmra.mxu0 %v4217
    %v4331 = vpop.f32.mrf.mxu0
    %v4332 = vadd.f32 %v4255, %v4331
    %4333 = vmatmul.f32.gmra.mxu0 %v4218
    %v4334 = vpop.f32.mrf.mxu0
    %v4335 = vadd.f32 %v4255, %v4334
    %4336 = vmatmul.f32.gmra.mxu0 %v4219
    %v4337 = vpop.f32.mrf.mxu0
    %v4338 = vadd.f32 %v4255, %v4337
    %4339 = vdwg.mxu0
    %4340 = vst [vmem:[#allocation13] sm:$0xff] %v4276
    %4341 = vst [vmem:[#allocation13 + $0x8] sm:$0xff] %v4317
    %4342 = vst [vmem:[#allocation13 + $0x10] sm:$0xff] %v4279
    %4343 = vst [vmem:[#allocation13 + $0x18] sm:$0xff] %v4320
    %4344 = vst [vmem:[#allocation13 + $0x20] sm:$0xff] %v4282
    %4345 = vst [vmem:[#allocation13 + $0x28] sm:$0xff] %v4323
    %4346 = vst [vmem:[#allocation13 + $0x30] sm:$0xff] %v4285
    %4347 = vst [vmem:[#allocation13 + $0x38] sm:$0xff] %v4326
    %4348 = vst [vmem:[#allocation13 + $0x40] sm:$0xff] %v4288
    %4349 = vst [vmem:[#allocation13 + $0x48] sm:$0xff] %v4329
    %4350 = vst [vmem:[#allocation13 + $0x50] sm:$0xff] %v4291
    %4351 = vst [vmem:[#allocation13 + $0x58] sm:$0xff] %v4332
    %4352 = vst [vmem:[#allocation13 + $0x60] sm:$0xff] %v4294
    %4353 = vst [vmem:[#allocation13 + $0x68] sm:$0xff] %v4335
    %4354 = vst [vmem:[#allocation13 + $0x70] sm:$0xff] %v4297
    %4355 = vst [vmem:[#allocation13 + $0x78] sm:$0xff] %v4338
    // Predicated region
    $region73: #{tpu_custom_call.1} parent=1 // pred_check
      _
    $region74: #{tpu_custom_call.1} parent=1 // pred_check_branch
      %4357 = sbr.rel (0) target = $region76
    $region75: #{tpu_custom_call.1} parent=1 // pred_region
      %4359 = vsyncadd [#allocation10], 0
      %s4360 = sshll.u32 [#allocation13], 4
      %s4361 = int_to_ptr.vmem [resolvable:$true] %s4360
      %s4362 = sshll.u32 %s9, 4
      %s4363 = int_to_ptr.hbm [resolvable:$true] %s4362
      %4368 = dma.vmem_to_hbm [thread:$0]  %s4361, 2048, %s4363, [#allocation10], 256, 256, 16
    $region76: #{tpu_custom_call.1} parent=1 // pred_fallthru
      _
    // Predicated region
    $region77: #{tpu_custom_call.1} parent=1 // pred_check
      _
    $region78: #{tpu_custom_call.1} parent=1 // pred_check_branch
      %4370 = sbr.rel (0) target = $region80
    $region79: #{tpu_custom_call.1} parent=1 // pred_region
      %4372 = dma.done [#allocation10], 2048
    $region80: #{tpu_custom_call.1} parent=1 // pred_fallthru
      _
    %4373 = vsyncpa [#allocation9], 1
    %4374 = vsyncpa [#allocation12], 1
    %4375 = vsyncpa [#allocation10], 1

</llo_original>
